<compile_context>
chip_gen: v5e
topology: v5e:2x2
jax: 0.10.0
libtpu: 0.0.40
codegen_flags: <defaults>
</compile_context>

<pallas_src>
import numpy as np
import jax
import jax.numpy as jnp
from jax.experimental import pallas as pl
from jax.experimental.pallas import tpu as pltpu

_VMEM = pltpu.MemorySpace.VMEM


# ---------------------------------------------------------------------------
# Fused Pallas kernel
# ---------------------------------------------------------------------------
def _sigmoid(y):
    # exp on the EUP; exact divide keeps parity with the JAX reference.
    return 1.0 / (1.0 + jnp.exp(-y))


def _lenet_kernel(xp_ref, w1_ref, b1_ref, w2_ref, b2_ref,
                  w1d_ref, b1d_ref, w2d_ref, b2d_ref, w3d_ref, b3d_ref,
                  out_ref, y2_ref):
    """Whole LeNet forward for a small batch, everything resident in VMEM.

    xp_ref : (4*B, 8, 32) bf16 padded 32x32 image, rows phase-split mod 4:
             xp_ref[p*B + b, t, :] = image row 4*t + p of sample b.
    w1_ref : (6, 32, 336) bf16 banded conv1 weights.  For band u = dh1+ki the
             column (t1, W, c) = t1*84 + W*6 + c holds w1[c, ki, kj] at input
             column v = 2*W + dw1 + kj   (t1 = 2*dh1 + dw1 is the pool tap).
    w2_ref : (6, 84, 320) bf16 banded conv2 weights, same construction one
             level up (84 = 14*6 input lanes, 320 = 4 taps * 5 qw * 16 ch).
    w1d_ref: (5, 80, 120) f32 dense1 weight, rows regrouped per conv2 output
             row qh and permuted to the kernel's (qw, o) lane order.
    out_ref: (B, 10)  f32 logits.
    y2_ref : (B, 5, 80) f32 pooled conv2 map, lanes = qw*16 + o.
    """
    f32 = jnp.float32
    B = out_ref.shape[0]

    for b in range(B):                                 # static unroll, B tiny
        # ---- conv1 + sigmoid + 2x2 avg-pool (banded matmuls) -------------
        y1 = []                                        # row-parity blocks (7,84)
        for par in range(2):                           # pooled row H = 2t + par
            acc = jnp.zeros((7, 336), f32)
            for u in range(6):                         # band u = dh1 + ki
                g = 2 * par + u                        # image row = 4t + g
                blk = xp_ref[(g % 4) * B + b]          # aligned (8, 32) tile
                acc = acc + jnp.dot(blk[(g // 4):(g // 4) + 7, :], w1_ref[u],
                                    preferred_element_type=f32)
            s = _sigmoid(acc + b1_ref[...])
            # average the 4 pooling-tap column groups (VPU lane slices)
            y1.append(((s[:, 0:84] + s[:, 84:168] + s[:, 168:252]
                        + s[:, 252:336]) * 0.25).astype(jnp.bfloat16))

        # ---- conv2 + sigmoid + 2x2 avg-pool -------------------------------
        acc2 = jnp.zeros((5, 320), f32)
        for u in range(6):                             # band u = dh2 + ki
            sl = y1[u % 2][(u // 2):(u // 2) + 5, :]   # (5, 84) bf16
            acc2 = acc2 + jnp.dot(sl, w2_ref[u], preferred_element_type=f32)
        s2 = _sigmoid(acc2 + b2_ref[...])
        y2 = (s2[:, 0:80] + s2[:, 80:160] + s2[:, 160:240] + s2[:, 240:320]) * 0.25
        y2_ref[b, :, :] = y2                           # (5, 80) f32 feature map

        # ---- fused dense chain (f32; identity-like weights) ---------------
        h = jnp.zeros((1, 120), f32)
        for qh in range(5):
            h = h + jnp.dot(y2[qh:qh + 1, :], w1d_ref[qh],
                            preferred_element_type=f32)
        h = _sigmoid(h + b1d_ref[...])
        h = _sigmoid(jnp.dot(h, w2d_ref[...], preferred_element_type=f32)
                     + b2d_ref[...])
        out_ref[b:b + 1, :] = (jnp.dot(h, w3d_ref[...],
                                       preferred_element_type=f32)
                               + b3d_ref[...])


def lenet_fused(xp4, kp, batch):
    return pl.pallas_call(
        _lenet_kernel,
        out_shape=(jax.ShapeDtypeStruct((batch, 10), jnp.float32),
                   jax.ShapeDtypeStruct((batch, 5, 80), jnp.float32)),
        in_specs=[pl.BlockSpec(memory_space=_VMEM)] * 11,
        out_specs=(pl.BlockSpec(memory_space=_VMEM),
                   pl.BlockSpec(memory_space=_VMEM)),
    )(xp4, kp["w1u"], kp["b1"], kp["w2u"], kp["b2"],
      kp["w1d"], kp["b1d"], kp["w2d"], kp["b2d"], kp["w3d"], kp["b3d"])


# ---------------------------------------------------------------------------
# Deterministic parameters (mirrors the manipulate_* methods)
# ---------------------------------------------------------------------------
def init_params(key):
    center = jnp.zeros((5, 5), jnp.float32).at[2, 2].set(1.0)

    # conv1: 4_dir, channel_in_mod=1, reverse_dir=True -> taps [2,1],[1,2],[1,1]
    r1 = jnp.zeros((5, 5), jnp.float32).at[2, 1].set(1.0)
    d1 = jnp.zeros((5, 5), jnp.float32).at[1, 2].set(1.0)
    dr1 = jnp.zeros((5, 5), jnp.float32).at[1, 1].set(1.0)
    w1 = jax.random.uniform(key, (6, 1, 5, 5), jnp.float32, -0.2, 0.2)
    w1 = w1.at[0, 0].set(center).at[1, 0].set(r1).at[2, 0].set(d1).at[3, 0].set(dr1)
    b1 = jnp.zeros((6,), jnp.float32)

    # conv2: 4_dir, channel_in_mod=4, reverse_dir=False -> taps [2,3],[3,2],[3,3]
    r2 = jnp.zeros((5, 5), jnp.float32).at[2, 3].set(1.0)
    d2 = jnp.zeros((5, 5), jnp.float32).at[3, 2].set(1.0)
    dr2 = jnp.zeros((5, 5), jnp.float32).at[3, 3].set(1.0)
    w2 = jnp.zeros((16, 6, 5, 5), jnp.float32)
    for i in range(4):
        w2 = w2.at[i, i].set(center)
        w2 = w2.at[i + 4, i].set(r2)
        w2 = w2.at[i + 8, i].set(d2)
        w2 = w2.at[i + 12, i].set(dr2)
    b2 = jnp.zeros((16,), jnp.float32)

    w1d = jnp.ones((120, 400), jnp.float32) / 400.0        # 'first'
    b1d = jnp.zeros((120,), jnp.float32)
    w2d = jnp.eye(84, 120, dtype=jnp.float32)               # 'ones'
    b2d = jnp.zeros((84,), jnp.float32)
    w3d = jnp.eye(10, 84, dtype=jnp.float32)                # 'ones'
    b3d = jnp.zeros((10,), jnp.float32)
    return (w1, b1, w2, b2, w1d, b1d, w2d, b2d, w3d, b3d)


def prepare_kernel_params(raw):
    """One-time layout prep: fold 5x5 taps, 2x2 pool taps and output width into
    banded block-sparse weight matrices (see _lenet_kernel docstring)."""
    w1, b1, w2, b2, w1d, b1d, w2d, b2d, w3d, b3d = [np.asarray(a) for a in raw]

    # conv1 bands over u = dh1 + ki; columns (t1, W, c) = t1*84 + W*6 + c
    w1u = np.zeros((6, 32, 4, 14, 6), np.float32)
    for dh1 in range(2):
        for dw1 in range(2):
            t1 = 2 * dh1 + dw1
            for ki in range(5):
                for kj in range(5):
                    for wo in range(14):
                        w1u[dh1 + ki, 2 * wo + dw1 + kj, t1, wo, :] = w1[:, 0, ki, kj]
    b1c = np.tile(b1.reshape(1, 1, 6), (4, 14, 1)).reshape(1, 336)

    # conv2 bands over u = dh2 + ki; input lanes (W, c), columns (t2, qw, o)
    w2u = np.zeros((6, 14, 6, 4, 5, 16), np.float32)
    for dh2 in range(2):
        for dw2 in range(2):
            t2 = 2 * dh2 + dw2
            for ki in range(5):
                for kj in range(5):
                    for qw in range(5):
                        w2u[dh2 + ki, 2 * qw + dw2 + kj, :, t2, qw, :] = \
                            w2[:, :, ki, kj].T
    b2c = np.tile(b2.reshape(1, 1, 16), (4, 5, 1)).reshape(1, 320)

    # dense1 input is PyTorch (C, h, w)-flattened; regroup per conv2 row qh and
    # permute rows to the kernel's (qw, o) lane order.
    w1dp = np.transpose(w1d.reshape(120, 16, 5, 5), (2, 3, 1, 0)).reshape(5, 80, 120)

    bf16, f32 = jnp.bfloat16, jnp.float32
    return dict(
        w1u=jnp.asarray(w1u.reshape(6, 32, 336), bf16), b1=jnp.asarray(b1c, f32),
        w2u=jnp.asarray(w2u.reshape(6, 84, 320), bf16), b2=jnp.asarray(b2c, f32),
        w1d=jnp.asarray(w1dp, f32), b1d=jnp.asarray(b1d.reshape(1, -1), f32),
        w2d=jnp.asarray(w2d.T, f32), b2d=jnp.asarray(b2d.reshape(1, -1), f32),
        w3d=jnp.asarray(w3d.T, f32), b3d=jnp.asarray(b3d.reshape(1, -1), f32),
    )


# ---------------------------------------------------------------------------
# Forward pass (glue is layout relabelling only; all compute is in the kernel)
# ---------------------------------------------------------------------------
def lenet_forward(x, kp):
    b = x.shape[0]
    xh = x.reshape(b, x.shape[2], x.shape[3])          # NCHW, C == 1 -> relabel
    xp = jnp.pad(xh, ((0, 0), (2, 2), (2, 2)), mode="edge")     # replicate pad
    # phase-split rows mod 4 so the kernel's banded slices are contiguous
    xp4 = (xp.reshape(b, 8, 4, 32).transpose(2, 0, 1, 3)
             .reshape(4 * b, 8, 32).astype(jnp.bfloat16))
    out, y2 = lenet_fused(xp4, kp, b)
    # PyTorch flattens NCHW -> (C, h, w); kernel emits (h, (w, C)).  Tiny
    # (B, 400) permutation, off the logits' compute path.
    feature = jnp.transpose(y2.reshape(b, 5, 5, 16), (0, 3, 1, 2)).reshape(b, 400)
    return out, feature


# ---------------------------------------------------------------------------
# Independent reference (lax.conv, NCHW) with identical operand rounding
# ---------------------------------------------------------------------------
def ref_forward(x, raw):
    w1, b1, w2, b2, w1d, b1d, w2d, b2d, w3d, b3d = raw
    bf = lambda a: a.astype(jnp.bfloat16)
    sig = lambda v: 1.0 / (1.0 + jnp.exp(-v))

    def pool(v):
        bb, c, hh, ww = v.shape
        return v.reshape(bb, c, hh // 2, 2, ww // 2, 2).mean(axis=(3, 5))

    xp = jnp.pad(x, ((0, 0), (0, 0), (2, 2), (2, 2)), mode="edge")
    y = jax.lax.conv_general_dilated(
        bf(xp), bf(w1), (1, 1), "VALID",
        dimension_numbers=("NCHW", "OIHW", "NCHW"),
        preferred_element_type=jnp.float32)
    y = pool(sig(y + b1[None, :, None, None]))
    y = jax.lax.conv_general_dilated(
        bf(y), bf(w2), (1, 1), "VALID",
        dimension_numbers=("NCHW", "OIHW", "NCHW"),
        preferred_element_type=jnp.float32)
    y = pool(sig(y + b2[None, :, None, None]))
    feat = y.reshape(x.shape[0], -1)
    h = sig(jnp.dot(feat, w1d.T) + b1d)                 # dense chain in f32
    h = sig(jnp.dot(h, w2d.T) + b2d)
    out = jnp.dot(h, w3d.T) + b3d
    return out, feat


if __name__ == "__main__":
    key = jax.random.PRNGKey(0)
    kx, kparam = jax.random.split(key)
    # MNIST-like input implied by hidden=400: (B=2, C=1, H=28, W=28)
    x = jax.random.uniform(kx, (2, 1, 28, 28), jnp.float32)
    raw = init_params(kparam)
    kparams = prepare_kernel_params(raw)

    out, feature = jax.jit(lenet_forward)(x, kparams)
    out = jax.block_until_ready(out)
    feature = jax.block_until_ready(feature)

    ref_out, ref_feat = ref_forward(x, raw)
    assert out.shape == (2, 10) and feature.shape == (2, 400)
    # Kernel and reference use the same bf16 operand rounding on the convs and
    # stay f32 through the dense chain; residual divergence is f32
    # accumulation-order noise, so 1e-3 has ample margin.
    assert jnp.allclose(feature, ref_feat, atol=1e-3, rtol=1e-3), \
        float(jnp.max(jnp.abs(feature - ref_feat)))
    assert jnp.allclose(out, ref_out, atol=1e-3, rtol=1e-3), \
        float(jnp.max(jnp.abs(out - ref_out)))

    print("KERNEL_OK")
</pallas_src>

<mosaic_0001>
module attributes {stable_mosaic.version = 11 : i64} {
  func.func @_lenet_kernel(%arg0: memref<8x8x32xbf16, #tpu.memory_space<vmem>>, %arg1: memref<6x32x336xbf16, #tpu.memory_space<vmem>>, %arg2: memref<1x336xf32, #tpu.memory_space<vmem>>, %arg3: memref<6x84x320xbf16, #tpu.memory_space<vmem>>, %arg4: memref<1x320xf32, #tpu.memory_space<vmem>>, %arg5: memref<5x80x120xf32, #tpu.memory_space<vmem>>, %arg6: memref<1x120xf32, #tpu.memory_space<vmem>>, %arg7: memref<120x84xf32, #tpu.memory_space<vmem>>, %arg8: memref<1x84xf32, #tpu.memory_space<vmem>>, %arg9: memref<84x10xf32, #tpu.memory_space<vmem>>, %arg10: memref<1x10xf32, #tpu.memory_space<vmem>>, %arg11: memref<2x10xf32, #tpu.memory_space<vmem>>, %arg12: memref<2x5x80xf32, #tpu.memory_space<vmem>>) attributes {dimension_semantics = [], scalar_prefetch = 0 : i64, scratch_operands = 0 : i64, tpu.core_type = #tpu.core_type<tc>} {
    %cst = arith.constant 0.000000e+00 : f32
    %0 = vector.broadcast %cst : f32 to vector<7x336xf32>
    %c0 = arith.constant 0 : index
    %c0_0 = arith.constant 0 : index
    %c0_1 = arith.constant 0 : index
    %1 = vector.load %arg0[%c0, %c0_0, %c0_1] : memref<8x8x32xbf16, #tpu.memory_space<vmem>>, vector<1x8x32xbf16>
    %2 = vector.shape_cast %1 : vector<1x8x32xbf16> to vector<8x32xbf16>
    %3 = vector.extract_strided_slice %2 {offsets = [0, 0], sizes = [7, 32], strides = [1, 1]} : vector<8x32xbf16> to vector<7x32xbf16>
    %c0_2 = arith.constant 0 : index
    %c0_3 = arith.constant 0 : index
    %c0_4 = arith.constant 0 : index
    %4 = vector.load %arg1[%c0_2, %c0_3, %c0_4] : memref<6x32x336xbf16, #tpu.memory_space<vmem>>, vector<1x32x336xbf16>
    %5 = vector.shape_cast %4 : vector<1x32x336xbf16> to vector<32x336xbf16>
    %cst_5 = arith.constant dense<0.000000e+00> : vector<7x336xf32>
    %6 = tpu.matmul %3, %5, %cst_5 {dimension_numbers = #tpu.dot_dimension_numbers<[1], [0], [0], [1], [0, 0, 1, 1], [], []>} : vector<7x32xbf16>, vector<32x336xbf16>, vector<7x336xf32> -> vector<7x336xf32>
    %7 = arith.addf %0, %6 : vector<7x336xf32>
    %c2 = arith.constant 2 : index
    %c0_6 = arith.constant 0 : index
    %c0_7 = arith.constant 0 : index
    %8 = vector.load %arg0[%c2, %c0_6, %c0_7] : memref<8x8x32xbf16, #tpu.memory_space<vmem>>, vector<1x8x32xbf16>
    %9 = vector.shape_cast %8 : vector<1x8x32xbf16> to vector<8x32xbf16>
    %10 = vector.extract_strided_slice %9 {offsets = [0, 0], sizes = [7, 32], strides = [1, 1]} : vector<8x32xbf16> to vector<7x32xbf16>
    %c1 = arith.constant 1 : index
    %c0_8 = arith.constant 0 : index
    %c0_9 = arith.constant 0 : index
    %11 = vector.load %arg1[%c1, %c0_8, %c0_9] : memref<6x32x336xbf16, #tpu.memory_space<vmem>>, vector<1x32x336xbf16>
    %12 = vector.shape_cast %11 : vector<1x32x336xbf16> to vector<32x336xbf16>
    %cst_10 = arith.constant dense<0.000000e+00> : vector<7x336xf32>
    %13 = tpu.matmul %10, %12, %cst_10 {dimension_numbers = #tpu.dot_dimension_numbers<[1], [0], [0], [1], [0, 0, 1, 1], [], []>} : vector<7x32xbf16>, vector<32x336xbf16>, vector<7x336xf32> -> vector<7x336xf32>
    %14 = arith.addf %7, %13 : vector<7x336xf32>
    %c4 = arith.constant 4 : index
    %c0_11 = arith.constant 0 : index
    %c0_12 = arith.constant 0 : index
    %15 = vector.load %arg0[%c4, %c0_11, %c0_12] : memref<8x8x32xbf16, #tpu.memory_space<vmem>>, vector<1x8x32xbf16>
    %16 = vector.shape_cast %15 : vector<1x8x32xbf16> to vector<8x32xbf16>
    %17 = vector.extract_strided_slice %16 {offsets = [0, 0], sizes = [7, 32], strides = [1, 1]} : vector<8x32xbf16> to vector<7x32xbf16>
    %c2_13 = arith.constant 2 : index
    %c0_14 = arith.constant 0 : index
    %c0_15 = arith.constant 0 : index
    %18 = vector.load %arg1[%c2_13, %c0_14, %c0_15] : memref<6x32x336xbf16, #tpu.memory_space<vmem>>, vector<1x32x336xbf16>
    %19 = vector.shape_cast %18 : vector<1x32x336xbf16> to vector<32x336xbf16>
    %cst_16 = arith.constant dense<0.000000e+00> : vector<7x336xf32>
    %20 = tpu.matmul %17, %19, %cst_16 {dimension_numbers = #tpu.dot_dimension_numbers<[1], [0], [0], [1], [0, 0, 1, 1], [], []>} : vector<7x32xbf16>, vector<32x336xbf16>, vector<7x336xf32> -> vector<7x336xf32>
    %21 = arith.addf %14, %20 : vector<7x336xf32>
    %c6 = arith.constant 6 : index
    %c0_17 = arith.constant 0 : index
    %c0_18 = arith.constant 0 : index
    %22 = vector.load %arg0[%c6, %c0_17, %c0_18] : memref<8x8x32xbf16, #tpu.memory_space<vmem>>, vector<1x8x32xbf16>
    %23 = vector.shape_cast %22 : vector<1x8x32xbf16> to vector<8x32xbf16>
    %24 = vector.extract_strided_slice %23 {offsets = [0, 0], sizes = [7, 32], strides = [1, 1]} : vector<8x32xbf16> to vector<7x32xbf16>
    %c3 = arith.constant 3 : index
    %c0_19 = arith.constant 0 : index
    %c0_20 = arith.constant 0 : index
    %25 = vector.load %arg1[%c3, %c0_19, %c0_20] : memref<6x32x336xbf16, #tpu.memory_space<vmem>>, vector<1x32x336xbf16>
    %26 = vector.shape_cast %25 : vector<1x32x336xbf16> to vector<32x336xbf16>
    %cst_21 = arith.constant dense<0.000000e+00> : vector<7x336xf32>
    %27 = tpu.matmul %24, %26, %cst_21 {dimension_numbers = #tpu.dot_dimension_numbers<[1], [0], [0], [1], [0, 0, 1, 1], [], []>} : vector<7x32xbf16>, vector<32x336xbf16>, vector<7x336xf32> -> vector<7x336xf32>
    %28 = arith.addf %21, %27 : vector<7x336xf32>
    %c0_22 = arith.constant 0 : index
    %c0_23 = arith.constant 0 : index
    %c0_24 = arith.constant 0 : index
    %29 = vector.load %arg0[%c0_22, %c0_23, %c0_24] : memref<8x8x32xbf16, #tpu.memory_space<vmem>>, vector<1x8x32xbf16>
    %30 = vector.shape_cast %29 : vector<1x8x32xbf16> to vector<8x32xbf16>
    %31 = vector.extract_strided_slice %30 {offsets = [1, 0], sizes = [7, 32], strides = [1, 1]} : vector<8x32xbf16> to vector<7x32xbf16>
    %c4_25 = arith.constant 4 : index
    %c0_26 = arith.constant 0 : index
    %c0_27 = arith.constant 0 : index
    %32 = vector.load %arg1[%c4_25, %c0_26, %c0_27] : memref<6x32x336xbf16, #tpu.memory_space<vmem>>, vector<1x32x336xbf16>
    %33 = vector.shape_cast %32 : vector<1x32x336xbf16> to vector<32x336xbf16>
    %cst_28 = arith.constant dense<0.000000e+00> : vector<7x336xf32>
    %34 = tpu.matmul %31, %33, %cst_28 {dimension_numbers = #tpu.dot_dimension_numbers<[1], [0], [0], [1], [0, 0, 1, 1], [], []>} : vector<7x32xbf16>, vector<32x336xbf16>, vector<7x336xf32> -> vector<7x336xf32>
    %35 = arith.addf %28, %34 : vector<7x336xf32>
    %c2_29 = arith.constant 2 : index
    %c0_30 = arith.constant 0 : index
    %c0_31 = arith.constant 0 : index
    %36 = vector.load %arg0[%c2_29, %c0_30, %c0_31] : memref<8x8x32xbf16, #tpu.memory_space<vmem>>, vector<1x8x32xbf16>
    %37 = vector.shape_cast %36 : vector<1x8x32xbf16> to vector<8x32xbf16>
    %38 = vector.extract_strided_slice %37 {offsets = [1, 0], sizes = [7, 32], strides = [1, 1]} : vector<8x32xbf16> to vector<7x32xbf16>
    %c5 = arith.constant 5 : index
    %c0_32 = arith.constant 0 : index
    %c0_33 = arith.constant 0 : index
    %39 = vector.load %arg1[%c5, %c0_32, %c0_33] : memref<6x32x336xbf16, #tpu.memory_space<vmem>>, vector<1x32x336xbf16>
    %40 = vector.shape_cast %39 : vector<1x32x336xbf16> to vector<32x336xbf16>
    %cst_34 = arith.constant dense<0.000000e+00> : vector<7x336xf32>
    %41 = tpu.matmul %38, %40, %cst_34 {dimension_numbers = #tpu.dot_dimension_numbers<[1], [0], [0], [1], [0, 0, 1, 1], [], []>} : vector<7x32xbf16>, vector<32x336xbf16>, vector<7x336xf32> -> vector<7x336xf32>
    %42 = arith.addf %35, %41 : vector<7x336xf32>
    %c0_35 = arith.constant 0 : index
    %c0_36 = arith.constant 0 : index
    %43 = vector.load %arg2[%c0_35, %c0_36] : memref<1x336xf32, #tpu.memory_space<vmem>>, vector<1x336xf32>
    %44 = vector.broadcast %43 : vector<1x336xf32> to vector<7x336xf32>
    %45 = arith.addf %42, %44 : vector<7x336xf32>
    %cst_37 = arith.constant 0.000000e+00 : f32
    %46 = vector.broadcast %cst_37 : f32 to vector<7x336xf32>
    %47 = arith.subf %46, %45 : vector<7x336xf32>
    %48 = math.exp %47 : vector<7x336xf32>
    %cst_38 = arith.constant 1.000000e+00 : f32
    %49 = vector.broadcast %cst_38 : f32 to vector<7x336xf32>
    %50 = arith.addf %49, %48 : vector<7x336xf32>
    %cst_39 = arith.constant 1.000000e+00 : f32
    %51 = vector.broadcast %cst_39 : f32 to vector<7x336xf32>
    %52 = arith.divf %51, %50 : vector<7x336xf32>
    %53 = vector.extract_strided_slice %52 {offsets = [0, 0], sizes = [7, 84], strides = [1, 1]} : vector<7x336xf32> to vector<7x84xf32>
    %54 = vector.extract_strided_slice %52 {offsets = [0, 84], sizes = [7, 84], strides = [1, 1]} : vector<7x336xf32> to vector<7x84xf32>
    %55 = arith.addf %53, %54 : vector<7x84xf32>
    %56 = vector.extract_strided_slice %52 {offsets = [0, 168], sizes = [7, 84], strides = [1, 1]} : vector<7x336xf32> to vector<7x84xf32>
    %57 = arith.addf %55, %56 : vector<7x84xf32>
    %58 = vector.extract_strided_slice %52 {offsets = [0, 252], sizes = [7, 84], strides = [1, 1]} : vector<7x336xf32> to vector<7x84xf32>
    %59 = arith.addf %57, %58 : vector<7x84xf32>
    %cst_40 = arith.constant 2.500000e-01 : f32
    %60 = vector.broadcast %cst_40 : f32 to vector<7x84xf32>
    %61 = arith.mulf %59, %60 : vector<7x84xf32>
    %62 = arith.truncf %61 : vector<7x84xf32> to vector<7x84xbf16>
    %cst_41 = arith.constant 0.000000e+00 : f32
    %63 = vector.broadcast %cst_41 : f32 to vector<7x336xf32>
    %c4_42 = arith.constant 4 : index
    %c0_43 = arith.constant 0 : index
    %c0_44 = arith.constant 0 : index
    %64 = vector.load %arg0[%c4_42, %c0_43, %c0_44] : memref<8x8x32xbf16, #tpu.memory_space<vmem>>, vector<1x8x32xbf16>
    %65 = vector.shape_cast %64 : vector<1x8x32xbf16> to vector<8x32xbf16>
    %66 = vector.extract_strided_slice %65 {offsets = [0, 0], sizes = [7, 32], strides = [1, 1]} : vector<8x32xbf16> to vector<7x32xbf16>
    %c0_45 = arith.constant 0 : index
    %c0_46 = arith.constant 0 : index
    %c0_47 = arith.constant 0 : index
    %67 = vector.load %arg1[%c0_45, %c0_46, %c0_47] : memref<6x32x336xbf16, #tpu.memory_space<vmem>>, vector<1x32x336xbf16>
    %68 = vector.shape_cast %67 : vector<1x32x336xbf16> to vector<32x336xbf16>
    %cst_48 = arith.constant dense<0.000000e+00> : vector<7x336xf32>
    %69 = tpu.matmul %66, %68, %cst_48 {dimension_numbers = #tpu.dot_dimension_numbers<[1], [0], [0], [1], [0, 0, 1, 1], [], []>} : vector<7x32xbf16>, vector<32x336xbf16>, vector<7x336xf32> -> vector<7x336xf32>
    %70 = arith.addf %63, %69 : vector<7x336xf32>
    %c6_49 = arith.constant 6 : index
    %c0_50 = arith.constant 0 : index
    %c0_51 = arith.constant 0 : index
    %71 = vector.load %arg0[%c6_49, %c0_50, %c0_51] : memref<8x8x32xbf16, #tpu.memory_space<vmem>>, vector<1x8x32xbf16>
    %72 = vector.shape_cast %71 : vector<1x8x32xbf16> to vector<8x32xbf16>
    %73 = vector.extract_strided_slice %72 {offsets = [0, 0], sizes = [7, 32], strides = [1, 1]} : vector<8x32xbf16> to vector<7x32xbf16>
    %c1_52 = arith.constant 1 : index
    %c0_53 = arith.constant 0 : index
    %c0_54 = arith.constant 0 : index
    %74 = vector.load %arg1[%c1_52, %c0_53, %c0_54] : memref<6x32x336xbf16, #tpu.memory_space<vmem>>, vector<1x32x336xbf16>
    %75 = vector.shape_cast %74 : vector<1x32x336xbf16> to vector<32x336xbf16>
    %cst_55 = arith.constant dense<0.000000e+00> : vector<7x336xf32>
    %76 = tpu.matmul %73, %75, %cst_55 {dimension_numbers = #tpu.dot_dimension_numbers<[1], [0], [0], [1], [0, 0, 1, 1], [], []>} : vector<7x32xbf16>, vector<32x336xbf16>, vector<7x336xf32> -> vector<7x336xf32>
    %77 = arith.addf %70, %76 : vector<7x336xf32>
    %c0_56 = arith.constant 0 : index
    %c0_57 = arith.constant 0 : index
    %c0_58 = arith.constant 0 : index
    %78 = vector.load %arg0[%c0_56, %c0_57, %c0_58] : memref<8x8x32xbf16, #tpu.memory_space<vmem>>, vector<1x8x32xbf16>
    %79 = vector.shape_cast %78 : vector<1x8x32xbf16> to vector<8x32xbf16>
    %80 = vector.extract_strided_slice %79 {offsets = [1, 0], sizes = [7, 32], strides = [1, 1]} : vector<8x32xbf16> to vector<7x32xbf16>
    %c2_59 = arith.constant 2 : index
    %c0_60 = arith.constant 0 : index
    %c0_61 = arith.constant 0 : index
    %81 = vector.load %arg1[%c2_59, %c0_60, %c0_61] : memref<6x32x336xbf16, #tpu.memory_space<vmem>>, vector<1x32x336xbf16>
    %82 = vector.shape_cast %81 : vector<1x32x336xbf16> to vector<32x336xbf16>
    %cst_62 = arith.constant dense<0.000000e+00> : vector<7x336xf32>
    %83 = tpu.matmul %80, %82, %cst_62 {dimension_numbers = #tpu.dot_dimension_numbers<[1], [0], [0], [1], [0, 0, 1, 1], [], []>} : vector<7x32xbf16>, vector<32x336xbf16>, vector<7x336xf32> -> vector<7x336xf32>
    %84 = arith.addf %77, %83 : vector<7x336xf32>
    %c2_63 = arith.constant 2 : index
    %c0_64 = arith.constant 0 : index
    %c0_65 = arith.constant 0 : index
    %85 = vector.load %arg0[%c2_63, %c0_64, %c0_65] : memref<8x8x32xbf16, #tpu.memory_space<vmem>>, vector<1x8x32xbf16>
    %86 = vector.shape_cast %85 : vector<1x8x32xbf16> to vector<8x32xbf16>
    %87 = vector.extract_strided_slice %86 {offsets = [1, 0], sizes = [7, 32], strides = [1, 1]} : vector<8x32xbf16> to vector<7x32xbf16>
    %c3_66 = arith.constant 3 : index
    %c0_67 = arith.constant 0 : index
    %c0_68 = arith.constant 0 : index
    %88 = vector.load %arg1[%c3_66, %c0_67, %c0_68] : memref<6x32x336xbf16, #tpu.memory_space<vmem>>, vector<1x32x336xbf16>
    %89 = vector.shape_cast %88 : vector<1x32x336xbf16> to vector<32x336xbf16>
    %cst_69 = arith.constant dense<0.000000e+00> : vector<7x336xf32>
    %90 = tpu.matmul %87, %89, %cst_69 {dimension_numbers = #tpu.dot_dimension_numbers<[1], [0], [0], [1], [0, 0, 1, 1], [], []>} : vector<7x32xbf16>, vector<32x336xbf16>, vector<7x336xf32> -> vector<7x336xf32>
    %91 = arith.addf %84, %90 : vector<7x336xf32>
    %c4_70 = arith.constant 4 : index
    %c0_71 = arith.constant 0 : index
    %c0_72 = arith.constant 0 : index
    %92 = vector.load %arg0[%c4_70, %c0_71, %c0_72] : memref<8x8x32xbf16, #tpu.memory_space<vmem>>, vector<1x8x32xbf16>
    %93 = vector.shape_cast %92 : vector<1x8x32xbf16> to vector<8x32xbf16>
    %94 = vector.extract_strided_slice %93 {offsets = [1, 0], sizes = [7, 32], strides = [1, 1]} : vector<8x32xbf16> to vector<7x32xbf16>
    %c4_73 = arith.constant 4 : index
    %c0_74 = arith.constant 0 : index
    %c0_75 = arith.constant 0 : index
    %95 = vector.load %arg1[%c4_73, %c0_74, %c0_75] : memref<6x32x336xbf16, #tpu.memory_space<vmem>>, vector<1x32x336xbf16>
    %96 = vector.shape_cast %95 : vector<1x32x336xbf16> to vector<32x336xbf16>
    %cst_76 = arith.constant dense<0.000000e+00> : vector<7x336xf32>
    %97 = tpu.matmul %94, %96, %cst_76 {dimension_numbers = #tpu.dot_dimension_numbers<[1], [0], [0], [1], [0, 0, 1, 1], [], []>} : vector<7x32xbf16>, vector<32x336xbf16>, vector<7x336xf32> -> vector<7x336xf32>
    %98 = arith.addf %91, %97 : vector<7x336xf32>
    %c6_77 = arith.constant 6 : index
    %c0_78 = arith.constant 0 : index
    %c0_79 = arith.constant 0 : index
    %99 = vector.load %arg0[%c6_77, %c0_78, %c0_79] : memref<8x8x32xbf16, #tpu.memory_space<vmem>>, vector<1x8x32xbf16>
    %100 = vector.shape_cast %99 : vector<1x8x32xbf16> to vector<8x32xbf16>
    %101 = vector.extract_strided_slice %100 {offsets = [1, 0], sizes = [7, 32], strides = [1, 1]} : vector<8x32xbf16> to vector<7x32xbf16>
    %c5_80 = arith.constant 5 : index
    %c0_81 = arith.constant 0 : index
    %c0_82 = arith.constant 0 : index
    %102 = vector.load %arg1[%c5_80, %c0_81, %c0_82] : memref<6x32x336xbf16, #tpu.memory_space<vmem>>, vector<1x32x336xbf16>
    %103 = vector.shape_cast %102 : vector<1x32x336xbf16> to vector<32x336xbf16>
    %cst_83 = arith.constant dense<0.000000e+00> : vector<7x336xf32>
    %104 = tpu.matmul %101, %103, %cst_83 {dimension_numbers = #tpu.dot_dimension_numbers<[1], [0], [0], [1], [0, 0, 1, 1], [], []>} : vector<7x32xbf16>, vector<32x336xbf16>, vector<7x336xf32> -> vector<7x336xf32>
    %105 = arith.addf %98, %104 : vector<7x336xf32>
    %c0_84 = arith.constant 0 : index
    %c0_85 = arith.constant 0 : index
    %106 = vector.load %arg2[%c0_84, %c0_85] : memref<1x336xf32, #tpu.memory_space<vmem>>, vector<1x336xf32>
    %107 = vector.broadcast %106 : vector<1x336xf32> to vector<7x336xf32>
    %108 = arith.addf %105, %107 : vector<7x336xf32>
    %cst_86 = arith.constant 0.000000e+00 : f32
    %109 = vector.broadcast %cst_86 : f32 to vector<7x336xf32>
    %110 = arith.subf %109, %108 : vector<7x336xf32>
    %111 = math.exp %110 : vector<7x336xf32>
    %cst_87 = arith.constant 1.000000e+00 : f32
    %112 = vector.broadcast %cst_87 : f32 to vector<7x336xf32>
    %113 = arith.addf %112, %111 : vector<7x336xf32>
    %cst_88 = arith.constant 1.000000e+00 : f32
    %114 = vector.broadcast %cst_88 : f32 to vector<7x336xf32>
    %115 = arith.divf %114, %113 : vector<7x336xf32>
    %116 = vector.extract_strided_slice %115 {offsets = [0, 0], sizes = [7, 84], strides = [1, 1]} : vector<7x336xf32> to vector<7x84xf32>
    %117 = vector.extract_strided_slice %115 {offsets = [0, 84], sizes = [7, 84], strides = [1, 1]} : vector<7x336xf32> to vector<7x84xf32>
    %118 = arith.addf %116, %117 : vector<7x84xf32>
    %119 = vector.extract_strided_slice %115 {offsets = [0, 168], sizes = [7, 84], strides = [1, 1]} : vector<7x336xf32> to vector<7x84xf32>
    %120 = arith.addf %118, %119 : vector<7x84xf32>
    %121 = vector.extract_strided_slice %115 {offsets = [0, 252], sizes = [7, 84], strides = [1, 1]} : vector<7x336xf32> to vector<7x84xf32>
    %122 = arith.addf %120, %121 : vector<7x84xf32>
    %cst_89 = arith.constant 2.500000e-01 : f32
    %123 = vector.broadcast %cst_89 : f32 to vector<7x84xf32>
    %124 = arith.mulf %122, %123 : vector<7x84xf32>
    %125 = arith.truncf %124 : vector<7x84xf32> to vector<7x84xbf16>
    %cst_90 = arith.constant 0.000000e+00 : f32
    %126 = vector.broadcast %cst_90 : f32 to vector<5x320xf32>
    %127 = vector.extract_strided_slice %62 {offsets = [0, 0], sizes = [5, 84], strides = [1, 1]} : vector<7x84xbf16> to vector<5x84xbf16>
    %c0_91 = arith.constant 0 : index
    %c0_92 = arith.constant 0 : index
    %c0_93 = arith.constant 0 : index
    %128 = vector.load %arg3[%c0_91, %c0_92, %c0_93] : memref<6x84x320xbf16, #tpu.memory_space<vmem>>, vector<1x84x320xbf16>
    %129 = vector.shape_cast %128 : vector<1x84x320xbf16> to vector<84x320xbf16>
    %cst_94 = arith.constant dense<0.000000e+00> : vector<5x320xf32>
    %130 = tpu.matmul %127, %129, %cst_94 {dimension_numbers = #tpu.dot_dimension_numbers<[1], [0], [0], [1], [0, 0, 1, 1], [], []>} : vector<5x84xbf16>, vector<84x320xbf16>, vector<5x320xf32> -> vector<5x320xf32>
    %131 = arith.addf %126, %130 : vector<5x320xf32>
    %132 = vector.extract_strided_slice %125 {offsets = [0, 0], sizes = [5, 84], strides = [1, 1]} : vector<7x84xbf16> to vector<5x84xbf16>
    %c1_95 = arith.constant 1 : index
    %c0_96 = arith.constant 0 : index
    %c0_97 = arith.constant 0 : index
    %133 = vector.load %arg3[%c1_95, %c0_96, %c0_97] : memref<6x84x320xbf16, #tpu.memory_space<vmem>>, vector<1x84x320xbf16>
    %134 = vector.shape_cast %133 : vector<1x84x320xbf16> to vector<84x320xbf16>
    %cst_98 = arith.constant dense<0.000000e+00> : vector<5x320xf32>
    %135 = tpu.matmul %132, %134, %cst_98 {dimension_numbers = #tpu.dot_dimension_numbers<[1], [0], [0], [1], [0, 0, 1, 1], [], []>} : vector<5x84xbf16>, vector<84x320xbf16>, vector<5x320xf32> -> vector<5x320xf32>
    %136 = arith.addf %131, %135 : vector<5x320xf32>
    %137 = vector.extract_strided_slice %62 {offsets = [1, 0], sizes = [5, 84], strides = [1, 1]} : vector<7x84xbf16> to vector<5x84xbf16>
    %c2_99 = arith.constant 2 : index
    %c0_100 = arith.constant 0 : index
    %c0_101 = arith.constant 0 : index
    %138 = vector.load %arg3[%c2_99, %c0_100, %c0_101] : memref<6x84x320xbf16, #tpu.memory_space<vmem>>, vector<1x84x320xbf16>
    %139 = vector.shape_cast %138 : vector<1x84x320xbf16> to vector<84x320xbf16>
    %cst_102 = arith.constant dense<0.000000e+00> : vector<5x320xf32>
    %140 = tpu.matmul %137, %139, %cst_102 {dimension_numbers = #tpu.dot_dimension_numbers<[1], [0], [0], [1], [0, 0, 1, 1], [], []>} : vector<5x84xbf16>, vector<84x320xbf16>, vector<5x320xf32> -> vector<5x320xf32>
    %141 = arith.addf %136, %140 : vector<5x320xf32>
    %142 = vector.extract_strided_slice %125 {offsets = [1, 0], sizes = [5, 84], strides = [1, 1]} : vector<7x84xbf16> to vector<5x84xbf16>
    %c3_103 = arith.constant 3 : index
    %c0_104 = arith.constant 0 : index
    %c0_105 = arith.constant 0 : index
    %143 = vector.load %arg3[%c3_103, %c0_104, %c0_105] : memref<6x84x320xbf16, #tpu.memory_space<vmem>>, vector<1x84x320xbf16>
    %144 = vector.shape_cast %143 : vector<1x84x320xbf16> to vector<84x320xbf16>
    %cst_106 = arith.constant dense<0.000000e+00> : vector<5x320xf32>
    %145 = tpu.matmul %142, %144, %cst_106 {dimension_numbers = #tpu.dot_dimension_numbers<[1], [0], [0], [1], [0, 0, 1, 1], [], []>} : vector<5x84xbf16>, vector<84x320xbf16>, vector<5x320xf32> -> vector<5x320xf32>
    %146 = arith.addf %141, %145 : vector<5x320xf32>
    %147 = vector.extract_strided_slice %62 {offsets = [2, 0], sizes = [5, 84], strides = [1, 1]} : vector<7x84xbf16> to vector<5x84xbf16>
    %c4_107 = arith.constant 4 : index
    %c0_108 = arith.constant 0 : index
    %c0_109 = arith.constant 0 : index
    %148 = vector.load %arg3[%c4_107, %c0_108, %c0_109] : memref<6x84x320xbf16, #tpu.memory_space<vmem>>, vector<1x84x320xbf16>
    %149 = vector.shape_cast %148 : vector<1x84x320xbf16> to vector<84x320xbf16>
    %cst_110 = arith.constant dense<0.000000e+00> : vector<5x320xf32>
    %150 = tpu.matmul %147, %149, %cst_110 {dimension_numbers = #tpu.dot_dimension_numbers<[1], [0], [0], [1], [0, 0, 1, 1], [], []>} : vector<5x84xbf16>, vector<84x320xbf16>, vector<5x320xf32> -> vector<5x320xf32>
    %151 = arith.addf %146, %150 : vector<5x320xf32>
    %152 = vector.extract_strided_slice %125 {offsets = [2, 0], sizes = [5, 84], strides = [1, 1]} : vector<7x84xbf16> to vector<5x84xbf16>
    %c5_111 = arith.constant 5 : index
    %c0_112 = arith.constant 0 : index
    %c0_113 = arith.constant 0 : index
    %153 = vector.load %arg3[%c5_111, %c0_112, %c0_113] : memref<6x84x320xbf16, #tpu.memory_space<vmem>>, vector<1x84x320xbf16>
    %154 = vector.shape_cast %153 : vector<1x84x320xbf16> to vector<84x320xbf16>
    %cst_114 = arith.constant dense<0.000000e+00> : vector<5x320xf32>
    %155 = tpu.matmul %152, %154, %cst_114 {dimension_numbers = #tpu.dot_dimension_numbers<[1], [0], [0], [1], [0, 0, 1, 1], [], []>} : vector<5x84xbf16>, vector<84x320xbf16>, vector<5x320xf32> -> vector<5x320xf32>
    %156 = arith.addf %151, %155 : vector<5x320xf32>
    %c0_115 = arith.constant 0 : index
    %c0_116 = arith.constant 0 : index
    %157 = vector.load %arg4[%c0_115, %c0_116] : memref<1x320xf32, #tpu.memory_space<vmem>>, vector<1x320xf32>
    %158 = vector.broadcast %157 : vector<1x320xf32> to vector<5x320xf32>
    %159 = arith.addf %156, %158 : vector<5x320xf32>
    %cst_117 = arith.constant 0.000000e+00 : f32
    %160 = vector.broadcast %cst_117 : f32 to vector<5x320xf32>
    %161 = arith.subf %160, %159 : vector<5x320xf32>
    %162 = math.exp %161 : vector<5x320xf32>
    %cst_118 = arith.constant 1.000000e+00 : f32
    %163 = vector.broadcast %cst_118 : f32 to vector<5x320xf32>
    %164 = arith.addf %163, %162 : vector<5x320xf32>
    %cst_119 = arith.constant 1.000000e+00 : f32
    %165 = vector.broadcast %cst_119 : f32 to vector<5x320xf32>
    %166 = arith.divf %165, %164 : vector<5x320xf32>
    %167 = vector.extract_strided_slice %166 {offsets = [0, 0], sizes = [5, 80], strides = [1, 1]} : vector<5x320xf32> to vector<5x80xf32>
    %168 = vector.extract_strided_slice %166 {offsets = [0, 80], sizes = [5, 80], strides = [1, 1]} : vector<5x320xf32> to vector<5x80xf32>
    %169 = arith.addf %167, %168 : vector<5x80xf32>
    %170 = vector.extract_strided_slice %166 {offsets = [0, 160], sizes = [5, 80], strides = [1, 1]} : vector<5x320xf32> to vector<5x80xf32>
    %171 = arith.addf %169, %170 : vector<5x80xf32>
    %172 = vector.extract_strided_slice %166 {offsets = [0, 240], sizes = [5, 80], strides = [1, 1]} : vector<5x320xf32> to vector<5x80xf32>
    %173 = arith.addf %171, %172 : vector<5x80xf32>
    %cst_120 = arith.constant 2.500000e-01 : f32
    %174 = vector.broadcast %cst_120 : f32 to vector<5x80xf32>
    %175 = arith.mulf %173, %174 : vector<5x80xf32>
    %c0_121 = arith.constant 0 : index
    %c0_122 = arith.constant 0 : index
    %c0_123 = arith.constant 0 : index
    %176 = vector.load %arg12[%c0_121, %c0_122, %c0_123] : memref<2x5x80xf32, #tpu.memory_space<vmem>>, vector<1x5x80xf32>
    %177 = vector.shape_cast %176 : vector<1x5x80xf32> to vector<5x80xf32>
    %178 = vector.shape_cast %175 : vector<5x80xf32> to vector<1x5x80xf32>
    tpu.vector_store %arg12[%c0_121, %c0_122, %c0_123], %178 {strides = array<i32>} : memref<2x5x80xf32, #tpu.memory_space<vmem>>, vector<1x5x80xf32>,
    %cst_124 = arith.constant 0.000000e+00 : f32
    %179 = vector.broadcast %cst_124 : f32 to vector<1x120xf32>
    %180 = vector.extract_strided_slice %175 {offsets = [0, 0], sizes = [1, 80], strides = [1, 1]} : vector<5x80xf32> to vector<1x80xf32>
    %c0_125 = arith.constant 0 : index
    %c0_126 = arith.constant 0 : index
    %c0_127 = arith.constant 0 : index
    %181 = vector.load %arg5[%c0_125, %c0_126, %c0_127] : memref<5x80x120xf32, #tpu.memory_space<vmem>>, vector<1x80x120xf32>
    %182 = vector.shape_cast %181 : vector<1x80x120xf32> to vector<80x120xf32>
    %cst_128 = arith.constant dense<0.000000e+00> : vector<1x120xf32>
    %183 = tpu.matmul %180, %182, %cst_128 {dimension_numbers = #tpu.dot_dimension_numbers<[1], [0], [0], [1], [0, 0, 1, 1], [], []>} : vector<1x80xf32>, vector<80x120xf32>, vector<1x120xf32> -> vector<1x120xf32>
    %184 = arith.addf %179, %183 : vector<1x120xf32>
    %185 = vector.extract_strided_slice %175 {offsets = [1, 0], sizes = [1, 80], strides = [1, 1]} : vector<5x80xf32> to vector<1x80xf32>
    %c1_129 = arith.constant 1 : index
    %c0_130 = arith.constant 0 : index
    %c0_131 = arith.constant 0 : index
    %186 = vector.load %arg5[%c1_129, %c0_130, %c0_131] : memref<5x80x120xf32, #tpu.memory_space<vmem>>, vector<1x80x120xf32>
    %187 = vector.shape_cast %186 : vector<1x80x120xf32> to vector<80x120xf32>
    %cst_132 = arith.constant dense<0.000000e+00> : vector<1x120xf32>
    %188 = tpu.matmul %185, %187, %cst_132 {dimension_numbers = #tpu.dot_dimension_numbers<[1], [0], [0], [1], [0, 0, 1, 1], [], []>} : vector<1x80xf32>, vector<80x120xf32>, vector<1x120xf32> -> vector<1x120xf32>
    %189 = arith.addf %184, %188 : vector<1x120xf32>
    %190 = vector.extract_strided_slice %175 {offsets = [2, 0], sizes = [1, 80], strides = [1, 1]} : vector<5x80xf32> to vector<1x80xf32>
    %c2_133 = arith.constant 2 : index
    %c0_134 = arith.constant 0 : index
    %c0_135 = arith.constant 0 : index
    %191 = vector.load %arg5[%c2_133, %c0_134, %c0_135] : memref<5x80x120xf32, #tpu.memory_space<vmem>>, vector<1x80x120xf32>
    %192 = vector.shape_cast %191 : vector<1x80x120xf32> to vector<80x120xf32>
    %cst_136 = arith.constant dense<0.000000e+00> : vector<1x120xf32>
    %193 = tpu.matmul %190, %192, %cst_136 {dimension_numbers = #tpu.dot_dimension_numbers<[1], [0], [0], [1], [0, 0, 1, 1], [], []>} : vector<1x80xf32>, vector<80x120xf32>, vector<1x120xf32> -> vector<1x120xf32>
    %194 = arith.addf %189, %193 : vector<1x120xf32>
    %195 = vector.extract_strided_slice %175 {offsets = [3, 0], sizes = [1, 80], strides = [1, 1]} : vector<5x80xf32> to vector<1x80xf32>
    %c3_137 = arith.constant 3 : index
    %c0_138 = arith.constant 0 : index
    %c0_139 = arith.constant 0 : index
    %196 = vector.load %arg5[%c3_137, %c0_138, %c0_139] : memref<5x80x120xf32, #tpu.memory_space<vmem>>, vector<1x80x120xf32>
    %197 = vector.shape_cast %196 : vector<1x80x120xf32> to vector<80x120xf32>
    %cst_140 = arith.constant dense<0.000000e+00> : vector<1x120xf32>
    %198 = tpu.matmul %195, %197, %cst_140 {dimension_numbers = #tpu.dot_dimension_numbers<[1], [0], [0], [1], [0, 0, 1, 1], [], []>} : vector<1x80xf32>, vector<80x120xf32>, vector<1x120xf32> -> vector<1x120xf32>
    %199 = arith.addf %194, %198 : vector<1x120xf32>
    %200 = vector.extract_strided_slice %175 {offsets = [4, 0], sizes = [1, 80], strides = [1, 1]} : vector<5x80xf32> to vector<1x80xf32>
    %c4_141 = arith.constant 4 : index
    %c0_142 = arith.constant 0 : index
    %c0_143 = arith.constant 0 : index
    %201 = vector.load %arg5[%c4_141, %c0_142, %c0_143] : memref<5x80x120xf32, #tpu.memory_space<vmem>>, vector<1x80x120xf32>
    %202 = vector.shape_cast %201 : vector<1x80x120xf32> to vector<80x120xf32>
    %cst_144 = arith.constant dense<0.000000e+00> : vector<1x120xf32>
    %203 = tpu.matmul %200, %202, %cst_144 {dimension_numbers = #tpu.dot_dimension_numbers<[1], [0], [0], [1], [0, 0, 1, 1], [], []>} : vector<1x80xf32>, vector<80x120xf32>, vector<1x120xf32> -> vector<1x120xf32>
    %204 = arith.addf %199, %203 : vector<1x120xf32>
    %c0_145 = arith.constant 0 : index
    %c0_146 = arith.constant 0 : index
    %205 = vector.load %arg6[%c0_145, %c0_146] : memref<1x120xf32, #tpu.memory_space<vmem>>, vector<1x120xf32>
    %206 = arith.addf %204, %205 : vector<1x120xf32>
    %cst_147 = arith.constant 0.000000e+00 : f32
    %207 = vector.broadcast %cst_147 : f32 to vector<1x120xf32>
    %208 = arith.subf %207, %206 : vector<1x120xf32>
    %209 = math.exp %208 : vector<1x120xf32>
    %cst_148 = arith.constant 1.000000e+00 : f32
    %210 = vector.broadcast %cst_148 : f32 to vector<1x120xf32>
    %211 = arith.addf %210, %209 : vector<1x120xf32>
    %cst_149 = arith.constant 1.000000e+00 : f32
    %212 = vector.broadcast %cst_149 : f32 to vector<1x120xf32>
    %213 = arith.divf %212, %211 : vector<1x120xf32>
    %c0_150 = arith.constant 0 : index
    %c0_151 = arith.constant 0 : index
    %214 = vector.load %arg7[%c0_150, %c0_151] : memref<120x84xf32, #tpu.memory_space<vmem>>, vector<120x84xf32>
    %cst_152 = arith.constant dense<0.000000e+00> : vector<1x84xf32>
    %215 = tpu.matmul %213, %214, %cst_152 {dimension_numbers = #tpu.dot_dimension_numbers<[1], [0], [0], [1], [0, 0, 1, 1], [], []>} : vector<1x120xf32>, vector<120x84xf32>, vector<1x84xf32> -> vector<1x84xf32>
    %c0_153 = arith.constant 0 : index
    %c0_154 = arith.constant 0 : index
    %216 = vector.load %arg8[%c0_153, %c0_154] : memref<1x84xf32, #tpu.memory_space<vmem>>, vector<1x84xf32>
    %217 = arith.addf %215, %216 : vector<1x84xf32>
    %cst_155 = arith.constant 0.000000e+00 : f32
    %218 = vector.broadcast %cst_155 : f32 to vector<1x84xf32>
    %219 = arith.subf %218, %217 : vector<1x84xf32>
    %220 = math.exp %219 : vector<1x84xf32>
    %cst_156 = arith.constant 1.000000e+00 : f32
    %221 = vector.broadcast %cst_156 : f32 to vector<1x84xf32>
    %222 = arith.addf %221, %220 : vector<1x84xf32>
    %cst_157 = arith.constant 1.000000e+00 : f32
    %223 = vector.broadcast %cst_157 : f32 to vector<1x84xf32>
    %224 = arith.divf %223, %222 : vector<1x84xf32>
    %c0_158 = arith.constant 0 : index
    %c0_159 = arith.constant 0 : index
    %225 = vector.load %arg9[%c0_158, %c0_159] : memref<84x10xf32, #tpu.memory_space<vmem>>, vector<84x10xf32>
    %cst_160 = arith.constant dense<0.000000e+00> : vector<1x10xf32>
    %226 = tpu.matmul %224, %225, %cst_160 {dimension_numbers = #tpu.dot_dimension_numbers<[1], [0], [0], [1], [0, 0, 1, 1], [], []>} : vector<1x84xf32>, vector<84x10xf32>, vector<1x10xf32> -> vector<1x10xf32>
    %c0_161 = arith.constant 0 : index
    %c0_162 = arith.constant 0 : index
    %227 = vector.load %arg10[%c0_161, %c0_162] : memref<1x10xf32, #tpu.memory_space<vmem>>, vector<1x10xf32>
    %228 = arith.addf %226, %227 : vector<1x10xf32>
    %c0_163 = arith.constant 0 : index
    %c0_164 = arith.constant 0 : index
    %229 = vector.load %arg11[%c0_163, %c0_164] : memref<2x10xf32, #tpu.memory_space<vmem>>, vector<1x10xf32>
    tpu.vector_store %arg11[%c0_163, %c0_164], %228 {strides = array<i32>} : memref<2x10xf32, #tpu.memory_space<vmem>>, vector<1x10xf32>,
    %cst_165 = arith.constant 0.000000e+00 : f32
    %230 = vector.broadcast %cst_165 : f32 to vector<7x336xf32>
    %c1_166 = arith.constant 1 : index
    %c0_167 = arith.constant 0 : index
    %c0_168 = arith.constant 0 : index
    %231 = vector.load %arg0[%c1_166, %c0_167, %c0_168] : memref<8x8x32xbf16, #tpu.memory_space<vmem>>, vector<1x8x32xbf16>
    %232 = vector.shape_cast %231 : vector<1x8x32xbf16> to vector<8x32xbf16>
    %233 = vector.extract_strided_slice %232 {offsets = [0, 0], sizes = [7, 32], strides = [1, 1]} : vector<8x32xbf16> to vector<7x32xbf16>
    %c0_169 = arith.constant 0 : index
    %c0_170 = arith.constant 0 : index
    %c0_171 = arith.constant 0 : index
    %234 = vector.load %arg1[%c0_169, %c0_170, %c0_171] : memref<6x32x336xbf16, #tpu.memory_space<vmem>>, vector<1x32x336xbf16>
    %235 = vector.shape_cast %234 : vector<1x32x336xbf16> to vector<32x336xbf16>
    %cst_172 = arith.constant dense<0.000000e+00> : vector<7x336xf32>
    %236 = tpu.matmul %233, %235, %cst_172 {dimension_numbers = #tpu.dot_dimension_numbers<[1], [0], [0], [1], [0, 0, 1, 1], [], []>} : vector<7x32xbf16>, vector<32x336xbf16>, vector<7x336xf32> -> vector<7x336xf32>
    %237 = arith.addf %230, %236 : vector<7x336xf32>
    %c3_173 = arith.constant 3 : index
    %c0_174 = arith.constant 0 : index
    %c0_175 = arith.constant 0 : index
    %238 = vector.load %arg0[%c3_173, %c0_174, %c0_175] : memref<8x8x32xbf16, #tpu.memory_space<vmem>>, vector<1x8x32xbf16>
    %239 = vector.shape_cast %238 : vector<1x8x32xbf16> to vector<8x32xbf16>
    %240 = vector.extract_strided_slice %239 {offsets = [0, 0], sizes = [7, 32], strides = [1, 1]} : vector<8x32xbf16> to vector<7x32xbf16>
    %c1_176 = arith.constant 1 : index
    %c0_177 = arith.constant 0 : index
    %c0_178 = arith.constant 0 : index
    %241 = vector.load %arg1[%c1_176, %c0_177, %c0_178] : memref<6x32x336xbf16, #tpu.memory_space<vmem>>, vector<1x32x336xbf16>
    %242 = vector.shape_cast %241 : vector<1x32x336xbf16> to vector<32x336xbf16>
    %cst_179 = arith.constant dense<0.000000e+00> : vector<7x336xf32>
    %243 = tpu.matmul %240, %242, %cst_179 {dimension_numbers = #tpu.dot_dimension_numbers<[1], [0], [0], [1], [0, 0, 1, 1], [], []>} : vector<7x32xbf16>, vector<32x336xbf16>, vector<7x336xf32> -> vector<7x336xf32>
    %244 = arith.addf %237, %243 : vector<7x336xf32>
    %c5_180 = arith.constant 5 : index
    %c0_181 = arith.constant 0 : index
    %c0_182 = arith.constant 0 : index
    %245 = vector.load %arg0[%c5_180, %c0_181, %c0_182] : memref<8x8x32xbf16, #tpu.memory_space<vmem>>, vector<1x8x32xbf16>
    %246 = vector.shape_cast %245 : vector<1x8x32xbf16> to vector<8x32xbf16>
    %247 = vector.extract_strided_slice %246 {offsets = [0, 0], sizes = [7, 32], strides = [1, 1]} : vector<8x32xbf16> to vector<7x32xbf16>
    %c2_183 = arith.constant 2 : index
    %c0_184 = arith.constant 0 : index
    %c0_185 = arith.constant 0 : index
    %248 = vector.load %arg1[%c2_183, %c0_184, %c0_185] : memref<6x32x336xbf16, #tpu.memory_space<vmem>>, vector<1x32x336xbf16>
    %249 = vector.shape_cast %248 : vector<1x32x336xbf16> to vector<32x336xbf16>
    %cst_186 = arith.constant dense<0.000000e+00> : vector<7x336xf32>
    %250 = tpu.matmul %247, %249, %cst_186 {dimension_numbers = #tpu.dot_dimension_numbers<[1], [0], [0], [1], [0, 0, 1, 1], [], []>} : vector<7x32xbf16>, vector<32x336xbf16>, vector<7x336xf32> -> vector<7x336xf32>
    %251 = arith.addf %244, %250 : vector<7x336xf32>
    %c7 = arith.constant 7 : index
    %c0_187 = arith.constant 0 : index
    %c0_188 = arith.constant 0 : index
    %252 = vector.load %arg0[%c7, %c0_187, %c0_188] : memref<8x8x32xbf16, #tpu.memory_space<vmem>>, vector<1x8x32xbf16>
    %253 = vector.shape_cast %252 : vector<1x8x32xbf16> to vector<8x32xbf16>
    %254 = vector.extract_strided_slice %253 {offsets = [0, 0], sizes = [7, 32], strides = [1, 1]} : vector<8x32xbf16> to vector<7x32xbf16>
    %c3_189 = arith.constant 3 : index
    %c0_190 = arith.constant 0 : index
    %c0_191 = arith.constant 0 : index
    %255 = vector.load %arg1[%c3_189, %c0_190, %c0_191] : memref<6x32x336xbf16, #tpu.memory_space<vmem>>, vector<1x32x336xbf16>
    %256 = vector.shape_cast %255 : vector<1x32x336xbf16> to vector<32x336xbf16>
    %cst_192 = arith.constant dense<0.000000e+00> : vector<7x336xf32>
    %257 = tpu.matmul %254, %256, %cst_192 {dimension_numbers = #tpu.dot_dimension_numbers<[1], [0], [0], [1], [0, 0, 1, 1], [], []>} : vector<7x32xbf16>, vector<32x336xbf16>, vector<7x336xf32> -> vector<7x336xf32>
    %258 = arith.addf %251, %257 : vector<7x336xf32>
    %c1_193 = arith.constant 1 : index
    %c0_194 = arith.constant 0 : index
    %c0_195 = arith.constant 0 : index
    %259 = vector.load %arg0[%c1_193, %c0_194, %c0_195] : memref<8x8x32xbf16, #tpu.memory_space<vmem>>, vector<1x8x32xbf16>
    %260 = vector.shape_cast %259 : vector<1x8x32xbf16> to vector<8x32xbf16>
    %261 = vector.extract_strided_slice %260 {offsets = [1, 0], sizes = [7, 32], strides = [1, 1]} : vector<8x32xbf16> to vector<7x32xbf16>
    %c4_196 = arith.constant 4 : index
    %c0_197 = arith.constant 0 : index
    %c0_198 = arith.constant 0 : index
    %262 = vector.load %arg1[%c4_196, %c0_197, %c0_198] : memref<6x32x336xbf16, #tpu.memory_space<vmem>>, vector<1x32x336xbf16>
    %263 = vector.shape_cast %262 : vector<1x32x336xbf16> to vector<32x336xbf16>
    %cst_199 = arith.constant dense<0.000000e+00> : vector<7x336xf32>
    %264 = tpu.matmul %261, %263, %cst_199 {dimension_numbers = #tpu.dot_dimension_numbers<[1], [0], [0], [1], [0, 0, 1, 1], [], []>} : vector<7x32xbf16>, vector<32x336xbf16>, vector<7x336xf32> -> vector<7x336xf32>
    %265 = arith.addf %258, %264 : vector<7x336xf32>
    %c3_200 = arith.constant 3 : index
    %c0_201 = arith.constant 0 : index
    %c0_202 = arith.constant 0 : index
    %266 = vector.load %arg0[%c3_200, %c0_201, %c0_202] : memref<8x8x32xbf16, #tpu.memory_space<vmem>>, vector<1x8x32xbf16>
    %267 = vector.shape_cast %266 : vector<1x8x32xbf16> to vector<8x32xbf16>
    %268 = vector.extract_strided_slice %267 {offsets = [1, 0], sizes = [7, 32], strides = [1, 1]} : vector<8x32xbf16> to vector<7x32xbf16>
    %c5_203 = arith.constant 5 : index
    %c0_204 = arith.constant 0 : index
    %c0_205 = arith.constant 0 : index
    %269 = vector.load %arg1[%c5_203, %c0_204, %c0_205] : memref<6x32x336xbf16, #tpu.memory_space<vmem>>, vector<1x32x336xbf16>
    %270 = vector.shape_cast %269 : vector<1x32x336xbf16> to vector<32x336xbf16>
    %cst_206 = arith.constant dense<0.000000e+00> : vector<7x336xf32>
    %271 = tpu.matmul %268, %270, %cst_206 {dimension_numbers = #tpu.dot_dimension_numbers<[1], [0], [0], [1], [0, 0, 1, 1], [], []>} : vector<7x32xbf16>, vector<32x336xbf16>, vector<7x336xf32> -> vector<7x336xf32>
    %272 = arith.addf %265, %271 : vector<7x336xf32>
    %c0_207 = arith.constant 0 : index
    %c0_208 = arith.constant 0 : index
    %273 = vector.load %arg2[%c0_207, %c0_208] : memref<1x336xf32, #tpu.memory_space<vmem>>, vector<1x336xf32>
    %274 = vector.broadcast %273 : vector<1x336xf32> to vector<7x336xf32>
    %275 = arith.addf %272, %274 : vector<7x336xf32>
    %cst_209 = arith.constant 0.000000e+00 : f32
    %276 = vector.broadcast %cst_209 : f32 to vector<7x336xf32>
    %277 = arith.subf %276, %275 : vector<7x336xf32>
    %278 = math.exp %277 : vector<7x336xf32>
    %cst_210 = arith.constant 1.000000e+00 : f32
    %279 = vector.broadcast %cst_210 : f32 to vector<7x336xf32>
    %280 = arith.addf %279, %278 : vector<7x336xf32>
    %cst_211 = arith.constant 1.000000e+00 : f32
    %281 = vector.broadcast %cst_211 : f32 to vector<7x336xf32>
    %282 = arith.divf %281, %280 : vector<7x336xf32>
    %283 = vector.extract_strided_slice %282 {offsets = [0, 0], sizes = [7, 84], strides = [1, 1]} : vector<7x336xf32> to vector<7x84xf32>
    %284 = vector.extract_strided_slice %282 {offsets = [0, 84], sizes = [7, 84], strides = [1, 1]} : vector<7x336xf32> to vector<7x84xf32>
    %285 = arith.addf %283, %284 : vector<7x84xf32>
    %286 = vector.extract_strided_slice %282 {offsets = [0, 168], sizes = [7, 84], strides = [1, 1]} : vector<7x336xf32> to vector<7x84xf32>
    %287 = arith.addf %285, %286 : vector<7x84xf32>
    %288 = vector.extract_strided_slice %282 {offsets = [0, 252], sizes = [7, 84], strides = [1, 1]} : vector<7x336xf32> to vector<7x84xf32>
    %289 = arith.addf %287, %288 : vector<7x84xf32>
    %cst_212 = arith.constant 2.500000e-01 : f32
    %290 = vector.broadcast %cst_212 : f32 to vector<7x84xf32>
    %291 = arith.mulf %289, %290 : vector<7x84xf32>
    %292 = arith.truncf %291 : vector<7x84xf32> to vector<7x84xbf16>
    %cst_213 = arith.constant 0.000000e+00 : f32
    %293 = vector.broadcast %cst_213 : f32 to vector<7x336xf32>
    %c5_214 = arith.constant 5 : index
    %c0_215 = arith.constant 0 : index
    %c0_216 = arith.constant 0 : index
    %294 = vector.load %arg0[%c5_214, %c0_215, %c0_216] : memref<8x8x32xbf16, #tpu.memory_space<vmem>>, vector<1x8x32xbf16>
    %295 = vector.shape_cast %294 : vector<1x8x32xbf16> to vector<8x32xbf16>
    %296 = vector.extract_strided_slice %295 {offsets = [0, 0], sizes = [7, 32], strides = [1, 1]} : vector<8x32xbf16> to vector<7x32xbf16>
    %c0_217 = arith.constant 0 : index
    %c0_218 = arith.constant 0 : index
    %c0_219 = arith.constant 0 : index
    %297 = vector.load %arg1[%c0_217, %c0_218, %c0_219] : memref<6x32x336xbf16, #tpu.memory_space<vmem>>, vector<1x32x336xbf16>
    %298 = vector.shape_cast %297 : vector<1x32x336xbf16> to vector<32x336xbf16>
    %cst_220 = arith.constant dense<0.000000e+00> : vector<7x336xf32>
    %299 = tpu.matmul %296, %298, %cst_220 {dimension_numbers = #tpu.dot_dimension_numbers<[1], [0], [0], [1], [0, 0, 1, 1], [], []>} : vector<7x32xbf16>, vector<32x336xbf16>, vector<7x336xf32> -> vector<7x336xf32>
    %300 = arith.addf %293, %299 : vector<7x336xf32>
    %c7_221 = arith.constant 7 : index
    %c0_222 = arith.constant 0 : index
    %c0_223 = arith.constant 0 : index
    %301 = vector.load %arg0[%c7_221, %c0_222, %c0_223] : memref<8x8x32xbf16, #tpu.memory_space<vmem>>, vector<1x8x32xbf16>
    %302 = vector.shape_cast %301 : vector<1x8x32xbf16> to vector<8x32xbf16>
    %303 = vector.extract_strided_slice %302 {offsets = [0, 0], sizes = [7, 32], strides = [1, 1]} : vector<8x32xbf16> to vector<7x32xbf16>
    %c1_224 = arith.constant 1 : index
    %c0_225 = arith.constant 0 : index
    %c0_226 = arith.constant 0 : index
    %304 = vector.load %arg1[%c1_224, %c0_225, %c0_226] : memref<6x32x336xbf16, #tpu.memory_space<vmem>>, vector<1x32x336xbf16>
    %305 = vector.shape_cast %304 : vector<1x32x336xbf16> to vector<32x336xbf16>
    %cst_227 = arith.constant dense<0.000000e+00> : vector<7x336xf32>
    %306 = tpu.matmul %303, %305, %cst_227 {dimension_numbers = #tpu.dot_dimension_numbers<[1], [0], [0], [1], [0, 0, 1, 1], [], []>} : vector<7x32xbf16>, vector<32x336xbf16>, vector<7x336xf32> -> vector<7x336xf32>
    %307 = arith.addf %300, %306 : vector<7x336xf32>
    %c1_228 = arith.constant 1 : index
    %c0_229 = arith.constant 0 : index
    %c0_230 = arith.constant 0 : index
    %308 = vector.load %arg0[%c1_228, %c0_229, %c0_230] : memref<8x8x32xbf16, #tpu.memory_space<vmem>>, vector<1x8x32xbf16>
    %309 = vector.shape_cast %308 : vector<1x8x32xbf16> to vector<8x32xbf16>
    %310 = vector.extract_strided_slice %309 {offsets = [1, 0], sizes = [7, 32], strides = [1, 1]} : vector<8x32xbf16> to vector<7x32xbf16>
    %c2_231 = arith.constant 2 : index
    %c0_232 = arith.constant 0 : index
    %c0_233 = arith.constant 0 : index
    %311 = vector.load %arg1[%c2_231, %c0_232, %c0_233] : memref<6x32x336xbf16, #tpu.memory_space<vmem>>, vector<1x32x336xbf16>
    %312 = vector.shape_cast %311 : vector<1x32x336xbf16> to vector<32x336xbf16>
    %cst_234 = arith.constant dense<0.000000e+00> : vector<7x336xf32>
    %313 = tpu.matmul %310, %312, %cst_234 {dimension_numbers = #tpu.dot_dimension_numbers<[1], [0], [0], [1], [0, 0, 1, 1], [], []>} : vector<7x32xbf16>, vector<32x336xbf16>, vector<7x336xf32> -> vector<7x336xf32>
    %314 = arith.addf %307, %313 : vector<7x336xf32>
    %c3_235 = arith.constant 3 : index
    %c0_236 = arith.constant 0 : index
    %c0_237 = arith.constant 0 : index
    %315 = vector.load %arg0[%c3_235, %c0_236, %c0_237] : memref<8x8x32xbf16, #tpu.memory_space<vmem>>, vector<1x8x32xbf16>
    %316 = vector.shape_cast %315 : vector<1x8x32xbf16> to vector<8x32xbf16>
    %317 = vector.extract_strided_slice %316 {offsets = [1, 0], sizes = [7, 32], strides = [1, 1]} : vector<8x32xbf16> to vector<7x32xbf16>
    %c3_238 = arith.constant 3 : index
    %c0_239 = arith.constant 0 : index
    %c0_240 = arith.constant 0 : index
    %318 = vector.load %arg1[%c3_238, %c0_239, %c0_240] : memref<6x32x336xbf16, #tpu.memory_space<vmem>>, vector<1x32x336xbf16>
    %319 = vector.shape_cast %318 : vector<1x32x336xbf16> to vector<32x336xbf16>
    %cst_241 = arith.constant dense<0.000000e+00> : vector<7x336xf32>
    %320 = tpu.matmul %317, %319, %cst_241 {dimension_numbers = #tpu.dot_dimension_numbers<[1], [0], [0], [1], [0, 0, 1, 1], [], []>} : vector<7x32xbf16>, vector<32x336xbf16>, vector<7x336xf32> -> vector<7x336xf32>
    %321 = arith.addf %314, %320 : vector<7x336xf32>
    %c5_242 = arith.constant 5 : index
    %c0_243 = arith.constant 0 : index
    %c0_244 = arith.constant 0 : index
    %322 = vector.load %arg0[%c5_242, %c0_243, %c0_244] : memref<8x8x32xbf16, #tpu.memory_space<vmem>>, vector<1x8x32xbf16>
    %323 = vector.shape_cast %322 : vector<1x8x32xbf16> to vector<8x32xbf16>
    %324 = vector.extract_strided_slice %323 {offsets = [1, 0], sizes = [7, 32], strides = [1, 1]} : vector<8x32xbf16> to vector<7x32xbf16>
    %c4_245 = arith.constant 4 : index
    %c0_246 = arith.constant 0 : index
    %c0_247 = arith.constant 0 : index
    %325 = vector.load %arg1[%c4_245, %c0_246, %c0_247] : memref<6x32x336xbf16, #tpu.memory_space<vmem>>, vector<1x32x336xbf16>
    %326 = vector.shape_cast %325 : vector<1x32x336xbf16> to vector<32x336xbf16>
    %cst_248 = arith.constant dense<0.000000e+00> : vector<7x336xf32>
    %327 = tpu.matmul %324, %326, %cst_248 {dimension_numbers = #tpu.dot_dimension_numbers<[1], [0], [0], [1], [0, 0, 1, 1], [], []>} : vector<7x32xbf16>, vector<32x336xbf16>, vector<7x336xf32> -> vector<7x336xf32>
    %328 = arith.addf %321, %327 : vector<7x336xf32>
    %c7_249 = arith.constant 7 : index
    %c0_250 = arith.constant 0 : index
    %c0_251 = arith.constant 0 : index
    %329 = vector.load %arg0[%c7_249, %c0_250, %c0_251] : memref<8x8x32xbf16, #tpu.memory_space<vmem>>, vector<1x8x32xbf16>
    %330 = vector.shape_cast %329 : vector<1x8x32xbf16> to vector<8x32xbf16>
    %331 = vector.extract_strided_slice %330 {offsets = [1, 0], sizes = [7, 32], strides = [1, 1]} : vector<8x32xbf16> to vector<7x32xbf16>
    %c5_252 = arith.constant 5 : index
    %c0_253 = arith.constant 0 : index
    %c0_254 = arith.constant 0 : index
    %332 = vector.load %arg1[%c5_252, %c0_253, %c0_254] : memref<6x32x336xbf16, #tpu.memory_space<vmem>>, vector<1x32x336xbf16>
    %333 = vector.shape_cast %332 : vector<1x32x336xbf16> to vector<32x336xbf16>
    %cst_255 = arith.constant dense<0.000000e+00> : vector<7x336xf32>
    %334 = tpu.matmul %331, %333, %cst_255 {dimension_numbers = #tpu.dot_dimension_numbers<[1], [0], [0], [1], [0, 0, 1, 1], [], []>} : vector<7x32xbf16>, vector<32x336xbf16>, vector<7x336xf32> -> vector<7x336xf32>
    %335 = arith.addf %328, %334 : vector<7x336xf32>
    %c0_256 = arith.constant 0 : index
    %c0_257 = arith.constant 0 : index
    %336 = vector.load %arg2[%c0_256, %c0_257] : memref<1x336xf32, #tpu.memory_space<vmem>>, vector<1x336xf32>
    %337 = vector.broadcast %336 : vector<1x336xf32> to vector<7x336xf32>
    %338 = arith.addf %335, %337 : vector<7x336xf32>
    %cst_258 = arith.constant 0.000000e+00 : f32
    %339 = vector.broadcast %cst_258 : f32 to vector<7x336xf32>
    %340 = arith.subf %339, %338 : vector<7x336xf32>
    %341 = math.exp %340 : vector<7x336xf32>
    %cst_259 = arith.constant 1.000000e+00 : f32
    %342 = vector.broadcast %cst_259 : f32 to vector<7x336xf32>
    %343 = arith.addf %342, %341 : vector<7x336xf32>
    %cst_260 = arith.constant 1.000000e+00 : f32
    %344 = vector.broadcast %cst_260 : f32 to vector<7x336xf32>
    %345 = arith.divf %344, %343 : vector<7x336xf32>
    %346 = vector.extract_strided_slice %345 {offsets = [0, 0], sizes = [7, 84], strides = [1, 1]} : vector<7x336xf32> to vector<7x84xf32>
    %347 = vector.extract_strided_slice %345 {offsets = [0, 84], sizes = [7, 84], strides = [1, 1]} : vector<7x336xf32> to vector<7x84xf32>
    %348 = arith.addf %346, %347 : vector<7x84xf32>
    %349 = vector.extract_strided_slice %345 {offsets = [0, 168], sizes = [7, 84], strides = [1, 1]} : vector<7x336xf32> to vector<7x84xf32>
    %350 = arith.addf %348, %349 : vector<7x84xf32>
    %351 = vector.extract_strided_slice %345 {offsets = [0, 252], sizes = [7, 84], strides = [1, 1]} : vector<7x336xf32> to vector<7x84xf32>
    %352 = arith.addf %350, %351 : vector<7x84xf32>
    %cst_261 = arith.constant 2.500000e-01 : f32
    %353 = vector.broadcast %cst_261 : f32 to vector<7x84xf32>
    %354 = arith.mulf %352, %353 : vector<7x84xf32>
    %355 = arith.truncf %354 : vector<7x84xf32> to vector<7x84xbf16>
    %cst_262 = arith.constant 0.000000e+00 : f32
    %356 = vector.broadcast %cst_262 : f32 to vector<5x320xf32>
    %357 = vector.extract_strided_slice %292 {offsets = [0, 0], sizes = [5, 84], strides = [1, 1]} : vector<7x84xbf16> to vector<5x84xbf16>
    %c0_263 = arith.constant 0 : index
    %c0_264 = arith.constant 0 : index
    %c0_265 = arith.constant 0 : index
    %358 = vector.load %arg3[%c0_263, %c0_264, %c0_265] : memref<6x84x320xbf16, #tpu.memory_space<vmem>>, vector<1x84x320xbf16>
    %359 = vector.shape_cast %358 : vector<1x84x320xbf16> to vector<84x320xbf16>
    %cst_266 = arith.constant dense<0.000000e+00> : vector<5x320xf32>
    %360 = tpu.matmul %357, %359, %cst_266 {dimension_numbers = #tpu.dot_dimension_numbers<[1], [0], [0], [1], [0, 0, 1, 1], [], []>} : vector<5x84xbf16>, vector<84x320xbf16>, vector<5x320xf32> -> vector<5x320xf32>
    %361 = arith.addf %356, %360 : vector<5x320xf32>
    %362 = vector.extract_strided_slice %355 {offsets = [0, 0], sizes = [5, 84], strides = [1, 1]} : vector<7x84xbf16> to vector<5x84xbf16>
    %c1_267 = arith.constant 1 : index
    %c0_268 = arith.constant 0 : index
    %c0_269 = arith.constant 0 : index
    %363 = vector.load %arg3[%c1_267, %c0_268, %c0_269] : memref<6x84x320xbf16, #tpu.memory_space<vmem>>, vector<1x84x320xbf16>
    %364 = vector.shape_cast %363 : vector<1x84x320xbf16> to vector<84x320xbf16>
    %cst_270 = arith.constant dense<0.000000e+00> : vector<5x320xf32>
    %365 = tpu.matmul %362, %364, %cst_270 {dimension_numbers = #tpu.dot_dimension_numbers<[1], [0], [0], [1], [0, 0, 1, 1], [], []>} : vector<5x84xbf16>, vector<84x320xbf16>, vector<5x320xf32> -> vector<5x320xf32>
    %366 = arith.addf %361, %365 : vector<5x320xf32>
    %367 = vector.extract_strided_slice %292 {offsets = [1, 0], sizes = [5, 84], strides = [1, 1]} : vector<7x84xbf16> to vector<5x84xbf16>
    %c2_271 = arith.constant 2 : index
    %c0_272 = arith.constant 0 : index
    %c0_273 = arith.constant 0 : index
    %368 = vector.load %arg3[%c2_271, %c0_272, %c0_273] : memref<6x84x320xbf16, #tpu.memory_space<vmem>>, vector<1x84x320xbf16>
    %369 = vector.shape_cast %368 : vector<1x84x320xbf16> to vector<84x320xbf16>
    %cst_274 = arith.constant dense<0.000000e+00> : vector<5x320xf32>
    %370 = tpu.matmul %367, %369, %cst_274 {dimension_numbers = #tpu.dot_dimension_numbers<[1], [0], [0], [1], [0, 0, 1, 1], [], []>} : vector<5x84xbf16>, vector<84x320xbf16>, vector<5x320xf32> -> vector<5x320xf32>
    %371 = arith.addf %366, %370 : vector<5x320xf32>
    %372 = vector.extract_strided_slice %355 {offsets = [1, 0], sizes = [5, 84], strides = [1, 1]} : vector<7x84xbf16> to vector<5x84xbf16>
    %c3_275 = arith.constant 3 : index
    %c0_276 = arith.constant 0 : index
    %c0_277 = arith.constant 0 : index
    %373 = vector.load %arg3[%c3_275, %c0_276, %c0_277] : memref<6x84x320xbf16, #tpu.memory_space<vmem>>, vector<1x84x320xbf16>
    %374 = vector.shape_cast %373 : vector<1x84x320xbf16> to vector<84x320xbf16>
    %cst_278 = arith.constant dense<0.000000e+00> : vector<5x320xf32>
    %375 = tpu.matmul %372, %374, %cst_278 {dimension_numbers = #tpu.dot_dimension_numbers<[1], [0], [0], [1], [0, 0, 1, 1], [], []>} : vector<5x84xbf16>, vector<84x320xbf16>, vector<5x320xf32> -> vector<5x320xf32>
    %376 = arith.addf %371, %375 : vector<5x320xf32>
    %377 = vector.extract_strided_slice %292 {offsets = [2, 0], sizes = [5, 84], strides = [1, 1]} : vector<7x84xbf16> to vector<5x84xbf16>
    %c4_279 = arith.constant 4 : index
    %c0_280 = arith.constant 0 : index
    %c0_281 = arith.constant 0 : index
    %378 = vector.load %arg3[%c4_279, %c0_280, %c0_281] : memref<6x84x320xbf16, #tpu.memory_space<vmem>>, vector<1x84x320xbf16>
    %379 = vector.shape_cast %378 : vector<1x84x320xbf16> to vector<84x320xbf16>
    %cst_282 = arith.constant dense<0.000000e+00> : vector<5x320xf32>
    %380 = tpu.matmul %377, %379, %cst_282 {dimension_numbers = #tpu.dot_dimension_numbers<[1], [0], [0], [1], [0, 0, 1, 1], [], []>} : vector<5x84xbf16>, vector<84x320xbf16>, vector<5x320xf32> -> vector<5x320xf32>
    %381 = arith.addf %376, %380 : vector<5x320xf32>
    %382 = vector.extract_strided_slice %355 {offsets = [2, 0], sizes = [5, 84], strides = [1, 1]} : vector<7x84xbf16> to vector<5x84xbf16>
    %c5_283 = arith.constant 5 : index
    %c0_284 = arith.constant 0 : index
    %c0_285 = arith.constant 0 : index
    %383 = vector.load %arg3[%c5_283, %c0_284, %c0_285] : memref<6x84x320xbf16, #tpu.memory_space<vmem>>, vector<1x84x320xbf16>
    %384 = vector.shape_cast %383 : vector<1x84x320xbf16> to vector<84x320xbf16>
    %cst_286 = arith.constant dense<0.000000e+00> : vector<5x320xf32>
    %385 = tpu.matmul %382, %384, %cst_286 {dimension_numbers = #tpu.dot_dimension_numbers<[1], [0], [0], [1], [0, 0, 1, 1], [], []>} : vector<5x84xbf16>, vector<84x320xbf16>, vector<5x320xf32> -> vector<5x320xf32>
    %386 = arith.addf %381, %385 : vector<5x320xf32>
    %c0_287 = arith.constant 0 : index
    %c0_288 = arith.constant 0 : index
    %387 = vector.load %arg4[%c0_287, %c0_288] : memref<1x320xf32, #tpu.memory_space<vmem>>, vector<1x320xf32>
    %388 = vector.broadcast %387 : vector<1x320xf32> to vector<5x320xf32>
    %389 = arith.addf %386, %388 : vector<5x320xf32>
    %cst_289 = arith.constant 0.000000e+00 : f32
    %390 = vector.broadcast %cst_289 : f32 to vector<5x320xf32>
    %391 = arith.subf %390, %389 : vector<5x320xf32>
    %392 = math.exp %391 : vector<5x320xf32>
    %cst_290 = arith.constant 1.000000e+00 : f32
    %393 = vector.broadcast %cst_290 : f32 to vector<5x320xf32>
    %394 = arith.addf %393, %392 : vector<5x320xf32>
    %cst_291 = arith.constant 1.000000e+00 : f32
    %395 = vector.broadcast %cst_291 : f32 to vector<5x320xf32>
    %396 = arith.divf %395, %394 : vector<5x320xf32>
    %397 = vector.extract_strided_slice %396 {offsets = [0, 0], sizes = [5, 80], strides = [1, 1]} : vector<5x320xf32> to vector<5x80xf32>
    %398 = vector.extract_strided_slice %396 {offsets = [0, 80], sizes = [5, 80], strides = [1, 1]} : vector<5x320xf32> to vector<5x80xf32>
    %399 = arith.addf %397, %398 : vector<5x80xf32>
    %400 = vector.extract_strided_slice %396 {offsets = [0, 160], sizes = [5, 80], strides = [1, 1]} : vector<5x320xf32> to vector<5x80xf32>
    %401 = arith.addf %399, %400 : vector<5x80xf32>
    %402 = vector.extract_strided_slice %396 {offsets = [0, 240], sizes = [5, 80], strides = [1, 1]} : vector<5x320xf32> to vector<5x80xf32>
    %403 = arith.addf %401, %402 : vector<5x80xf32>
    %cst_292 = arith.constant 2.500000e-01 : f32
    %404 = vector.broadcast %cst_292 : f32 to vector<5x80xf32>
    %405 = arith.mulf %403, %404 : vector<5x80xf32>
    %c1_293 = arith.constant 1 : index
    %c0_294 = arith.constant 0 : index
    %c0_295 = arith.constant 0 : index
    %406 = vector.load %arg12[%c1_293, %c0_294, %c0_295] : memref<2x5x80xf32, #tpu.memory_space<vmem>>, vector<1x5x80xf32>
    %407 = vector.shape_cast %406 : vector<1x5x80xf32> to vector<5x80xf32>
    %408 = vector.shape_cast %405 : vector<5x80xf32> to vector<1x5x80xf32>
    tpu.vector_store %arg12[%c1_293, %c0_294, %c0_295], %408 {strides = array<i32>} : memref<2x5x80xf32, #tpu.memory_space<vmem>>, vector<1x5x80xf32>,
    %cst_296 = arith.constant 0.000000e+00 : f32
    %409 = vector.broadcast %cst_296 : f32 to vector<1x120xf32>
    %410 = vector.extract_strided_slice %405 {offsets = [0, 0], sizes = [1, 80], strides = [1, 1]} : vector<5x80xf32> to vector<1x80xf32>
    %c0_297 = arith.constant 0 : index
    %c0_298 = arith.constant 0 : index
    %c0_299 = arith.constant 0 : index
    %411 = vector.load %arg5[%c0_297, %c0_298, %c0_299] : memref<5x80x120xf32, #tpu.memory_space<vmem>>, vector<1x80x120xf32>
    %412 = vector.shape_cast %411 : vector<1x80x120xf32> to vector<80x120xf32>
    %cst_300 = arith.constant dense<0.000000e+00> : vector<1x120xf32>
    %413 = tpu.matmul %410, %412, %cst_300 {dimension_numbers = #tpu.dot_dimension_numbers<[1], [0], [0], [1], [0, 0, 1, 1], [], []>} : vector<1x80xf32>, vector<80x120xf32>, vector<1x120xf32> -> vector<1x120xf32>
    %414 = arith.addf %409, %413 : vector<1x120xf32>
    %415 = vector.extract_strided_slice %405 {offsets = [1, 0], sizes = [1, 80], strides = [1, 1]} : vector<5x80xf32> to vector<1x80xf32>
    %c1_301 = arith.constant 1 : index
    %c0_302 = arith.constant 0 : index
    %c0_303 = arith.constant 0 : index
    %416 = vector.load %arg5[%c1_301, %c0_302, %c0_303] : memref<5x80x120xf32, #tpu.memory_space<vmem>>, vector<1x80x120xf32>
    %417 = vector.shape_cast %416 : vector<1x80x120xf32> to vector<80x120xf32>
    %cst_304 = arith.constant dense<0.000000e+00> : vector<1x120xf32>
    %418 = tpu.matmul %415, %417, %cst_304 {dimension_numbers = #tpu.dot_dimension_numbers<[1], [0], [0], [1], [0, 0, 1, 1], [], []>} : vector<1x80xf32>, vector<80x120xf32>, vector<1x120xf32> -> vector<1x120xf32>
    %419 = arith.addf %414, %418 : vector<1x120xf32>
    %420 = vector.extract_strided_slice %405 {offsets = [2, 0], sizes = [1, 80], strides = [1, 1]} : vector<5x80xf32> to vector<1x80xf32>
    %c2_305 = arith.constant 2 : index
    %c0_306 = arith.constant 0 : index
    %c0_307 = arith.constant 0 : index
    %421 = vector.load %arg5[%c2_305, %c0_306, %c0_307] : memref<5x80x120xf32, #tpu.memory_space<vmem>>, vector<1x80x120xf32>
    %422 = vector.shape_cast %421 : vector<1x80x120xf32> to vector<80x120xf32>
    %cst_308 = arith.constant dense<0.000000e+00> : vector<1x120xf32>
    %423 = tpu.matmul %420, %422, %cst_308 {dimension_numbers = #tpu.dot_dimension_numbers<[1], [0], [0], [1], [0, 0, 1, 1], [], []>} : vector<1x80xf32>, vector<80x120xf32>, vector<1x120xf32> -> vector<1x120xf32>
    %424 = arith.addf %419, %423 : vector<1x120xf32>
    %425 = vector.extract_strided_slice %405 {offsets = [3, 0], sizes = [1, 80], strides = [1, 1]} : vector<5x80xf32> to vector<1x80xf32>
    %c3_309 = arith.constant 3 : index
    %c0_310 = arith.constant 0 : index
    %c0_311 = arith.constant 0 : index
    %426 = vector.load %arg5[%c3_309, %c0_310, %c0_311] : memref<5x80x120xf32, #tpu.memory_space<vmem>>, vector<1x80x120xf32>
    %427 = vector.shape_cast %426 : vector<1x80x120xf32> to vector<80x120xf32>
    %cst_312 = arith.constant dense<0.000000e+00> : vector<1x120xf32>
    %428 = tpu.matmul %425, %427, %cst_312 {dimension_numbers = #tpu.dot_dimension_numbers<[1], [0], [0], [1], [0, 0, 1, 1], [], []>} : vector<1x80xf32>, vector<80x120xf32>, vector<1x120xf32> -> vector<1x120xf32>
    %429 = arith.addf %424, %428 : vector<1x120xf32>
    %430 = vector.extract_strided_slice %405 {offsets = [4, 0], sizes = [1, 80], strides = [1, 1]} : vector<5x80xf32> to vector<1x80xf32>
    %c4_313 = arith.constant 4 : index
    %c0_314 = arith.constant 0 : index
    %c0_315 = arith.constant 0 : index
    %431 = vector.load %arg5[%c4_313, %c0_314, %c0_315] : memref<5x80x120xf32, #tpu.memory_space<vmem>>, vector<1x80x120xf32>
    %432 = vector.shape_cast %431 : vector<1x80x120xf32> to vector<80x120xf32>
    %cst_316 = arith.constant dense<0.000000e+00> : vector<1x120xf32>
    %433 = tpu.matmul %430, %432, %cst_316 {dimension_numbers = #tpu.dot_dimension_numbers<[1], [0], [0], [1], [0, 0, 1, 1], [], []>} : vector<1x80xf32>, vector<80x120xf32>, vector<1x120xf32> -> vector<1x120xf32>
    %434 = arith.addf %429, %433 : vector<1x120xf32>
    %c0_317 = arith.constant 0 : index
    %c0_318 = arith.constant 0 : index
    %435 = vector.load %arg6[%c0_317, %c0_318] : memref<1x120xf32, #tpu.memory_space<vmem>>, vector<1x120xf32>
    %436 = arith.addf %434, %435 : vector<1x120xf32>
    %cst_319 = arith.constant 0.000000e+00 : f32
    %437 = vector.broadcast %cst_319 : f32 to vector<1x120xf32>
    %438 = arith.subf %437, %436 : vector<1x120xf32>
    %439 = math.exp %438 : vector<1x120xf32>
    %cst_320 = arith.constant 1.000000e+00 : f32
    %440 = vector.broadcast %cst_320 : f32 to vector<1x120xf32>
    %441 = arith.addf %440, %439 : vector<1x120xf32>
    %cst_321 = arith.constant 1.000000e+00 : f32
    %442 = vector.broadcast %cst_321 : f32 to vector<1x120xf32>
    %443 = arith.divf %442, %441 : vector<1x120xf32>
    %c0_322 = arith.constant 0 : index
    %c0_323 = arith.constant 0 : index
    %444 = vector.load %arg7[%c0_322, %c0_323] : memref<120x84xf32, #tpu.memory_space<vmem>>, vector<120x84xf32>
    %cst_324 = arith.constant dense<0.000000e+00> : vector<1x84xf32>
    %445 = tpu.matmul %443, %444, %cst_324 {dimension_numbers = #tpu.dot_dimension_numbers<[1], [0], [0], [1], [0, 0, 1, 1], [], []>} : vector<1x120xf32>, vector<120x84xf32>, vector<1x84xf32> -> vector<1x84xf32>
    %c0_325 = arith.constant 0 : index
    %c0_326 = arith.constant 0 : index
    %446 = vector.load %arg8[%c0_325, %c0_326] : memref<1x84xf32, #tpu.memory_space<vmem>>, vector<1x84xf32>
    %447 = arith.addf %445, %446 : vector<1x84xf32>
    %cst_327 = arith.constant 0.000000e+00 : f32
    %448 = vector.broadcast %cst_327 : f32 to vector<1x84xf32>
    %449 = arith.subf %448, %447 : vector<1x84xf32>
    %450 = math.exp %449 : vector<1x84xf32>
    %cst_328 = arith.constant 1.000000e+00 : f32
    %451 = vector.broadcast %cst_328 : f32 to vector<1x84xf32>
    %452 = arith.addf %451, %450 : vector<1x84xf32>
    %cst_329 = arith.constant 1.000000e+00 : f32
    %453 = vector.broadcast %cst_329 : f32 to vector<1x84xf32>
    %454 = arith.divf %453, %452 : vector<1x84xf32>
    %c0_330 = arith.constant 0 : index
    %c0_331 = arith.constant 0 : index
    %455 = vector.load %arg9[%c0_330, %c0_331] : memref<84x10xf32, #tpu.memory_space<vmem>>, vector<84x10xf32>
    %cst_332 = arith.constant dense<0.000000e+00> : vector<1x10xf32>
    %456 = tpu.matmul %454, %455, %cst_332 {dimension_numbers = #tpu.dot_dimension_numbers<[1], [0], [0], [1], [0, 0, 1, 1], [], []>} : vector<1x84xf32>, vector<84x10xf32>, vector<1x10xf32> -> vector<1x10xf32>
    %c0_333 = arith.constant 0 : index
    %c0_334 = arith.constant 0 : index
    %457 = vector.load %arg10[%c0_333, %c0_334] : memref<1x10xf32, #tpu.memory_space<vmem>>, vector<1x10xf32>
    %458 = arith.addf %456, %457 : vector<1x10xf32>
    %c1_335 = arith.constant 1 : index
    %c0_336 = arith.constant 0 : index
    %459 = vector.load %arg11[%c1_335, %c0_336] : memref<2x10xf32, #tpu.memory_space<vmem>>, vector<1x10xf32>
    tpu.vector_store %arg11[%c1_335, %c0_336], %458 {strides = array<i32>} : memref<2x10xf32, #tpu.memory_space<vmem>>, vector<1x10xf32>,
    return
  }
}

</mosaic_0001>

<llo_original>
// kernel: lenet_forward.1
$region0: #{lenet_forward.1}
  #allocation0 [shape = 'u32[]', space=smem, size = 0x4, offset = 0x4, fixed_abs, tag = 'smem constant byte address 0x4 - core index']
  #allocation1 [shape = 'u32[72,128]{1,0:T(1,128)}', space=vmem, size = 0x9000, scoped, tag = 'internal scratch']
  %s0 = inlined_call_operand.vmem [shape: bf16[8,8,32], index: 0, kind: input, shape index: {}]
  %s1 = inlined_call_operand.vmem [shape: bf16[6,32,336], index: 1, kind: input, shape index: {}]
  %s2 = inlined_call_operand.vmem [shape: f32[1,336], index: 2, kind: input, shape index: {}]
  %s3 = inlined_call_operand.hbm [shape: bf16[6,84,320], index: 3, kind: input, shape index: {}]
  %s4 = inlined_call_operand.vmem [shape: f32[1,320], index: 4, kind: input, shape index: {}]
  %s5 = inlined_call_operand.vmem [shape: f32[5,80,120], index: 5, kind: input, shape index: {}]
  %s6 = inlined_call_operand.vmem [shape: f32[1,120], index: 6, kind: input, shape index: {}]
  %s7 = inlined_call_operand.vmem [shape: f32[120,84], index: 7, kind: input, shape index: {}]
  %s8 = inlined_call_operand.vmem [shape: f32[1,84], index: 8, kind: input, shape index: {}]
  %s9 = inlined_call_operand.vmem [shape: f32[84,10], index: 9, kind: input, shape index: {}]
  %s10 = inlined_call_operand.vmem [shape: f32[1,10], index: 10, kind: input, shape index: {}]
  %s11 = inlined_call_operand.hbm [shape: f32[2,10], index: 11, kind: output, shape index: {0}]
  %s12 = inlined_call_operand.vmem [shape: f32[2,5,80], index: 12, kind: output, shape index: {1}]
  %13 = xla_tuple %s11, %s12
  %s14 = sld [smem:[#allocation0]]
  $region66: #{lenet_forward.1} parent=0
    _
  %s16 = ssub.s32 1, %s14
  %s17 = scalar_select 0, %s16, %s14
  $region1: #{lenet_forward.1} parent=0
    #allocation2 [shape = 'u8[405504]{0}', space=vmem, size = 0x63000, scoped, tag = 'input window, operand 3, single buffered']
    #allocation3 [shape = 's32[1]{0}', space=sflag, size = 0x4, scoped, tag = 'scoped memory for lenet_forward.1']
    #allocation4 [shape = 's32[1]{0}', space=sflag, size = 0x4, scoped, tag = 'scoped memory for lenet_forward.1']
    #allocation5 [shape = 'u8[1024]{0}', space=vmem, size = 0x400, scoped, tag = 'output window, operand 0, single buffered']
    %18 = vsyncpa [#allocation3], 0
    %19 = vsyncpa [#allocation4], 0
    // Predicated region
    $region2: #{lenet_forward.1} parent=1 // pred_check
      _
    $region3: #{lenet_forward.1} parent=1 // pred_check_branch
      %21 = sbr.rel (0) target = $region5
    $region4: #{lenet_forward.1} parent=1 // pred_region
      _
    $region5: #{lenet_forward.1} parent=1 // pred_fallthru
      _
    // Predicated region
    $region6: #{lenet_forward.1} parent=1 // pred_check
      _
    $region7: #{lenet_forward.1} parent=1 // pred_check_branch
      %23 = sbr.rel (0) target = $region9
    $region8: #{lenet_forward.1} parent=1 // pred_region
      _
    $region9: #{lenet_forward.1} parent=1 // pred_fallthru
      _
    // Predicated region
    $region10: #{lenet_forward.1} parent=1 // pred_check
      _
    $region11: #{lenet_forward.1} parent=1 // pred_check_branch
      %25 = sbr.rel (0) target = $region13
    $region12: #{lenet_forward.1} parent=1 // pred_region
      _
    $region13: #{lenet_forward.1} parent=1 // pred_fallthru
      _
    // Predicated region
    $region14: #{lenet_forward.1} parent=1 // pred_check
      _
    $region15: #{lenet_forward.1} parent=1 // pred_check_branch
      %27 = sbr.rel (0) target = $region17
    $region16: #{lenet_forward.1} parent=1 // pred_region
      %29 = vsyncadd [#allocation3], 0
      %s30 = sshll.u32 %s3, 4
      %s31 = int_to_ptr.hbm [resolvable:$true] %s30
      %s32 = sshll.u32 [#allocation2], 4
      %s33 = int_to_ptr.vmem [resolvable:$true] %s32
      %38 = dma.hbm_to_vmem [thread:$0]  %s31, 12672, %s33, [#allocation3], 192, 192, 12
    $region17: #{lenet_forward.1} parent=1 // pred_fallthru
      _
    // Predicated region
    $region18: #{lenet_forward.1} parent=1 // pred_check
      _
    $region19: #{lenet_forward.1} parent=1 // pred_check_branch
      %40 = sbr.rel (0) target = $region21
    $region20: #{lenet_forward.1} parent=1 // pred_region
      _
    $region21: #{lenet_forward.1} parent=1 // pred_fallthru
      _
    // Predicated region
    $region22: #{lenet_forward.1} parent=1 // pred_check
      _
    $region23: #{lenet_forward.1} parent=1 // pred_check_branch
      %42 = sbr.rel (0) target = $region25
    $region24: #{lenet_forward.1} parent=1 // pred_region
      _
    $region25: #{lenet_forward.1} parent=1 // pred_fallthru
      _
    // Predicated region
    $region26: #{lenet_forward.1} parent=1 // pred_check
      _
    $region27: #{lenet_forward.1} parent=1 // pred_check_branch
      %44 = sbr.rel (0) target = $region29
    $region28: #{lenet_forward.1} parent=1 // pred_region
      _
    $region29: #{lenet_forward.1} parent=1 // pred_fallthru
      _
    // Predicated region
    $region30: #{lenet_forward.1} parent=1 // pred_check
      _
    $region31: #{lenet_forward.1} parent=1 // pred_check_branch
      %46 = sbr.rel (0) target = $region33
    $region32: #{lenet_forward.1} parent=1 // pred_region
      _
    $region33: #{lenet_forward.1} parent=1 // pred_fallthru
      _
    // Predicated region
    $region34: #{lenet_forward.1} parent=1 // pred_check
      _
    $region35: #{lenet_forward.1} parent=1 // pred_check_branch
      %48 = sbr.rel (0) target = $region37
    $region36: #{lenet_forward.1} parent=1 // pred_region
      _
    $region37: #{lenet_forward.1} parent=1 // pred_fallthru
      _
    // Predicated region
    $region38: #{lenet_forward.1} parent=1 // pred_check
      _
    $region39: #{lenet_forward.1} parent=1 // pred_check_branch
      %50 = sbr.rel (0) target = $region41
    $region40: #{lenet_forward.1} parent=1 // pred_region
      _
    $region41: #{lenet_forward.1} parent=1 // pred_fallthru
      _
    // Predicated region
    $region42: #{lenet_forward.1} parent=1 // pred_check
      _
    $region43: #{lenet_forward.1} parent=1 // pred_check_branch
      %52 = sbr.rel (0) target = $region45
    $region44: #{lenet_forward.1} parent=1 // pred_region
      _
    $region45: #{lenet_forward.1} parent=1 // pred_fallthru
      _
    // Predicated region
    $region46: #{lenet_forward.1} parent=1 // pred_check
      _
    $region47: #{lenet_forward.1} parent=1 // pred_check_branch
      %54 = sbr.rel (0) target = $region49
    $region48: #{lenet_forward.1} parent=1 // pred_region
      %56 = dma.done [#allocation3], 12672
    $region49: #{lenet_forward.1} parent=1 // pred_fallthru
      _
    %v58 = vld [vmem:[%s0] sm:$0xf]
    %v59 = vld [vmem:[%s1] sm:$0xff]
    %v60 = vld [vmem:[%s1 + $0x8] sm:$0xf]
    %v61 = vld [vmem:[%s1 + $0xc] sm:$0xff]
    %v62 = vld [vmem:[%s1 + $0x14] sm:$0xf]
    %v63 = vld [vmem:[%s1 + $0x18] sm:$0xff]
    %v64 = vld [vmem:[%s1 + $0x20] sm:$0xf]
    %v65 = vld [vmem:[%s1 + $0x24] sm:$0xff]
    %v66 = vld [vmem:[%s1 + $0x2c] sm:$0xf]
    %s67 = scalar_lea.vmem %s0, 8
    %v68 = vld [vmem:[%s67] sm:$0xf]
    %s69 = scalar_lea.vmem %s1, 48
    %v70 = vld [vmem:[%s69] sm:$0xff]
    %v71 = vld [vmem:[%s69 + $0x8] sm:$0xf]
    %v72 = vld [vmem:[%s69 + $0xc] sm:$0xff]
    %v73 = vld [vmem:[%s69 + $0x14] sm:$0xf]
    %v74 = vld [vmem:[%s69 + $0x18] sm:$0xff]
    %v75 = vld [vmem:[%s69 + $0x20] sm:$0xf]
    %v76 = vld [vmem:[%s69 + $0x24] sm:$0xff]
    %v77 = vld [vmem:[%s69 + $0x2c] sm:$0xf]
    %v86 = vunpack.c.l.b16 %v70
    %v87 = vunpack.c.h.b16 %v70
    %v88 = vunpack.c.l.b16 %v71
    %v89 = vunpack.c.l.b16 %v72
    %v90 = vunpack.c.h.b16 %v72
    %v91 = vunpack.c.l.b16 %v73
    %v92 = vunpack.c.l.b16 %v74
    %v93 = vunpack.c.h.b16 %v74
    %v94 = vunpack.c.l.b16 %v75
    %v95 = vunpack.c.l.b16 %v76
    %v96 = vunpack.c.h.b16 %v76
    %v97 = vunpack.c.l.b16 %v77
    %v98 = vpack.c.b16 %v89, %v86
    %v99 = vpack.c.b16 %v90, %v87
    %v100 = vpack.c.b16 %v91, %v88
    %v101 = vpack.c.b16 %v95, %v92
    %v102 = vpack.c.b16 %v96, %v93
    %v103 = vpack.c.b16 %v97, %v94
    %vm110 = vcmask 261120
    %v112 = vsel %vm110, %v68, 0
    %114 = vmatpush.bf16.msra.mxu0 0
    %115 = vmatpush.bf16.msra.mxu0 0
    %116 = vmatpush.bf16.msra.mxu0 0
    %117 = vmatpush.bf16.msra.mxu0 0
    %118 = vmatpush.bf16.msra.mxu0 0
    %119 = vmatpush.bf16.msra.mxu0 0
    %120 = vmatpush.bf16.msra.mxu0 %v101
    %121 = vmatpush.bf16.msra.mxu0 %v98
    %122 = vmatmul.bf16.gmra.mxu0 %v112
    %v123 = vpop.f32.mrf.mxu0
    %v124 = vadd.f32 0.0, %v123
    %v125 = vpop.f32.mrf.mxu0
    %126 = vdwg.mxu0
    %127 = vmatpush.bf16.msra.mxu0 0
    %128 = vmatpush.bf16.msra.mxu0 0
    %129 = vmatpush.bf16.msra.mxu0 0
    %130 = vmatpush.bf16.msra.mxu0 0
    %131 = vmatpush.bf16.msra.mxu0 0
    %132 = vmatpush.bf16.msra.mxu0 0
    %133 = vmatpush.bf16.msra.mxu0 %v102
    %134 = vmatpush.bf16.msra.mxu0 %v99
    %135 = vmatmul.bf16.gmra.mxu0 %v112
    %v136 = vpop.f32.mrf.mxu0
    %v137 = vadd.f32 0.0, %v136
    %v138 = vpop.f32.mrf.mxu0
    %139 = vdwg.mxu0
    %140 = vmatpush.bf16.msra.mxu0 0
    %141 = vmatpush.bf16.msra.mxu0 0
    %142 = vmatpush.bf16.msra.mxu0 0
    %143 = vmatpush.bf16.msra.mxu0 0
    %144 = vmatpush.bf16.msra.mxu0 0
    %145 = vmatpush.bf16.msra.mxu0 0
    %146 = vmatpush.bf16.msra.mxu0 %v103
    %147 = vmatpush.bf16.msra.mxu0 %v100
    %148 = vmatmul.bf16.gmra.mxu0 %v112
    %v149 = vpop.f32.mrf.mxu0
    %v150 = vadd.f32 0.0, %v149
    %v151 = vpop.f32.mrf.mxu0
    %152 = vdwg.mxu0
    %v161 = vunpack.c.l.b16 %v59
    %v162 = vunpack.c.h.b16 %v59
    %v163 = vunpack.c.l.b16 %v60
    %v164 = vunpack.c.l.b16 %v61
    %v165 = vunpack.c.h.b16 %v61
    %v166 = vunpack.c.l.b16 %v62
    %v167 = vunpack.c.l.b16 %v63
    %v168 = vunpack.c.h.b16 %v63
    %v169 = vunpack.c.l.b16 %v64
    %v170 = vunpack.c.l.b16 %v65
    %v171 = vunpack.c.h.b16 %v65
    %v172 = vunpack.c.l.b16 %v66
    %v173 = vpack.c.b16 %v164, %v161
    %v174 = vpack.c.b16 %v165, %v162
    %v175 = vpack.c.b16 %v166, %v163
    %v176 = vpack.c.b16 %v170, %v167
    %v177 = vpack.c.b16 %v171, %v168
    %v178 = vpack.c.b16 %v172, %v169
    %v186 = vsel %vm110, %v58, 0
    %188 = vmatpush.bf16.msra.mxu0 0
    %189 = vmatpush.bf16.msra.mxu0 0
    %190 = vmatpush.bf16.msra.mxu0 0
    %191 = vmatpush.bf16.msra.mxu0 0
    %192 = vmatpush.bf16.msra.mxu0 0
    %193 = vmatpush.bf16.msra.mxu0 0
    %194 = vmatpush.bf16.msra.mxu0 %v176
    %195 = vmatpush.bf16.msra.mxu0 %v173
    %196 = vmatmul.bf16.gmra.mxu0 %v186
    %v197 = vpop.f32.mrf.mxu0
    %v198 = vadd.f32 %v124, %v197
    %v199 = vpop.f32.mrf.mxu0
    %200 = vdwg.mxu0
    %201 = vmatpush.bf16.msra.mxu0 0
    %202 = vmatpush.bf16.msra.mxu0 0
    %203 = vmatpush.bf16.msra.mxu0 0
    %204 = vmatpush.bf16.msra.mxu0 0
    %205 = vmatpush.bf16.msra.mxu0 0
    %206 = vmatpush.bf16.msra.mxu0 0
    %207 = vmatpush.bf16.msra.mxu0 %v177
    %208 = vmatpush.bf16.msra.mxu0 %v174
    %209 = vmatmul.bf16.gmra.mxu0 %v186
    %v210 = vpop.f32.mrf.mxu0
    %v211 = vadd.f32 %v137, %v210
    %v212 = vpop.f32.mrf.mxu0
    %213 = vdwg.mxu0
    %214 = vmatpush.bf16.msra.mxu0 0
    %215 = vmatpush.bf16.msra.mxu0 0
    %216 = vmatpush.bf16.msra.mxu0 0
    %217 = vmatpush.bf16.msra.mxu0 0
    %218 = vmatpush.bf16.msra.mxu0 0
    %219 = vmatpush.bf16.msra.mxu0 0
    %220 = vmatpush.bf16.msra.mxu0 %v178
    %221 = vmatpush.bf16.msra.mxu0 %v175
    %222 = vmatmul.bf16.gmra.mxu0 %v186
    %v223 = vpop.f32.mrf.mxu0
    %v224 = vadd.f32 %v150, %v223
    %v225 = vpop.f32.mrf.mxu0
    %226 = vdwg.mxu0
    %s227 = scalar_lea.vmem %s0, 16
    %v228 = vld [vmem:[%s227] sm:$0xf]
    %s229 = scalar_lea.vmem %s1, 96
    %v230 = vld [vmem:[%s229] sm:$0xff]
    %v231 = vld [vmem:[%s229 + $0x8] sm:$0xf]
    %v232 = vld [vmem:[%s229 + $0xc] sm:$0xff]
    %v233 = vld [vmem:[%s229 + $0x14] sm:$0xf]
    %v234 = vld [vmem:[%s229 + $0x18] sm:$0xff]
    %v235 = vld [vmem:[%s229 + $0x20] sm:$0xf]
    %v236 = vld [vmem:[%s229 + $0x24] sm:$0xff]
    %v237 = vld [vmem:[%s229 + $0x2c] sm:$0xf]
    %v246 = vunpack.c.l.b16 %v230
    %v247 = vunpack.c.h.b16 %v230
    %v248 = vunpack.c.l.b16 %v231
    %v249 = vunpack.c.l.b16 %v232
    %v250 = vunpack.c.h.b16 %v232
    %v251 = vunpack.c.l.b16 %v233
    %v252 = vunpack.c.l.b16 %v234
    %v253 = vunpack.c.h.b16 %v234
    %v254 = vunpack.c.l.b16 %v235
    %v255 = vunpack.c.l.b16 %v236
    %v256 = vunpack.c.h.b16 %v236
    %v257 = vunpack.c.l.b16 %v237
    %v258 = vpack.c.b16 %v249, %v246
    %v259 = vpack.c.b16 %v250, %v247
    %v260 = vpack.c.b16 %v251, %v248
    %v261 = vpack.c.b16 %v255, %v252
    %v262 = vpack.c.b16 %v256, %v253
    %v263 = vpack.c.b16 %v257, %v254
    %v271 = vsel %vm110, %v228, 0
    %273 = vmatpush.bf16.msra.mxu0 0
    %274 = vmatpush.bf16.msra.mxu0 0
    %275 = vmatpush.bf16.msra.mxu0 0
    %276 = vmatpush.bf16.msra.mxu0 0
    %277 = vmatpush.bf16.msra.mxu0 0
    %278 = vmatpush.bf16.msra.mxu0 0
    %279 = vmatpush.bf16.msra.mxu0 %v261
    %280 = vmatpush.bf16.msra.mxu0 %v258
    %281 = vmatmul.bf16.gmra.mxu0 %v271
    %v282 = vpop.f32.mrf.mxu0
    %v283 = vadd.f32 0.0, %v282
    %v284 = vpop.f32.mrf.mxu0
    %285 = vdwg.mxu0
    %286 = vmatpush.bf16.msra.mxu0 0
    %287 = vmatpush.bf16.msra.mxu0 0
    %288 = vmatpush.bf16.msra.mxu0 0
    %289 = vmatpush.bf16.msra.mxu0 0
    %290 = vmatpush.bf16.msra.mxu0 0
    %291 = vmatpush.bf16.msra.mxu0 0
    %292 = vmatpush.bf16.msra.mxu0 %v262
    %293 = vmatpush.bf16.msra.mxu0 %v259
    %294 = vmatmul.bf16.gmra.mxu0 %v271
    %v295 = vpop.f32.mrf.mxu0
    %v296 = vadd.f32 0.0, %v295
    %v297 = vpop.f32.mrf.mxu0
    %298 = vdwg.mxu0
    %299 = vmatpush.bf16.msra.mxu0 0
    %300 = vmatpush.bf16.msra.mxu0 0
    %301 = vmatpush.bf16.msra.mxu0 0
    %302 = vmatpush.bf16.msra.mxu0 0
    %303 = vmatpush.bf16.msra.mxu0 0
    %304 = vmatpush.bf16.msra.mxu0 0
    %305 = vmatpush.bf16.msra.mxu0 %v263
    %306 = vmatpush.bf16.msra.mxu0 %v260
    %307 = vmatmul.bf16.gmra.mxu0 %v271
    %v308 = vpop.f32.mrf.mxu0
    %v309 = vadd.f32 0.0, %v308
    %v310 = vpop.f32.mrf.mxu0
    %311 = vdwg.mxu0
    %v312 = vadd.f32 %v198, %v283
    %v313 = vadd.f32 %v211, %v296
    %v314 = vadd.f32 %v224, %v309
    %s315 = scalar_lea.vmem %s0, 24
    %v316 = vld [vmem:[%s315] sm:$0xf]
    %s317 = scalar_lea.vmem %s1, 144
    %v318 = vld [vmem:[%s317] sm:$0xff]
    %v319 = vld [vmem:[%s317 + $0x8] sm:$0xf]
    %v320 = vld [vmem:[%s317 + $0xc] sm:$0xff]
    %v321 = vld [vmem:[%s317 + $0x14] sm:$0xf]
    %v322 = vld [vmem:[%s317 + $0x18] sm:$0xff]
    %v323 = vld [vmem:[%s317 + $0x20] sm:$0xf]
    %v324 = vld [vmem:[%s317 + $0x24] sm:$0xff]
    %v325 = vld [vmem:[%s317 + $0x2c] sm:$0xf]
    %v334 = vunpack.c.l.b16 %v318
    %v335 = vunpack.c.h.b16 %v318
    %v336 = vunpack.c.l.b16 %v319
    %v337 = vunpack.c.l.b16 %v320
    %v338 = vunpack.c.h.b16 %v320
    %v339 = vunpack.c.l.b16 %v321
    %v340 = vunpack.c.l.b16 %v322
    %v341 = vunpack.c.h.b16 %v322
    %v342 = vunpack.c.l.b16 %v323
    %v343 = vunpack.c.l.b16 %v324
    %v344 = vunpack.c.h.b16 %v324
    %v345 = vunpack.c.l.b16 %v325
    %v346 = vpack.c.b16 %v337, %v334
    %v347 = vpack.c.b16 %v338, %v335
    %v348 = vpack.c.b16 %v339, %v336
    %v349 = vpack.c.b16 %v343, %v340
    %v350 = vpack.c.b16 %v344, %v341
    %v351 = vpack.c.b16 %v345, %v342
    %v359 = vsel %vm110, %v316, 0
    %361 = vmatpush.bf16.msra.mxu0 0
    %362 = vmatpush.bf16.msra.mxu0 0
    %363 = vmatpush.bf16.msra.mxu0 0
    %364 = vmatpush.bf16.msra.mxu0 0
    %365 = vmatpush.bf16.msra.mxu0 0
    %366 = vmatpush.bf16.msra.mxu0 0
    %367 = vmatpush.bf16.msra.mxu0 %v349
    %368 = vmatpush.bf16.msra.mxu0 %v346
    %369 = vmatmul.bf16.gmra.mxu0 %v359
    %v370 = vpop.f32.mrf.mxu0
    %v371 = vadd.f32 0.0, %v370
    %v372 = vpop.f32.mrf.mxu0
    %373 = vdwg.mxu0
    %374 = vmatpush.bf16.msra.mxu0 0
    %375 = vmatpush.bf16.msra.mxu0 0
    %376 = vmatpush.bf16.msra.mxu0 0
    %377 = vmatpush.bf16.msra.mxu0 0
    %378 = vmatpush.bf16.msra.mxu0 0
    %379 = vmatpush.bf16.msra.mxu0 0
    %380 = vmatpush.bf16.msra.mxu0 %v350
    %381 = vmatpush.bf16.msra.mxu0 %v347
    %382 = vmatmul.bf16.gmra.mxu0 %v359
    %v383 = vpop.f32.mrf.mxu0
    %v384 = vadd.f32 0.0, %v383
    %v385 = vpop.f32.mrf.mxu0
    %386 = vdwg.mxu0
    %387 = vmatpush.bf16.msra.mxu0 0
    %388 = vmatpush.bf16.msra.mxu0 0
    %389 = vmatpush.bf16.msra.mxu0 0
    %390 = vmatpush.bf16.msra.mxu0 0
    %391 = vmatpush.bf16.msra.mxu0 0
    %392 = vmatpush.bf16.msra.mxu0 0
    %393 = vmatpush.bf16.msra.mxu0 %v351
    %394 = vmatpush.bf16.msra.mxu0 %v348
    %395 = vmatmul.bf16.gmra.mxu0 %v359
    %v396 = vpop.f32.mrf.mxu0
    %v397 = vadd.f32 0.0, %v396
    %v398 = vpop.f32.mrf.mxu0
    %399 = vdwg.mxu0
    %v400 = vadd.f32 %v312, %v371
    %v401 = vadd.f32 %v313, %v384
    %v402 = vadd.f32 %v314, %v397
    %s403 = scalar_lea.vmem %s1, 192
    %v404 = vld [vmem:[%s403] sm:$0xff]
    %v405 = vld [vmem:[%s403 + $0x8] sm:$0xf]
    %v406 = vld [vmem:[%s403 + $0xc] sm:$0xff]
    %v407 = vld [vmem:[%s403 + $0x14] sm:$0xf]
    %v408 = vld [vmem:[%s403 + $0x18] sm:$0xff]
    %v409 = vld [vmem:[%s403 + $0x20] sm:$0xf]
    %v410 = vld [vmem:[%s403 + $0x24] sm:$0xff]
    %v411 = vld [vmem:[%s403 + $0x2c] sm:$0xf]
    %v413 = vunpack.c.l.b16 %v58
    %v414 = vpack.c.b16 %v413, %v413
    %v416 = vshrl.u32 %v414, 16
    %v418 = vshll.u32 %v414, 16
    %v420 = vrot.slane %v418, 1
    %v421 = vor.u32 %v416, %v420
    %v430 = vunpack.c.l.b16 %v404
    %v431 = vunpack.c.h.b16 %v404
    %v432 = vunpack.c.l.b16 %v405
    %v433 = vunpack.c.l.b16 %v406
    %v434 = vunpack.c.h.b16 %v406
    %v435 = vunpack.c.l.b16 %v407
    %v436 = vunpack.c.l.b16 %v408
    %v437 = vunpack.c.h.b16 %v408
    %v438 = vunpack.c.l.b16 %v409
    %v439 = vunpack.c.l.b16 %v410
    %v440 = vunpack.c.h.b16 %v410
    %v441 = vunpack.c.l.b16 %v411
    %v442 = vpack.c.b16 %v433, %v430
    %v443 = vpack.c.b16 %v434, %v431
    %v444 = vpack.c.b16 %v435, %v432
    %v445 = vpack.c.b16 %v439, %v436
    %v446 = vpack.c.b16 %v440, %v437
    %v447 = vpack.c.b16 %v441, %v438
    %v455 = vsel %vm110, %v421, 0
    %457 = vmatpush.bf16.msra.mxu0 0
    %458 = vmatpush.bf16.msra.mxu0 0
    %459 = vmatpush.bf16.msra.mxu0 0
    %460 = vmatpush.bf16.msra.mxu0 0
    %461 = vmatpush.bf16.msra.mxu0 0
    %462 = vmatpush.bf16.msra.mxu0 0
    %463 = vmatpush.bf16.msra.mxu0 %v445
    %464 = vmatpush.bf16.msra.mxu0 %v442
    %465 = vmatmul.bf16.gmra.mxu0 %v455
    %v466 = vpop.f32.mrf.mxu0
    %v467 = vadd.f32 0.0, %v466
    %v468 = vpop.f32.mrf.mxu0
    %469 = vdwg.mxu0
    %470 = vmatpush.bf16.msra.mxu0 0
    %471 = vmatpush.bf16.msra.mxu0 0
    %472 = vmatpush.bf16.msra.mxu0 0
    %473 = vmatpush.bf16.msra.mxu0 0
    %474 = vmatpush.bf16.msra.mxu0 0
    %475 = vmatpush.bf16.msra.mxu0 0
    %476 = vmatpush.bf16.msra.mxu0 %v446
    %477 = vmatpush.bf16.msra.mxu0 %v443
    %478 = vmatmul.bf16.gmra.mxu0 %v455
    %v479 = vpop.f32.mrf.mxu0
    %v480 = vadd.f32 0.0, %v479
    %v481 = vpop.f32.mrf.mxu0
    %482 = vdwg.mxu0
    %483 = vmatpush.bf16.msra.mxu0 0
    %484 = vmatpush.bf16.msra.mxu0 0
    %485 = vmatpush.bf16.msra.mxu0 0
    %486 = vmatpush.bf16.msra.mxu0 0
    %487 = vmatpush.bf16.msra.mxu0 0
    %488 = vmatpush.bf16.msra.mxu0 0
    %489 = vmatpush.bf16.msra.mxu0 %v447
    %490 = vmatpush.bf16.msra.mxu0 %v444
    %491 = vmatmul.bf16.gmra.mxu0 %v455
    %v492 = vpop.f32.mrf.mxu0
    %v493 = vadd.f32 0.0, %v492
    %v494 = vpop.f32.mrf.mxu0
    %495 = vdwg.mxu0
    %v496 = vadd.f32 %v400, %v467
    %v497 = vadd.f32 %v401, %v480
    %v498 = vadd.f32 %v402, %v493
    %s499 = scalar_lea.vmem %s1, 240
    %v500 = vld [vmem:[%s499] sm:$0xff]
    %v501 = vld [vmem:[%s499 + $0x8] sm:$0xf]
    %v502 = vld [vmem:[%s499 + $0xc] sm:$0xff]
    %v503 = vld [vmem:[%s499 + $0x14] sm:$0xf]
    %v504 = vld [vmem:[%s499 + $0x18] sm:$0xff]
    %v505 = vld [vmem:[%s499 + $0x20] sm:$0xf]
    %v506 = vld [vmem:[%s499 + $0x24] sm:$0xff]
    %v507 = vld [vmem:[%s499 + $0x2c] sm:$0xf]
    %v509 = vunpack.c.l.b16 %v68
    %v510 = vpack.c.b16 %v509, %v509
    %v512 = vshrl.u32 %v510, 16
    %v514 = vshll.u32 %v510, 16
    %v516 = vrot.slane %v514, 1
    %v517 = vor.u32 %v512, %v516
    %v526 = vunpack.c.l.b16 %v500
    %v527 = vunpack.c.h.b16 %v500
    %v528 = vunpack.c.l.b16 %v501
    %v529 = vunpack.c.l.b16 %v502
    %v530 = vunpack.c.h.b16 %v502
    %v531 = vunpack.c.l.b16 %v503
    %v532 = vunpack.c.l.b16 %v504
    %v533 = vunpack.c.h.b16 %v504
    %v534 = vunpack.c.l.b16 %v505
    %v535 = vunpack.c.l.b16 %v506
    %v536 = vunpack.c.h.b16 %v506
    %v537 = vunpack.c.l.b16 %v507
    %v538 = vpack.c.b16 %v529, %v526
    %v539 = vpack.c.b16 %v530, %v527
    %v540 = vpack.c.b16 %v531, %v528
    %v541 = vpack.c.b16 %v535, %v532
    %v542 = vpack.c.b16 %v536, %v533
    %v543 = vpack.c.b16 %v537, %v534
    %v551 = vsel %vm110, %v517, 0
    %553 = vmatpush.bf16.msra.mxu0 0
    %554 = vmatpush.bf16.msra.mxu0 0
    %555 = vmatpush.bf16.msra.mxu0 0
    %556 = vmatpush.bf16.msra.mxu0 0
    %557 = vmatpush.bf16.msra.mxu0 0
    %558 = vmatpush.bf16.msra.mxu0 0
    %559 = vmatpush.bf16.msra.mxu0 %v541
    %560 = vmatpush.bf16.msra.mxu0 %v538
    %561 = vmatmul.bf16.gmra.mxu0 %v551
    %v562 = vpop.f32.mrf.mxu0
    %v563 = vadd.f32 0.0, %v562
    %v564 = vpop.f32.mrf.mxu0
    %565 = vdwg.mxu0
    %566 = vmatpush.bf16.msra.mxu0 0
    %567 = vmatpush.bf16.msra.mxu0 0
    %568 = vmatpush.bf16.msra.mxu0 0
    %569 = vmatpush.bf16.msra.mxu0 0
    %570 = vmatpush.bf16.msra.mxu0 0
    %571 = vmatpush.bf16.msra.mxu0 0
    %572 = vmatpush.bf16.msra.mxu0 %v542
    %573 = vmatpush.bf16.msra.mxu0 %v539
    %574 = vmatmul.bf16.gmra.mxu0 %v551
    %v575 = vpop.f32.mrf.mxu0
    %v576 = vadd.f32 0.0, %v575
    %v577 = vpop.f32.mrf.mxu0
    %578 = vdwg.mxu0
    %579 = vmatpush.bf16.msra.mxu0 0
    %580 = vmatpush.bf16.msra.mxu0 0
    %581 = vmatpush.bf16.msra.mxu0 0
    %582 = vmatpush.bf16.msra.mxu0 0
    %583 = vmatpush.bf16.msra.mxu0 0
    %584 = vmatpush.bf16.msra.mxu0 0
    %585 = vmatpush.bf16.msra.mxu0 %v543
    %586 = vmatpush.bf16.msra.mxu0 %v540
    %587 = vmatmul.bf16.gmra.mxu0 %v551
    %v588 = vpop.f32.mrf.mxu0
    %v589 = vadd.f32 0.0, %v588
    %v590 = vpop.f32.mrf.mxu0
    %591 = vdwg.mxu0
    %v592 = vadd.f32 %v496, %v563
    %v593 = vadd.f32 %v497, %v576
    %v594 = vadd.f32 %v498, %v589
    %v595 = vld [vmem:[%s2] sm:$0x7]
    %v597 = vperm.slane %v595, 0
    %v598 = vperm.slane %v595, 1
    %v599 = vperm.slane %v595, 2
    %v603 = vadd.f32 %v592, %v597
    %v604 = vadd.f32 %v593, %v598
    %v605 = vadd.f32 %v594, %v599
    %v606 = vsub.f32 0.0, %v603
    %v607 = vsub.f32 0.0, %v604
    %v608 = vsub.f32 0.0, %v605
    %v609 = vmul.f32 %v606, 1.442695
    %v610 = vpow.pop %v609
    %v611 = vmul.f32 %v607, 1.442695
    %v612 = vpow.pop %v611
    %v613 = vmul.f32 %v608, 1.442695
    %v614 = vpow.pop %v613
    %v615 = vadd.f32 %v610, 1.0
    %v616 = vadd.f32 %v612, 1.0
    %v617 = vadd.f32 %v614, 1.0
    %v618 = vrcp.pop %v615
    %v619 = vmul.f32 %v615, %v618
    %v620 = vsub.f32 1.0, %v619
    %v621 = vmul.f32 %v618, %v620
    %v622 = vadd.f32 %v618, %v621
    %vm623 = vweird.f32 %v615
    %vm624 = vweird.f32 %v618
    %vm625 = vmor %vm623, %vm624
    %v626 = vsel %vm625, %v618, %v622
    %v627 = vand.u32 2147483647, %v615
    %vm628 = vcmp.eq.f32.partialorder %v627, 8.507059e+37
    %v629 = vand.u32 %v615, 2147483648
    %v630 = vor.u32 1.1754944e-38, %v629
    %v631 = vsel %vm628, %v630, %v626
    %v632 = vmul.f32 1.0, %v631
    %v633 = vrcp.pop %v616
    %v634 = vmul.f32 %v616, %v633
    %v635 = vsub.f32 1.0, %v634
    %v636 = vmul.f32 %v633, %v635
    %v637 = vadd.f32 %v633, %v636
    %vm638 = vweird.f32 %v616
    %vm639 = vweird.f32 %v633
    %vm640 = vmor %vm638, %vm639
    %v641 = vsel %vm640, %v633, %v637
    %v642 = vand.u32 2147483647, %v616
    %vm643 = vcmp.eq.f32.partialorder %v642, 8.507059e+37
    %v644 = vand.u32 %v616, 2147483648
    %v645 = vor.u32 1.1754944e-38, %v644
    %v646 = vsel %vm643, %v645, %v641
    %v647 = vmul.f32 1.0, %v646
    %v648 = vrcp.pop %v617
    %v649 = vmul.f32 %v617, %v648
    %v650 = vsub.f32 1.0, %v649
    %v651 = vmul.f32 %v648, %v650
    %v652 = vadd.f32 %v648, %v651
    %vm653 = vweird.f32 %v617
    %vm654 = vweird.f32 %v648
    %vm655 = vmor %vm653, %vm654
    %v656 = vsel %vm655, %v648, %v652
    %v657 = vand.u32 2147483647, %v617
    %vm658 = vcmp.eq.f32.partialorder %v657, 8.507059e+37
    %v659 = vand.u32 %v617, 2147483648
    %v660 = vor.u32 1.1754944e-38, %v659
    %v661 = vsel %vm658, %v660, %v656
    %v662 = vmul.f32 1.0, %v661
    %665 = vrot.lane.b32.xlu0 %v632, 44
    %v666 = vpop.permute.xlu0 %665
    %667 = vrot.lane.b32.xlu0 %v647, 44
    %v668 = vpop.permute.xlu0 %667
    %vm669 = vcmask 359424
    %v670 = vsel %vm669, %v666, %v668
    %v672 = vadd.f32 %v632, %v670
    %673 = vrot.lane.b32.xlu0 %v647, 88
    %v674 = vpop.permute.xlu0 %673
    %v676 = vadd.f32 %v672, %v674
    %678 = vrot.lane.b32.xlu0 %v647, 4
    %v679 = vpop.permute.xlu0 %678
    %680 = vrot.lane.b32.xlu0 %v662, 4
    %v681 = vpop.permute.xlu0 %680
    %vm682 = vcmask 31744
    %v683 = vsel %vm682, %v679, %v681
    %v685 = vadd.f32 %v676, %v683
    %v686 = vmul.f32 %v685, 0.25
    %v687 = vpack.c.bf16 %v686, %v686
    %688 = vmatpush.bf16.msra.mxu0 0
    %689 = vmatpush.bf16.msra.mxu0 0
    %690 = vmatpush.bf16.msra.mxu0 0
    %691 = vmatpush.bf16.msra.mxu0 0
    %692 = vmatpush.bf16.msra.mxu0 0
    %693 = vmatpush.bf16.msra.mxu0 0
    %694 = vmatpush.bf16.msra.mxu0 %v101
    %695 = vmatpush.bf16.msra.mxu0 %v98
    %696 = vmatmul.bf16.gmra.mxu0 %v359
    %v697 = vpop.f32.mrf.mxu0
    %v698 = vadd.f32 0.0, %v697
    %v699 = vpop.f32.mrf.mxu0
    %700 = vdwg.mxu0
    %701 = vmatpush.bf16.msra.mxu0 0
    %702 = vmatpush.bf16.msra.mxu0 0
    %703 = vmatpush.bf16.msra.mxu0 0
    %704 = vmatpush.bf16.msra.mxu0 0
    %705 = vmatpush.bf16.msra.mxu0 0
    %706 = vmatpush.bf16.msra.mxu0 0
    %707 = vmatpush.bf16.msra.mxu0 %v102
    %708 = vmatpush.bf16.msra.mxu0 %v99
    %709 = vmatmul.bf16.gmra.mxu0 %v359
    %v710 = vpop.f32.mrf.mxu0
    %v711 = vadd.f32 0.0, %v710
    %v712 = vpop.f32.mrf.mxu0
    %713 = vdwg.mxu0
    %714 = vmatpush.bf16.msra.mxu0 0
    %715 = vmatpush.bf16.msra.mxu0 0
    %716 = vmatpush.bf16.msra.mxu0 0
    %717 = vmatpush.bf16.msra.mxu0 0
    %718 = vmatpush.bf16.msra.mxu0 0
    %719 = vmatpush.bf16.msra.mxu0 0
    %720 = vmatpush.bf16.msra.mxu0 %v103
    %721 = vmatpush.bf16.msra.mxu0 %v100
    %722 = vmatmul.bf16.gmra.mxu0 %v359
    %v723 = vpop.f32.mrf.mxu0
    %v724 = vadd.f32 0.0, %v723
    %v725 = vpop.f32.mrf.mxu0
    %726 = vdwg.mxu0
    %727 = vmatpush.bf16.msra.mxu0 0
    %728 = vmatpush.bf16.msra.mxu0 0
    %729 = vmatpush.bf16.msra.mxu0 0
    %730 = vmatpush.bf16.msra.mxu0 0
    %731 = vmatpush.bf16.msra.mxu0 0
    %732 = vmatpush.bf16.msra.mxu0 0
    %733 = vmatpush.bf16.msra.mxu0 %v176
    %734 = vmatpush.bf16.msra.mxu0 %v173
    %735 = vmatmul.bf16.gmra.mxu0 %v271
    %v736 = vpop.f32.mrf.mxu0
    %v737 = vadd.f32 %v698, %v736
    %v738 = vpop.f32.mrf.mxu0
    %739 = vdwg.mxu0
    %740 = vmatpush.bf16.msra.mxu0 0
    %741 = vmatpush.bf16.msra.mxu0 0
    %742 = vmatpush.bf16.msra.mxu0 0
    %743 = vmatpush.bf16.msra.mxu0 0
    %744 = vmatpush.bf16.msra.mxu0 0
    %745 = vmatpush.bf16.msra.mxu0 0
    %746 = vmatpush.bf16.msra.mxu0 %v177
    %747 = vmatpush.bf16.msra.mxu0 %v174
    %748 = vmatmul.bf16.gmra.mxu0 %v271
    %v749 = vpop.f32.mrf.mxu0
    %v750 = vadd.f32 %v711, %v749
    %v751 = vpop.f32.mrf.mxu0
    %752 = vdwg.mxu0
    %753 = vmatpush.bf16.msra.mxu0 0
    %754 = vmatpush.bf16.msra.mxu0 0
    %755 = vmatpush.bf16.msra.mxu0 0
    %756 = vmatpush.bf16.msra.mxu0 0
    %757 = vmatpush.bf16.msra.mxu0 0
    %758 = vmatpush.bf16.msra.mxu0 0
    %759 = vmatpush.bf16.msra.mxu0 %v178
    %760 = vmatpush.bf16.msra.mxu0 %v175
    %761 = vmatmul.bf16.gmra.mxu0 %v271
    %v762 = vpop.f32.mrf.mxu0
    %v763 = vadd.f32 %v724, %v762
    %v764 = vpop.f32.mrf.mxu0
    %765 = vdwg.mxu0
    %766 = vmatpush.bf16.msra.mxu0 0
    %767 = vmatpush.bf16.msra.mxu0 0
    %768 = vmatpush.bf16.msra.mxu0 0
    %769 = vmatpush.bf16.msra.mxu0 0
    %770 = vmatpush.bf16.msra.mxu0 0
    %771 = vmatpush.bf16.msra.mxu0 0
    %772 = vmatpush.bf16.msra.mxu0 %v261
    %773 = vmatpush.bf16.msra.mxu0 %v258
    %774 = vmatmul.bf16.gmra.mxu0 %v455
    %v775 = vpop.f32.mrf.mxu0
    %v776 = vadd.f32 0.0, %v775
    %v777 = vpop.f32.mrf.mxu0
    %778 = vdwg.mxu0
    %779 = vmatpush.bf16.msra.mxu0 0
    %780 = vmatpush.bf16.msra.mxu0 0
    %781 = vmatpush.bf16.msra.mxu0 0
    %782 = vmatpush.bf16.msra.mxu0 0
    %783 = vmatpush.bf16.msra.mxu0 0
    %784 = vmatpush.bf16.msra.mxu0 0
    %785 = vmatpush.bf16.msra.mxu0 %v262
    %786 = vmatpush.bf16.msra.mxu0 %v259
    %787 = vmatmul.bf16.gmra.mxu0 %v455
    %v788 = vpop.f32.mrf.mxu0
    %v789 = vadd.f32 0.0, %v788
    %v790 = vpop.f32.mrf.mxu0
    %791 = vdwg.mxu0
    %792 = vmatpush.bf16.msra.mxu0 0
    %793 = vmatpush.bf16.msra.mxu0 0
    %794 = vmatpush.bf16.msra.mxu0 0
    %795 = vmatpush.bf16.msra.mxu0 0
    %796 = vmatpush.bf16.msra.mxu0 0
    %797 = vmatpush.bf16.msra.mxu0 0
    %798 = vmatpush.bf16.msra.mxu0 %v263
    %799 = vmatpush.bf16.msra.mxu0 %v260
    %800 = vmatmul.bf16.gmra.mxu0 %v455
    %v801 = vpop.f32.mrf.mxu0
    %v802 = vadd.f32 0.0, %v801
    %v803 = vpop.f32.mrf.mxu0
    %804 = vdwg.mxu0
    %v805 = vadd.f32 %v737, %v776
    %v806 = vadd.f32 %v750, %v789
    %v807 = vadd.f32 %v763, %v802
    %808 = vmatpush.bf16.msra.mxu0 0
    %809 = vmatpush.bf16.msra.mxu0 0
    %810 = vmatpush.bf16.msra.mxu0 0
    %811 = vmatpush.bf16.msra.mxu0 0
    %812 = vmatpush.bf16.msra.mxu0 0
    %813 = vmatpush.bf16.msra.mxu0 0
    %814 = vmatpush.bf16.msra.mxu0 %v349
    %815 = vmatpush.bf16.msra.mxu0 %v346
    %816 = vmatmul.bf16.gmra.mxu0 %v551
    %v817 = vpop.f32.mrf.mxu0
    %v818 = vadd.f32 0.0, %v817
    %v819 = vpop.f32.mrf.mxu0
    %820 = vdwg.mxu0
    %821 = vmatpush.bf16.msra.mxu0 0
    %822 = vmatpush.bf16.msra.mxu0 0
    %823 = vmatpush.bf16.msra.mxu0 0
    %824 = vmatpush.bf16.msra.mxu0 0
    %825 = vmatpush.bf16.msra.mxu0 0
    %826 = vmatpush.bf16.msra.mxu0 0
    %827 = vmatpush.bf16.msra.mxu0 %v350
    %828 = vmatpush.bf16.msra.mxu0 %v347
    %829 = vmatmul.bf16.gmra.mxu0 %v551
    %v830 = vpop.f32.mrf.mxu0
    %v831 = vadd.f32 0.0, %v830
    %v832 = vpop.f32.mrf.mxu0
    %833 = vdwg.mxu0
    %834 = vmatpush.bf16.msra.mxu0 0
    %835 = vmatpush.bf16.msra.mxu0 0
    %836 = vmatpush.bf16.msra.mxu0 0
    %837 = vmatpush.bf16.msra.mxu0 0
    %838 = vmatpush.bf16.msra.mxu0 0
    %839 = vmatpush.bf16.msra.mxu0 0
    %840 = vmatpush.bf16.msra.mxu0 %v351
    %841 = vmatpush.bf16.msra.mxu0 %v348
    %842 = vmatmul.bf16.gmra.mxu0 %v551
    %v843 = vpop.f32.mrf.mxu0
    %v844 = vadd.f32 0.0, %v843
    %v845 = vpop.f32.mrf.mxu0
    %846 = vdwg.mxu0
    %v847 = vadd.f32 %v805, %v818
    %v848 = vadd.f32 %v806, %v831
    %v849 = vadd.f32 %v807, %v844
    %v851 = vunpack.c.l.b16 %v228
    %v852 = vpack.c.b16 %v851, %v851
    %v854 = vshrl.u32 %v852, 16
    %v856 = vshll.u32 %v852, 16
    %v858 = vrot.slane %v856, 1
    %v859 = vor.u32 %v854, %v858
    %v861 = vsel %vm110, %v859, 0
    %863 = vmatpush.bf16.msra.mxu0 0
    %864 = vmatpush.bf16.msra.mxu0 0
    %865 = vmatpush.bf16.msra.mxu0 0
    %866 = vmatpush.bf16.msra.mxu0 0
    %867 = vmatpush.bf16.msra.mxu0 0
    %868 = vmatpush.bf16.msra.mxu0 0
    %869 = vmatpush.bf16.msra.mxu0 %v445
    %870 = vmatpush.bf16.msra.mxu0 %v442
    %871 = vmatmul.bf16.gmra.mxu0 %v861
    %v872 = vpop.f32.mrf.mxu0
    %v873 = vadd.f32 0.0, %v872
    %v874 = vpop.f32.mrf.mxu0
    %875 = vdwg.mxu0
    %876 = vmatpush.bf16.msra.mxu0 0
    %877 = vmatpush.bf16.msra.mxu0 0
    %878 = vmatpush.bf16.msra.mxu0 0
    %879 = vmatpush.bf16.msra.mxu0 0
    %880 = vmatpush.bf16.msra.mxu0 0
    %881 = vmatpush.bf16.msra.mxu0 0
    %882 = vmatpush.bf16.msra.mxu0 %v446
    %883 = vmatpush.bf16.msra.mxu0 %v443
    %884 = vmatmul.bf16.gmra.mxu0 %v861
    %v885 = vpop.f32.mrf.mxu0
    %v886 = vadd.f32 0.0, %v885
    %v887 = vpop.f32.mrf.mxu0
    %888 = vdwg.mxu0
    %889 = vmatpush.bf16.msra.mxu0 0
    %890 = vmatpush.bf16.msra.mxu0 0
    %891 = vmatpush.bf16.msra.mxu0 0
    %892 = vmatpush.bf16.msra.mxu0 0
    %893 = vmatpush.bf16.msra.mxu0 0
    %894 = vmatpush.bf16.msra.mxu0 0
    %895 = vmatpush.bf16.msra.mxu0 %v447
    %896 = vmatpush.bf16.msra.mxu0 %v444
    %897 = vmatmul.bf16.gmra.mxu0 %v861
    %v898 = vpop.f32.mrf.mxu0
    %v899 = vadd.f32 0.0, %v898
    %v900 = vpop.f32.mrf.mxu0
    %901 = vdwg.mxu0
    %v902 = vadd.f32 %v847, %v873
    %v903 = vadd.f32 %v848, %v886
    %v904 = vadd.f32 %v849, %v899
    %v906 = vunpack.c.l.b16 %v316
    %v907 = vpack.c.b16 %v906, %v906
    %v909 = vshrl.u32 %v907, 16
    %v911 = vshll.u32 %v907, 16
    %v913 = vrot.slane %v911, 1
    %v914 = vor.u32 %v909, %v913
    %v916 = vsel %vm110, %v914, 0
    %918 = vmatpush.bf16.msra.mxu0 0
    %919 = vmatpush.bf16.msra.mxu0 0
    %920 = vmatpush.bf16.msra.mxu0 0
    %921 = vmatpush.bf16.msra.mxu0 0
    %922 = vmatpush.bf16.msra.mxu0 0
    %923 = vmatpush.bf16.msra.mxu0 0
    %924 = vmatpush.bf16.msra.mxu0 %v541
    %925 = vmatpush.bf16.msra.mxu0 %v538
    %926 = vmatmul.bf16.gmra.mxu0 %v916
    %v927 = vpop.f32.mrf.mxu0
    %v928 = vadd.f32 0.0, %v927
    %v929 = vpop.f32.mrf.mxu0
    %930 = vdwg.mxu0
    %931 = vmatpush.bf16.msra.mxu0 0
    %932 = vmatpush.bf16.msra.mxu0 0
    %933 = vmatpush.bf16.msra.mxu0 0
    %934 = vmatpush.bf16.msra.mxu0 0
    %935 = vmatpush.bf16.msra.mxu0 0
    %936 = vmatpush.bf16.msra.mxu0 0
    %937 = vmatpush.bf16.msra.mxu0 %v542
    %938 = vmatpush.bf16.msra.mxu0 %v539
    %939 = vmatmul.bf16.gmra.mxu0 %v916
    %v940 = vpop.f32.mrf.mxu0
    %v941 = vadd.f32 0.0, %v940
    %v942 = vpop.f32.mrf.mxu0
    %943 = vdwg.mxu0
    %944 = vmatpush.bf16.msra.mxu0 0
    %945 = vmatpush.bf16.msra.mxu0 0
    %946 = vmatpush.bf16.msra.mxu0 0
    %947 = vmatpush.bf16.msra.mxu0 0
    %948 = vmatpush.bf16.msra.mxu0 0
    %949 = vmatpush.bf16.msra.mxu0 0
    %950 = vmatpush.bf16.msra.mxu0 %v543
    %951 = vmatpush.bf16.msra.mxu0 %v540
    %952 = vmatmul.bf16.gmra.mxu0 %v916
    %v953 = vpop.f32.mrf.mxu0
    %v954 = vadd.f32 0.0, %v953
    %v955 = vpop.f32.mrf.mxu0
    %956 = vdwg.mxu0
    %v957 = vadd.f32 %v902, %v928
    %v958 = vadd.f32 %v903, %v941
    %v959 = vadd.f32 %v904, %v954
    %v960 = vadd.f32 %v957, %v597
    %v961 = vadd.f32 %v958, %v598
    %v962 = vadd.f32 %v959, %v599
    %v963 = vsub.f32 0.0, %v960
    %v964 = vsub.f32 0.0, %v961
    %v965 = vsub.f32 0.0, %v962
    %v966 = vmul.f32 %v963, 1.442695
    %v967 = vpow.pop %v966
    %v968 = vmul.f32 %v964, 1.442695
    %v969 = vpow.pop %v968
    %v970 = vmul.f32 %v965, 1.442695
    %v971 = vpow.pop %v970
    %v972 = vadd.f32 %v967, 1.0
    %v973 = vadd.f32 %v969, 1.0
    %v974 = vadd.f32 %v971, 1.0
    %v975 = vrcp.pop %v972
    %v976 = vmul.f32 %v972, %v975
    %v977 = vsub.f32 1.0, %v976
    %v978 = vmul.f32 %v975, %v977
    %v979 = vadd.f32 %v975, %v978
    %vm980 = vweird.f32 %v972
    %vm981 = vweird.f32 %v975
    %vm982 = vmor %vm980, %vm981
    %v983 = vsel %vm982, %v975, %v979
    %v984 = vand.u32 2147483647, %v972
    %vm985 = vcmp.eq.f32.partialorder %v984, 8.507059e+37
    %v986 = vand.u32 %v972, 2147483648
    %v987 = vor.u32 1.1754944e-38, %v986
    %v988 = vsel %vm985, %v987, %v983
    %v989 = vmul.f32 1.0, %v988
    %v990 = vrcp.pop %v973
    %v991 = vmul.f32 %v973, %v990
    %v992 = vsub.f32 1.0, %v991
    %v993 = vmul.f32 %v990, %v992
    %v994 = vadd.f32 %v990, %v993
    %vm995 = vweird.f32 %v973
    %vm996 = vweird.f32 %v990
    %vm997 = vmor %vm995, %vm996
    %v998 = vsel %vm997, %v990, %v994
    %v999 = vand.u32 2147483647, %v973
    %vm1000 = vcmp.eq.f32.partialorder %v999, 8.507059e+37
    %v1001 = vand.u32 %v973, 2147483648
    %v1002 = vor.u32 1.1754944e-38, %v1001
    %v1003 = vsel %vm1000, %v1002, %v998
    %v1004 = vmul.f32 1.0, %v1003
    %v1005 = vrcp.pop %v974
    %v1006 = vmul.f32 %v974, %v1005
    %v1007 = vsub.f32 1.0, %v1006
    %v1008 = vmul.f32 %v1005, %v1007
    %v1009 = vadd.f32 %v1005, %v1008
    %vm1010 = vweird.f32 %v974
    %vm1011 = vweird.f32 %v1005
    %vm1012 = vmor %vm1010, %vm1011
    %v1013 = vsel %vm1012, %v1005, %v1009
    %v1014 = vand.u32 2147483647, %v974
    %vm1015 = vcmp.eq.f32.partialorder %v1014, 8.507059e+37
    %v1016 = vand.u32 %v974, 2147483648
    %v1017 = vor.u32 1.1754944e-38, %v1016
    %v1018 = vsel %vm1015, %v1017, %v1013
    %v1019 = vmul.f32 1.0, %v1018
    %1022 = vrot.lane.b32.xlu0 %v989, 44
    %v1023 = vpop.permute.xlu0 %1022
    %1024 = vrot.lane.b32.xlu0 %v1004, 44
    %v1025 = vpop.permute.xlu0 %1024
    %v1026 = vsel %vm669, %v1023, %v1025
    %v1028 = vadd.f32 %v989, %v1026
    %1029 = vrot.lane.b32.xlu0 %v1004, 88
    %v1030 = vpop.permute.xlu0 %1029
    %v1032 = vadd.f32 %v1028, %v1030
    %1034 = vrot.lane.b32.xlu0 %v1004, 4
    %v1035 = vpop.permute.xlu0 %1034
    %1036 = vrot.lane.b32.xlu0 %v1019, 4
    %v1037 = vpop.permute.xlu0 %1036
    %v1038 = vsel %vm682, %v1035, %v1037
    %v1040 = vadd.f32 %v1032, %v1038
    %v1041 = vmul.f32 %v1040, 0.25
    %v1042 = vpack.c.bf16 %v1041, %v1041
    %v1043 = vld [vmem:[#allocation2] sm:$0xff]
    %v1044 = vld [vmem:[#allocation2 + $0x8] sm:$0xf]
    %v1045 = vld [vmem:[#allocation2 + $0xc] sm:$0xff]
    %v1046 = vld [vmem:[#allocation2 + $0x14] sm:$0xf]
    %v1047 = vld [vmem:[#allocation2 + $0x18] sm:$0xff]
    %v1048 = vld [vmem:[#allocation2 + $0x20] sm:$0xf]
    %v1049 = vld [vmem:[#allocation2 + $0x24] sm:$0xff]
    %v1050 = vld [vmem:[#allocation2 + $0x2c] sm:$0xf]
    %v1051 = vld [vmem:[#allocation2 + $0x30] sm:$0xff]
    %v1052 = vld [vmem:[#allocation2 + $0x38] sm:$0xf]
    %v1053 = vld [vmem:[#allocation2 + $0x3c] sm:$0xff]
    %v1054 = vld [vmem:[#allocation2 + $0x44] sm:$0xf]
    %v1055 = vld [vmem:[#allocation2 + $0x48] sm:$0xff]
    %v1056 = vld [vmem:[#allocation2 + $0x50] sm:$0xf]
    %v1057 = vld [vmem:[#allocation2 + $0x54] sm:$0xff]
    %v1058 = vld [vmem:[#allocation2 + $0x5c] sm:$0xf]
    %v1059 = vld [vmem:[#allocation2 + $0x60] sm:$0xff]
    %v1060 = vld [vmem:[#allocation2 + $0x68] sm:$0xf]
    %v1061 = vld [vmem:[#allocation2 + $0x6c] sm:$0xff]
    %v1062 = vld [vmem:[#allocation2 + $0x74] sm:$0xf]
    %v1063 = vld [vmem:[#allocation2 + $0x78] sm:$0x33]
    %v1064 = vld [vmem:[#allocation2 + $0x80] sm:$0x3]
    %s1065 = scalar_lea.vmem [#allocation2], 132
    %v1066 = vld [vmem:[%s1065] sm:$0xff]
    %v1067 = vld [vmem:[%s1065 + $0x8] sm:$0xf]
    %v1068 = vld [vmem:[%s1065 + $0xc] sm:$0xff]
    %v1069 = vld [vmem:[%s1065 + $0x14] sm:$0xf]
    %v1070 = vld [vmem:[%s1065 + $0x18] sm:$0xff]
    %v1071 = vld [vmem:[%s1065 + $0x20] sm:$0xf]
    %v1072 = vld [vmem:[%s1065 + $0x24] sm:$0xff]
    %v1073 = vld [vmem:[%s1065 + $0x2c] sm:$0xf]
    %v1074 = vld [vmem:[%s1065 + $0x30] sm:$0xff]
    %v1075 = vld [vmem:[%s1065 + $0x38] sm:$0xf]
    %v1076 = vld [vmem:[%s1065 + $0x3c] sm:$0xff]
    %v1077 = vld [vmem:[%s1065 + $0x44] sm:$0xf]
    %v1078 = vld [vmem:[%s1065 + $0x48] sm:$0xff]
    %v1079 = vld [vmem:[%s1065 + $0x50] sm:$0xf]
    %v1080 = vld [vmem:[%s1065 + $0x54] sm:$0xff]
    %v1081 = vld [vmem:[%s1065 + $0x5c] sm:$0xf]
    %v1082 = vld [vmem:[%s1065 + $0x60] sm:$0xff]
    %v1083 = vld [vmem:[%s1065 + $0x68] sm:$0xf]
    %v1084 = vld [vmem:[%s1065 + $0x6c] sm:$0xff]
    %v1085 = vld [vmem:[%s1065 + $0x74] sm:$0xf]
    %v1086 = vld [vmem:[%s1065 + $0x78] sm:$0x33]
    %v1087 = vld [vmem:[%s1065 + $0x80] sm:$0x3]
    %v1110 = vunpack.c.l.b16 %v1066
    %v1111 = vunpack.c.h.b16 %v1066
    %v1112 = vunpack.c.l.b16 %v1067
    %v1113 = vunpack.c.l.b16 %v1068
    %v1114 = vunpack.c.h.b16 %v1068
    %v1115 = vunpack.c.l.b16 %v1069
    %v1116 = vunpack.c.l.b16 %v1070
    %v1117 = vunpack.c.h.b16 %v1070
    %v1118 = vunpack.c.l.b16 %v1071
    %v1119 = vunpack.c.l.b16 %v1072
    %v1120 = vunpack.c.h.b16 %v1072
    %v1121 = vunpack.c.l.b16 %v1073
    %v1122 = vunpack.c.l.b16 %v1074
    %v1123 = vunpack.c.h.b16 %v1074
    %v1124 = vunpack.c.l.b16 %v1075
    %v1125 = vunpack.c.l.b16 %v1076
    %v1126 = vunpack.c.h.b16 %v1076
    %v1127 = vunpack.c.l.b16 %v1077
    %v1128 = vunpack.c.l.b16 %v1078
    %v1129 = vunpack.c.h.b16 %v1078
    %v1130 = vunpack.c.l.b16 %v1079
    %v1131 = vunpack.c.l.b16 %v1080
    %v1132 = vunpack.c.h.b16 %v1080
    %v1133 = vunpack.c.l.b16 %v1081
    %v1134 = vunpack.c.l.b16 %v1082
    %v1135 = vunpack.c.h.b16 %v1082
    %v1136 = vunpack.c.l.b16 %v1083
    %v1137 = vunpack.c.l.b16 %v1084
    %v1138 = vunpack.c.h.b16 %v1084
    %v1139 = vunpack.c.l.b16 %v1085
    %v1140 = vunpack.c.l.b16 %v1086
    %v1141 = vunpack.c.h.b16 %v1086
    %v1142 = vunpack.c.l.b16 %v1087
    %v1143 = vpack.c.b16 %v1113, %v1110
    %v1144 = vpack.c.b16 %v1114, %v1111
    %v1145 = vpack.c.b16 %v1115, %v1112
    %v1146 = vpack.c.b16 %v1119, %v1116
    %v1147 = vpack.c.b16 %v1120, %v1117
    %v1148 = vpack.c.b16 %v1121, %v1118
    %v1149 = vpack.c.b16 %v1125, %v1122
    %v1150 = vpack.c.b16 %v1126, %v1123
    %v1151 = vpack.c.b16 %v1127, %v1124
    %v1152 = vpack.c.b16 %v1131, %v1128
    %v1153 = vpack.c.b16 %v1132, %v1129
    %v1154 = vpack.c.b16 %v1133, %v1130
    %v1155 = vpack.c.b16 %v1137, %v1134
    %v1156 = vpack.c.b16 %v1138, %v1135
    %v1157 = vpack.c.b16 %v1139, %v1136
    %v1158 = vpack.c.b16 %v1140, %v1140
    %v1159 = vpack.c.b16 %v1141, %v1141
    %v1160 = vpack.c.b16 %v1142, %v1142
    %vm1176 = vcmask 687104
    %v1178 = vsel %vm1176, %v1042, 0
    %vm1180 = vcmask 1041408
    %v1182 = vsel %vm1180, %v1158, 0
    %v1185 = vsel %vm1180, %v1159, 0
    %v1188 = vsel %vm1180, %v1160, 0
    %1190 = vmatpush.bf16.msra.mxu0 0
    %1191 = vmatpush.bf16.msra.mxu0 0
    %1192 = vmatpush.bf16.msra.mxu0 %v1182
    %1193 = vmatpush.bf16.msra.mxu0 %v1155
    %1194 = vmatpush.bf16.msra.mxu0 %v1152
    %1195 = vmatpush.bf16.msra.mxu0 %v1149
    %1196 = vmatpush.bf16.msra.mxu0 %v1146
    %1197 = vmatpush.bf16.msra.mxu0 %v1143
    %1198 = vmatmul.bf16.gmra.mxu0 %v1178
    %v1199 = vpop.f32.mrf.mxu0
    %v1200 = vadd.f32 0.0, %v1199
    %v1201 = vpop.f32.mrf.mxu0
    %1202 = vdwg.mxu0
    %1203 = vmatpush.bf16.msra.mxu0 0
    %1204 = vmatpush.bf16.msra.mxu0 0
    %1205 = vmatpush.bf16.msra.mxu0 %v1185
    %1206 = vmatpush.bf16.msra.mxu0 %v1156
    %1207 = vmatpush.bf16.msra.mxu0 %v1153
    %1208 = vmatpush.bf16.msra.mxu0 %v1150
    %1209 = vmatpush.bf16.msra.mxu0 %v1147
    %1210 = vmatpush.bf16.msra.mxu0 %v1144
    %1211 = vmatmul.bf16.gmra.mxu0 %v1178
    %v1212 = vpop.f32.mrf.mxu0
    %v1213 = vadd.f32 0.0, %v1212
    %v1214 = vpop.f32.mrf.mxu0
    %1215 = vdwg.mxu0
    %1216 = vmatpush.bf16.msra.mxu0 0
    %1217 = vmatpush.bf16.msra.mxu0 0
    %1218 = vmatpush.bf16.msra.mxu0 %v1188
    %1219 = vmatpush.bf16.msra.mxu0 %v1157
    %1220 = vmatpush.bf16.msra.mxu0 %v1154
    %1221 = vmatpush.bf16.msra.mxu0 %v1151
    %1222 = vmatpush.bf16.msra.mxu0 %v1148
    %1223 = vmatpush.bf16.msra.mxu0 %v1145
    %1224 = vmatmul.bf16.gmra.mxu0 %v1178
    %v1225 = vpop.f32.mrf.mxu0
    %v1226 = vadd.f32 0.0, %v1225
    %v1227 = vpop.f32.mrf.mxu0
    %1228 = vdwg.mxu0
    %v1251 = vunpack.c.l.b16 %v1043
    %v1252 = vunpack.c.h.b16 %v1043
    %v1253 = vunpack.c.l.b16 %v1044
    %v1254 = vunpack.c.l.b16 %v1045
    %v1255 = vunpack.c.h.b16 %v1045
    %v1256 = vunpack.c.l.b16 %v1046
    %v1257 = vunpack.c.l.b16 %v1047
    %v1258 = vunpack.c.h.b16 %v1047
    %v1259 = vunpack.c.l.b16 %v1048
    %v1260 = vunpack.c.l.b16 %v1049
    %v1261 = vunpack.c.h.b16 %v1049
    %v1262 = vunpack.c.l.b16 %v1050
    %v1263 = vunpack.c.l.b16 %v1051
    %v1264 = vunpack.c.h.b16 %v1051
    %v1265 = vunpack.c.l.b16 %v1052
    %v1266 = vunpack.c.l.b16 %v1053
    %v1267 = vunpack.c.h.b16 %v1053
    %v1268 = vunpack.c.l.b16 %v1054
    %v1269 = vunpack.c.l.b16 %v1055
    %v1270 = vunpack.c.h.b16 %v1055
    %v1271 = vunpack.c.l.b16 %v1056
    %v1272 = vunpack.c.l.b16 %v1057
    %v1273 = vunpack.c.h.b16 %v1057
    %v1274 = vunpack.c.l.b16 %v1058
    %v1275 = vunpack.c.l.b16 %v1059
    %v1276 = vunpack.c.h.b16 %v1059
    %v1277 = vunpack.c.l.b16 %v1060
    %v1278 = vunpack.c.l.b16 %v1061
    %v1279 = vunpack.c.h.b16 %v1061
    %v1280 = vunpack.c.l.b16 %v1062
    %v1281 = vunpack.c.l.b16 %v1063
    %v1282 = vunpack.c.h.b16 %v1063
    %v1283 = vunpack.c.l.b16 %v1064
    %v1284 = vpack.c.b16 %v1254, %v1251
    %v1285 = vpack.c.b16 %v1255, %v1252
    %v1286 = vpack.c.b16 %v1256, %v1253
    %v1287 = vpack.c.b16 %v1260, %v1257
    %v1288 = vpack.c.b16 %v1261, %v1258
    %v1289 = vpack.c.b16 %v1262, %v1259
    %v1290 = vpack.c.b16 %v1266, %v1263
    %v1291 = vpack.c.b16 %v1267, %v1264
    %v1292 = vpack.c.b16 %v1268, %v1265
    %v1293 = vpack.c.b16 %v1272, %v1269
    %v1294 = vpack.c.b16 %v1273, %v1270
    %v1295 = vpack.c.b16 %v1274, %v1271
    %v1296 = vpack.c.b16 %v1278, %v1275
    %v1297 = vpack.c.b16 %v1279, %v1276
    %v1298 = vpack.c.b16 %v1280, %v1277
    %v1299 = vpack.c.b16 %v1281, %v1281
    %v1300 = vpack.c.b16 %v1282, %v1282
    %v1301 = vpack.c.b16 %v1283, %v1283
    %v1318 = vsel %vm1176, %v687, 0
    %v1321 = vsel %vm1180, %v1299, 0
    %v1324 = vsel %vm1180, %v1300, 0
    %v1327 = vsel %vm1180, %v1301, 0
    %1329 = vmatpush.bf16.msra.mxu0 0
    %1330 = vmatpush.bf16.msra.mxu0 0
    %1331 = vmatpush.bf16.msra.mxu0 %v1321
    %1332 = vmatpush.bf16.msra.mxu0 %v1296
    %1333 = vmatpush.bf16.msra.mxu0 %v1293
    %1334 = vmatpush.bf16.msra.mxu0 %v1290
    %1335 = vmatpush.bf16.msra.mxu0 %v1287
    %1336 = vmatpush.bf16.msra.mxu0 %v1284
    %1337 = vmatmul.bf16.gmra.mxu0 %v1318
    %v1338 = vpop.f32.mrf.mxu0
    %v1339 = vadd.f32 %v1200, %v1338
    %v1340 = vpop.f32.mrf.mxu0
    %1341 = vdwg.mxu0
    %1342 = vmatpush.bf16.msra.mxu0 0
    %1343 = vmatpush.bf16.msra.mxu0 0
    %1344 = vmatpush.bf16.msra.mxu0 %v1324
    %1345 = vmatpush.bf16.msra.mxu0 %v1297
    %1346 = vmatpush.bf16.msra.mxu0 %v1294
    %1347 = vmatpush.bf16.msra.mxu0 %v1291
    %1348 = vmatpush.bf16.msra.mxu0 %v1288
    %1349 = vmatpush.bf16.msra.mxu0 %v1285
    %1350 = vmatmul.bf16.gmra.mxu0 %v1318
    %v1351 = vpop.f32.mrf.mxu0
    %v1352 = vadd.f32 %v1213, %v1351
    %v1353 = vpop.f32.mrf.mxu0
    %1354 = vdwg.mxu0
    %1355 = vmatpush.bf16.msra.mxu0 0
    %1356 = vmatpush.bf16.msra.mxu0 0
    %1357 = vmatpush.bf16.msra.mxu0 %v1327
    %1358 = vmatpush.bf16.msra.mxu0 %v1298
    %1359 = vmatpush.bf16.msra.mxu0 %v1295
    %1360 = vmatpush.bf16.msra.mxu0 %v1292
    %1361 = vmatpush.bf16.msra.mxu0 %v1289
    %1362 = vmatpush.bf16.msra.mxu0 %v1286
    %1363 = vmatmul.bf16.gmra.mxu0 %v1318
    %v1364 = vpop.f32.mrf.mxu0
    %v1365 = vadd.f32 %v1226, %v1364
    %v1366 = vpop.f32.mrf.mxu0
    %1367 = vdwg.mxu0
    %s1368 = scalar_lea.vmem [#allocation2], 264
    %v1369 = vld [vmem:[%s1368] sm:$0xff]
    %v1370 = vld [vmem:[%s1368 + $0x8] sm:$0xf]
    %v1371 = vld [vmem:[%s1368 + $0xc] sm:$0xff]
    %v1372 = vld [vmem:[%s1368 + $0x14] sm:$0xf]
    %v1373 = vld [vmem:[%s1368 + $0x18] sm:$0xff]
    %v1374 = vld [vmem:[%s1368 + $0x20] sm:$0xf]
    %v1375 = vld [vmem:[%s1368 + $0x24] sm:$0xff]
    %v1376 = vld [vmem:[%s1368 + $0x2c] sm:$0xf]
    %v1377 = vld [vmem:[%s1368 + $0x30] sm:$0xff]
    %v1378 = vld [vmem:[%s1368 + $0x38] sm:$0xf]
    %v1379 = vld [vmem:[%s1368 + $0x3c] sm:$0xff]
    %v1380 = vld [vmem:[%s1368 + $0x44] sm:$0xf]
    %v1381 = vld [vmem:[%s1368 + $0x48] sm:$0xff]
    %v1382 = vld [vmem:[%s1368 + $0x50] sm:$0xf]
    %v1383 = vld [vmem:[%s1368 + $0x54] sm:$0xff]
    %v1384 = vld [vmem:[%s1368 + $0x5c] sm:$0xf]
    %v1385 = vld [vmem:[%s1368 + $0x60] sm:$0xff]
    %v1386 = vld [vmem:[%s1368 + $0x68] sm:$0xf]
    %v1387 = vld [vmem:[%s1368 + $0x6c] sm:$0xff]
    %v1388 = vld [vmem:[%s1368 + $0x74] sm:$0xf]
    %v1389 = vld [vmem:[%s1368 + $0x78] sm:$0x33]
    %v1390 = vld [vmem:[%s1368 + $0x80] sm:$0x3]
    %v1392 = vunpack.c.l.b16 %v687
    %v1393 = vpack.c.b16 %v1392, %v1392
    %v1395 = vshrl.u32 %v1393, 16
    %v1397 = vshll.u32 %v1393, 16
    %v1399 = vrot.slane %v1397, 1
    %v1400 = vor.u32 %v1395, %v1399
    %v1423 = vunpack.c.l.b16 %v1369
    %v1424 = vunpack.c.h.b16 %v1369
    %v1425 = vunpack.c.l.b16 %v1370
    %v1426 = vunpack.c.l.b16 %v1371
    %v1427 = vunpack.c.h.b16 %v1371
    %v1428 = vunpack.c.l.b16 %v1372
    %v1429 = vunpack.c.l.b16 %v1373
    %v1430 = vunpack.c.h.b16 %v1373
    %v1431 = vunpack.c.l.b16 %v1374
    %v1432 = vunpack.c.l.b16 %v1375
    %v1433 = vunpack.c.h.b16 %v1375
    %v1434 = vunpack.c.l.b16 %v1376
    %v1435 = vunpack.c.l.b16 %v1377
    %v1436 = vunpack.c.h.b16 %v1377
    %v1437 = vunpack.c.l.b16 %v1378
    %v1438 = vunpack.c.l.b16 %v1379
    %v1439 = vunpack.c.h.b16 %v1379
    %v1440 = vunpack.c.l.b16 %v1380
    %v1441 = vunpack.c.l.b16 %v1381
    %v1442 = vunpack.c.h.b16 %v1381
    %v1443 = vunpack.c.l.b16 %v1382
    %v1444 = vunpack.c.l.b16 %v1383
    %v1445 = vunpack.c.h.b16 %v1383
    %v1446 = vunpack.c.l.b16 %v1384
    %v1447 = vunpack.c.l.b16 %v1385
    %v1448 = vunpack.c.h.b16 %v1385
    %v1449 = vunpack.c.l.b16 %v1386
    %v1450 = vunpack.c.l.b16 %v1387
    %v1451 = vunpack.c.h.b16 %v1387
    %v1452 = vunpack.c.l.b16 %v1388
    %v1453 = vunpack.c.l.b16 %v1389
    %v1454 = vunpack.c.h.b16 %v1389
    %v1455 = vunpack.c.l.b16 %v1390
    %v1456 = vpack.c.b16 %v1426, %v1423
    %v1457 = vpack.c.b16 %v1427, %v1424
    %v1458 = vpack.c.b16 %v1428, %v1425
    %v1459 = vpack.c.b16 %v1432, %v1429
    %v1460 = vpack.c.b16 %v1433, %v1430
    %v1461 = vpack.c.b16 %v1434, %v1431
    %v1462 = vpack.c.b16 %v1438, %v1435
    %v1463 = vpack.c.b16 %v1439, %v1436
    %v1464 = vpack.c.b16 %v1440, %v1437
    %v1465 = vpack.c.b16 %v1444, %v1441
    %v1466 = vpack.c.b16 %v1445, %v1442
    %v1467 = vpack.c.b16 %v1446, %v1443
    %v1468 = vpack.c.b16 %v1450, %v1447
    %v1469 = vpack.c.b16 %v1451, %v1448
    %v1470 = vpack.c.b16 %v1452, %v1449
    %v1471 = vpack.c.b16 %v1453, %v1453
    %v1472 = vpack.c.b16 %v1454, %v1454
    %v1473 = vpack.c.b16 %v1455, %v1455
    %v1490 = vsel %vm1176, %v1400, 0
    %v1493 = vsel %vm1180, %v1471, 0
    %v1496 = vsel %vm1180, %v1472, 0
    %v1499 = vsel %vm1180, %v1473, 0
    %1501 = vmatpush.bf16.msra.mxu0 0
    %1502 = vmatpush.bf16.msra.mxu0 0
    %1503 = vmatpush.bf16.msra.mxu0 %v1493
    %1504 = vmatpush.bf16.msra.mxu0 %v1468
    %1505 = vmatpush.bf16.msra.mxu0 %v1465
    %1506 = vmatpush.bf16.msra.mxu0 %v1462
    %1507 = vmatpush.bf16.msra.mxu0 %v1459
    %1508 = vmatpush.bf16.msra.mxu0 %v1456
    %1509 = vmatmul.bf16.gmra.mxu0 %v1490
    %v1510 = vpop.f32.mrf.mxu0
    %v1511 = vadd.f32 0.0, %v1510
    %v1512 = vpop.f32.mrf.mxu0
    %1513 = vdwg.mxu0
    %1514 = vmatpush.bf16.msra.mxu0 0
    %1515 = vmatpush.bf16.msra.mxu0 0
    %1516 = vmatpush.bf16.msra.mxu0 %v1496
    %1517 = vmatpush.bf16.msra.mxu0 %v1469
    %1518 = vmatpush.bf16.msra.mxu0 %v1466
    %1519 = vmatpush.bf16.msra.mxu0 %v1463
    %1520 = vmatpush.bf16.msra.mxu0 %v1460
    %1521 = vmatpush.bf16.msra.mxu0 %v1457
    %1522 = vmatmul.bf16.gmra.mxu0 %v1490
    %v1523 = vpop.f32.mrf.mxu0
    %v1524 = vadd.f32 0.0, %v1523
    %v1525 = vpop.f32.mrf.mxu0
    %1526 = vdwg.mxu0
    %1527 = vmatpush.bf16.msra.mxu0 0
    %1528 = vmatpush.bf16.msra.mxu0 0
    %1529 = vmatpush.bf16.msra.mxu0 %v1499
    %1530 = vmatpush.bf16.msra.mxu0 %v1470
    %1531 = vmatpush.bf16.msra.mxu0 %v1467
    %1532 = vmatpush.bf16.msra.mxu0 %v1464
    %1533 = vmatpush.bf16.msra.mxu0 %v1461
    %1534 = vmatpush.bf16.msra.mxu0 %v1458
    %1535 = vmatmul.bf16.gmra.mxu0 %v1490
    %v1536 = vpop.f32.mrf.mxu0
    %v1537 = vadd.f32 0.0, %v1536
    %v1538 = vpop.f32.mrf.mxu0
    %1539 = vdwg.mxu0
    %v1540 = vadd.f32 %v1339, %v1511
    %v1541 = vadd.f32 %v1352, %v1524
    %v1542 = vadd.f32 %v1365, %v1537
    %s1543 = scalar_lea.vmem [#allocation2], 396
    %v1544 = vld [vmem:[%s1543] sm:$0xff]
    %v1545 = vld [vmem:[%s1543 + $0x8] sm:$0xf]
    %v1546 = vld [vmem:[%s1543 + $0xc] sm:$0xff]
    %v1547 = vld [vmem:[%s1543 + $0x14] sm:$0xf]
    %v1548 = vld [vmem:[%s1543 + $0x18] sm:$0xff]
    %v1549 = vld [vmem:[%s1543 + $0x20] sm:$0xf]
    %v1550 = vld [vmem:[%s1543 + $0x24] sm:$0xff]
    %v1551 = vld [vmem:[%s1543 + $0x2c] sm:$0xf]
    %v1552 = vld [vmem:[%s1543 + $0x30] sm:$0xff]
    %v1553 = vld [vmem:[%s1543 + $0x38] sm:$0xf]
    %v1554 = vld [vmem:[%s1543 + $0x3c] sm:$0xff]
    %v1555 = vld [vmem:[%s1543 + $0x44] sm:$0xf]
    %v1556 = vld [vmem:[%s1543 + $0x48] sm:$0xff]
    %v1557 = vld [vmem:[%s1543 + $0x50] sm:$0xf]
    %v1558 = vld [vmem:[%s1543 + $0x54] sm:$0xff]
    %v1559 = vld [vmem:[%s1543 + $0x5c] sm:$0xf]
    %v1560 = vld [vmem:[%s1543 + $0x60] sm:$0xff]
    %v1561 = vld [vmem:[%s1543 + $0x68] sm:$0xf]
    %v1562 = vld [vmem:[%s1543 + $0x6c] sm:$0xff]
    %v1563 = vld [vmem:[%s1543 + $0x74] sm:$0xf]
    %v1564 = vld [vmem:[%s1543 + $0x78] sm:$0x33]
    %v1565 = vld [vmem:[%s1543 + $0x80] sm:$0x3]
    %v1567 = vunpack.c.l.b16 %v1042
    %v1568 = vpack.c.b16 %v1567, %v1567
    %v1570 = vshrl.u32 %v1568, 16
    %v1572 = vshll.u32 %v1568, 16
    %v1574 = vrot.slane %v1572, 1
    %v1575 = vor.u32 %v1570, %v1574
    %v1598 = vunpack.c.l.b16 %v1544
    %v1599 = vunpack.c.h.b16 %v1544
    %v1600 = vunpack.c.l.b16 %v1545
    %v1601 = vunpack.c.l.b16 %v1546
    %v1602 = vunpack.c.h.b16 %v1546
    %v1603 = vunpack.c.l.b16 %v1547
    %v1604 = vunpack.c.l.b16 %v1548
    %v1605 = vunpack.c.h.b16 %v1548
    %v1606 = vunpack.c.l.b16 %v1549
    %v1607 = vunpack.c.l.b16 %v1550
    %v1608 = vunpack.c.h.b16 %v1550
    %v1609 = vunpack.c.l.b16 %v1551
    %v1610 = vunpack.c.l.b16 %v1552
    %v1611 = vunpack.c.h.b16 %v1552
    %v1612 = vunpack.c.l.b16 %v1553
    %v1613 = vunpack.c.l.b16 %v1554
    %v1614 = vunpack.c.h.b16 %v1554
    %v1615 = vunpack.c.l.b16 %v1555
    %v1616 = vunpack.c.l.b16 %v1556
    %v1617 = vunpack.c.h.b16 %v1556
    %v1618 = vunpack.c.l.b16 %v1557
    %v1619 = vunpack.c.l.b16 %v1558
    %v1620 = vunpack.c.h.b16 %v1558
    %v1621 = vunpack.c.l.b16 %v1559
    %v1622 = vunpack.c.l.b16 %v1560
    %v1623 = vunpack.c.h.b16 %v1560
    %v1624 = vunpack.c.l.b16 %v1561
    %v1625 = vunpack.c.l.b16 %v1562
    %v1626 = vunpack.c.h.b16 %v1562
    %v1627 = vunpack.c.l.b16 %v1563
    %v1628 = vunpack.c.l.b16 %v1564
    %v1629 = vunpack.c.h.b16 %v1564
    %v1630 = vunpack.c.l.b16 %v1565
    %v1631 = vpack.c.b16 %v1601, %v1598
    %v1632 = vpack.c.b16 %v1602, %v1599
    %v1633 = vpack.c.b16 %v1603, %v1600
    %v1634 = vpack.c.b16 %v1607, %v1604
    %v1635 = vpack.c.b16 %v1608, %v1605
    %v1636 = vpack.c.b16 %v1609, %v1606
    %v1637 = vpack.c.b16 %v1613, %v1610
    %v1638 = vpack.c.b16 %v1614, %v1611
    %v1639 = vpack.c.b16 %v1615, %v1612
    %v1640 = vpack.c.b16 %v1619, %v1616
    %v1641 = vpack.c.b16 %v1620, %v1617
    %v1642 = vpack.c.b16 %v1621, %v1618
    %v1643 = vpack.c.b16 %v1625, %v1622
    %v1644 = vpack.c.b16 %v1626, %v1623
    %v1645 = vpack.c.b16 %v1627, %v1624
    %v1646 = vpack.c.b16 %v1628, %v1628
    %v1647 = vpack.c.b16 %v1629, %v1629
    %v1648 = vpack.c.b16 %v1630, %v1630
    %v1665 = vsel %vm1176, %v1575, 0
    %v1668 = vsel %vm1180, %v1646, 0
    %v1671 = vsel %vm1180, %v1647, 0
    %v1674 = vsel %vm1180, %v1648, 0
    %1676 = vmatpush.bf16.msra.mxu0 0
    %1677 = vmatpush.bf16.msra.mxu0 0
    %1678 = vmatpush.bf16.msra.mxu0 %v1668
    %1679 = vmatpush.bf16.msra.mxu0 %v1643
    %1680 = vmatpush.bf16.msra.mxu0 %v1640
    %1681 = vmatpush.bf16.msra.mxu0 %v1637
    %1682 = vmatpush.bf16.msra.mxu0 %v1634
    %1683 = vmatpush.bf16.msra.mxu0 %v1631
    %1684 = vmatmul.bf16.gmra.mxu0 %v1665
    %v1685 = vpop.f32.mrf.mxu0
    %v1686 = vadd.f32 0.0, %v1685
    %v1687 = vpop.f32.mrf.mxu0
    %1688 = vdwg.mxu0
    %1689 = vmatpush.bf16.msra.mxu0 0
    %1690 = vmatpush.bf16.msra.mxu0 0
    %1691 = vmatpush.bf16.msra.mxu0 %v1671
    %1692 = vmatpush.bf16.msra.mxu0 %v1644
    %1693 = vmatpush.bf16.msra.mxu0 %v1641
    %1694 = vmatpush.bf16.msra.mxu0 %v1638
    %1695 = vmatpush.bf16.msra.mxu0 %v1635
    %1696 = vmatpush.bf16.msra.mxu0 %v1632
    %1697 = vmatmul.bf16.gmra.mxu0 %v1665
    %v1698 = vpop.f32.mrf.mxu0
    %v1699 = vadd.f32 0.0, %v1698
    %v1700 = vpop.f32.mrf.mxu0
    %1701 = vdwg.mxu0
    %1702 = vmatpush.bf16.msra.mxu0 0
    %1703 = vmatpush.bf16.msra.mxu0 0
    %1704 = vmatpush.bf16.msra.mxu0 %v1674
    %1705 = vmatpush.bf16.msra.mxu0 %v1645
    %1706 = vmatpush.bf16.msra.mxu0 %v1642
    %1707 = vmatpush.bf16.msra.mxu0 %v1639
    %1708 = vmatpush.bf16.msra.mxu0 %v1636
    %1709 = vmatpush.bf16.msra.mxu0 %v1633
    %1710 = vmatmul.bf16.gmra.mxu0 %v1665
    %v1711 = vpop.f32.mrf.mxu0
    %v1712 = vadd.f32 0.0, %v1711
    %v1713 = vpop.f32.mrf.mxu0
    %1714 = vdwg.mxu0
    %v1715 = vadd.f32 %v1540, %v1686
    %v1716 = vadd.f32 %v1541, %v1699
    %v1717 = vadd.f32 %v1542, %v1712
    %s1718 = scalar_lea.vmem [#allocation2], 528
    %v1719 = vld [vmem:[%s1718] sm:$0xff]
    %v1720 = vld [vmem:[%s1718 + $0x8] sm:$0xf]
    %v1721 = vld [vmem:[%s1718 + $0xc] sm:$0xff]
    %v1722 = vld [vmem:[%s1718 + $0x14] sm:$0xf]
    %v1723 = vld [vmem:[%s1718 + $0x18] sm:$0xff]
    %v1724 = vld [vmem:[%s1718 + $0x20] sm:$0xf]
    %v1725 = vld [vmem:[%s1718 + $0x24] sm:$0xff]
    %v1726 = vld [vmem:[%s1718 + $0x2c] sm:$0xf]
    %v1727 = vld [vmem:[%s1718 + $0x30] sm:$0xff]
    %v1728 = vld [vmem:[%s1718 + $0x38] sm:$0xf]
    %v1729 = vld [vmem:[%s1718 + $0x3c] sm:$0xff]
    %v1730 = vld [vmem:[%s1718 + $0x44] sm:$0xf]
    %v1731 = vld [vmem:[%s1718 + $0x48] sm:$0xff]
    %v1732 = vld [vmem:[%s1718 + $0x50] sm:$0xf]
    %v1733 = vld [vmem:[%s1718 + $0x54] sm:$0xff]
    %v1734 = vld [vmem:[%s1718 + $0x5c] sm:$0xf]
    %v1735 = vld [vmem:[%s1718 + $0x60] sm:$0xff]
    %v1736 = vld [vmem:[%s1718 + $0x68] sm:$0xf]
    %v1737 = vld [vmem:[%s1718 + $0x6c] sm:$0xff]
    %v1738 = vld [vmem:[%s1718 + $0x74] sm:$0xf]
    %v1739 = vld [vmem:[%s1718 + $0x78] sm:$0x33]
    %v1740 = vld [vmem:[%s1718 + $0x80] sm:$0x3]
    %v1741 = vrot.slane %v1393, 1
    %v1764 = vunpack.c.l.b16 %v1719
    %v1765 = vunpack.c.h.b16 %v1719
    %v1766 = vunpack.c.l.b16 %v1720
    %v1767 = vunpack.c.l.b16 %v1721
    %v1768 = vunpack.c.h.b16 %v1721
    %v1769 = vunpack.c.l.b16 %v1722
    %v1770 = vunpack.c.l.b16 %v1723
    %v1771 = vunpack.c.h.b16 %v1723
    %v1772 = vunpack.c.l.b16 %v1724
    %v1773 = vunpack.c.l.b16 %v1725
    %v1774 = vunpack.c.h.b16 %v1725
    %v1775 = vunpack.c.l.b16 %v1726
    %v1776 = vunpack.c.l.b16 %v1727
    %v1777 = vunpack.c.h.b16 %v1727
    %v1778 = vunpack.c.l.b16 %v1728
    %v1779 = vunpack.c.l.b16 %v1729
    %v1780 = vunpack.c.h.b16 %v1729
    %v1781 = vunpack.c.l.b16 %v1730
    %v1782 = vunpack.c.l.b16 %v1731
    %v1783 = vunpack.c.h.b16 %v1731
    %v1784 = vunpack.c.l.b16 %v1732
    %v1785 = vunpack.c.l.b16 %v1733
    %v1786 = vunpack.c.h.b16 %v1733
    %v1787 = vunpack.c.l.b16 %v1734
    %v1788 = vunpack.c.l.b16 %v1735
    %v1789 = vunpack.c.h.b16 %v1735
    %v1790 = vunpack.c.l.b16 %v1736
    %v1791 = vunpack.c.l.b16 %v1737
    %v1792 = vunpack.c.h.b16 %v1737
    %v1793 = vunpack.c.l.b16 %v1738
    %v1794 = vunpack.c.l.b16 %v1739
    %v1795 = vunpack.c.h.b16 %v1739
    %v1796 = vunpack.c.l.b16 %v1740
    %v1797 = vpack.c.b16 %v1767, %v1764
    %v1798 = vpack.c.b16 %v1768, %v1765
    %v1799 = vpack.c.b16 %v1769, %v1766
    %v1800 = vpack.c.b16 %v1773, %v1770
    %v1801 = vpack.c.b16 %v1774, %v1771
    %v1802 = vpack.c.b16 %v1775, %v1772
    %v1803 = vpack.c.b16 %v1779, %v1776
    %v1804 = vpack.c.b16 %v1780, %v1777
    %v1805 = vpack.c.b16 %v1781, %v1778
    %v1806 = vpack.c.b16 %v1785, %v1782
    %v1807 = vpack.c.b16 %v1786, %v1783
    %v1808 = vpack.c.b16 %v1787, %v1784
    %v1809 = vpack.c.b16 %v1791, %v1788
    %v1810 = vpack.c.b16 %v1792, %v1789
    %v1811 = vpack.c.b16 %v1793, %v1790
    %v1812 = vpack.c.b16 %v1794, %v1794
    %v1813 = vpack.c.b16 %v1795, %v1795
    %v1814 = vpack.c.b16 %v1796, %v1796
    %v1831 = vsel %vm1176, %v1741, 0
    %v1834 = vsel %vm1180, %v1812, 0
    %v1837 = vsel %vm1180, %v1813, 0
    %v1840 = vsel %vm1180, %v1814, 0
    %1842 = vmatpush.bf16.msra.mxu0 0
    %1843 = vmatpush.bf16.msra.mxu0 0
    %1844 = vmatpush.bf16.msra.mxu0 %v1834
    %1845 = vmatpush.bf16.msra.mxu0 %v1809
    %1846 = vmatpush.bf16.msra.mxu0 %v1806
    %1847 = vmatpush.bf16.msra.mxu0 %v1803
    %1848 = vmatpush.bf16.msra.mxu0 %v1800
    %1849 = vmatpush.bf16.msra.mxu0 %v1797
    %1850 = vmatmul.bf16.gmra.mxu0 %v1831
    %v1851 = vpop.f32.mrf.mxu0
    %v1852 = vadd.f32 0.0, %v1851
    %v1853 = vpop.f32.mrf.mxu0
    %1854 = vdwg.mxu0
    %1855 = vmatpush.bf16.msra.mxu0 0
    %1856 = vmatpush.bf16.msra.mxu0 0
    %1857 = vmatpush.bf16.msra.mxu0 %v1837
    %1858 = vmatpush.bf16.msra.mxu0 %v1810
    %1859 = vmatpush.bf16.msra.mxu0 %v1807
    %1860 = vmatpush.bf16.msra.mxu0 %v1804
    %1861 = vmatpush.bf16.msra.mxu0 %v1801
    %1862 = vmatpush.bf16.msra.mxu0 %v1798
    %1863 = vmatmul.bf16.gmra.mxu0 %v1831
    %v1864 = vpop.f32.mrf.mxu0
    %v1865 = vadd.f32 0.0, %v1864
    %v1866 = vpop.f32.mrf.mxu0
    %1867 = vdwg.mxu0
    %1868 = vmatpush.bf16.msra.mxu0 0
    %1869 = vmatpush.bf16.msra.mxu0 0
    %1870 = vmatpush.bf16.msra.mxu0 %v1840
    %1871 = vmatpush.bf16.msra.mxu0 %v1811
    %1872 = vmatpush.bf16.msra.mxu0 %v1808
    %1873 = vmatpush.bf16.msra.mxu0 %v1805
    %1874 = vmatpush.bf16.msra.mxu0 %v1802
    %1875 = vmatpush.bf16.msra.mxu0 %v1799
    %1876 = vmatmul.bf16.gmra.mxu0 %v1831
    %v1877 = vpop.f32.mrf.mxu0
    %v1878 = vadd.f32 0.0, %v1877
    %v1879 = vpop.f32.mrf.mxu0
    %1880 = vdwg.mxu0
    %v1881 = vadd.f32 %v1715, %v1852
    %v1882 = vadd.f32 %v1716, %v1865
    %v1883 = vadd.f32 %v1717, %v1878
    %s1884 = scalar_lea.vmem [#allocation2], 660
    %v1885 = vld [vmem:[%s1884] sm:$0xff]
    %v1886 = vld [vmem:[%s1884 + $0x8] sm:$0xf]
    %v1887 = vld [vmem:[%s1884 + $0xc] sm:$0xff]
    %v1888 = vld [vmem:[%s1884 + $0x14] sm:$0xf]
    %v1889 = vld [vmem:[%s1884 + $0x18] sm:$0xff]
    %v1890 = vld [vmem:[%s1884 + $0x20] sm:$0xf]
    %v1891 = vld [vmem:[%s1884 + $0x24] sm:$0xff]
    %v1892 = vld [vmem:[%s1884 + $0x2c] sm:$0xf]
    %v1893 = vld [vmem:[%s1884 + $0x30] sm:$0xff]
    %v1894 = vld [vmem:[%s1884 + $0x38] sm:$0xf]
    %v1895 = vld [vmem:[%s1884 + $0x3c] sm:$0xff]
    %v1896 = vld [vmem:[%s1884 + $0x44] sm:$0xf]
    %v1897 = vld [vmem:[%s1884 + $0x48] sm:$0xff]
    %v1898 = vld [vmem:[%s1884 + $0x50] sm:$0xf]
    %v1899 = vld [vmem:[%s1884 + $0x54] sm:$0xff]
    %v1900 = vld [vmem:[%s1884 + $0x5c] sm:$0xf]
    %v1901 = vld [vmem:[%s1884 + $0x60] sm:$0xff]
    %v1902 = vld [vmem:[%s1884 + $0x68] sm:$0xf]
    %v1903 = vld [vmem:[%s1884 + $0x6c] sm:$0xff]
    %v1904 = vld [vmem:[%s1884 + $0x74] sm:$0xf]
    %v1905 = vld [vmem:[%s1884 + $0x78] sm:$0x33]
    %v1906 = vld [vmem:[%s1884 + $0x80] sm:$0x3]
    %v1907 = vrot.slane %v1568, 1
    %v1930 = vunpack.c.l.b16 %v1885
    %v1931 = vunpack.c.h.b16 %v1885
    %v1932 = vunpack.c.l.b16 %v1886
    %v1933 = vunpack.c.l.b16 %v1887
    %v1934 = vunpack.c.h.b16 %v1887
    %v1935 = vunpack.c.l.b16 %v1888
    %v1936 = vunpack.c.l.b16 %v1889
    %v1937 = vunpack.c.h.b16 %v1889
    %v1938 = vunpack.c.l.b16 %v1890
    %v1939 = vunpack.c.l.b16 %v1891
    %v1940 = vunpack.c.h.b16 %v1891
    %v1941 = vunpack.c.l.b16 %v1892
    %v1942 = vunpack.c.l.b16 %v1893
    %v1943 = vunpack.c.h.b16 %v1893
    %v1944 = vunpack.c.l.b16 %v1894
    %v1945 = vunpack.c.l.b16 %v1895
    %v1946 = vunpack.c.h.b16 %v1895
    %v1947 = vunpack.c.l.b16 %v1896
    %v1948 = vunpack.c.l.b16 %v1897
    %v1949 = vunpack.c.h.b16 %v1897
    %v1950 = vunpack.c.l.b16 %v1898
    %v1951 = vunpack.c.l.b16 %v1899
    %v1952 = vunpack.c.h.b16 %v1899
    %v1953 = vunpack.c.l.b16 %v1900
    %v1954 = vunpack.c.l.b16 %v1901
    %v1955 = vunpack.c.h.b16 %v1901
    %v1956 = vunpack.c.l.b16 %v1902
    %v1957 = vunpack.c.l.b16 %v1903
    %v1958 = vunpack.c.h.b16 %v1903
    %v1959 = vunpack.c.l.b16 %v1904
    %v1960 = vunpack.c.l.b16 %v1905
    %v1961 = vunpack.c.h.b16 %v1905
    %v1962 = vunpack.c.l.b16 %v1906
    %v1963 = vpack.c.b16 %v1933, %v1930
    %v1964 = vpack.c.b16 %v1934, %v1931
    %v1965 = vpack.c.b16 %v1935, %v1932
    %v1966 = vpack.c.b16 %v1939, %v1936
    %v1967 = vpack.c.b16 %v1940, %v1937
    %v1968 = vpack.c.b16 %v1941, %v1938
    %v1969 = vpack.c.b16 %v1945, %v1942
    %v1970 = vpack.c.b16 %v1946, %v1943
    %v1971 = vpack.c.b16 %v1947, %v1944
    %v1972 = vpack.c.b16 %v1951, %v1948
    %v1973 = vpack.c.b16 %v1952, %v1949
    %v1974 = vpack.c.b16 %v1953, %v1950
    %v1975 = vpack.c.b16 %v1957, %v1954
    %v1976 = vpack.c.b16 %v1958, %v1955
    %v1977 = vpack.c.b16 %v1959, %v1956
    %v1978 = vpack.c.b16 %v1960, %v1960
    %v1979 = vpack.c.b16 %v1961, %v1961
    %v1980 = vpack.c.b16 %v1962, %v1962
    %v1997 = vsel %vm1176, %v1907, 0
    %v2000 = vsel %vm1180, %v1978, 0
    %v2003 = vsel %vm1180, %v1979, 0
    %v2006 = vsel %vm1180, %v1980, 0
    %2008 = vmatpush.bf16.msra.mxu0 0
    %2009 = vmatpush.bf16.msra.mxu0 0
    %2010 = vmatpush.bf16.msra.mxu0 %v2000
    %2011 = vmatpush.bf16.msra.mxu0 %v1975
    %2012 = vmatpush.bf16.msra.mxu0 %v1972
    %2013 = vmatpush.bf16.msra.mxu0 %v1969
    %2014 = vmatpush.bf16.msra.mxu0 %v1966
    %2015 = vmatpush.bf16.msra.mxu0 %v1963
    %2016 = vmatmul.bf16.gmra.mxu0 %v1997
    %v2017 = vpop.f32.mrf.mxu0
    %v2018 = vadd.f32 0.0, %v2017
    %v2019 = vpop.f32.mrf.mxu0
    %2020 = vdwg.mxu0
    %2021 = vmatpush.bf16.msra.mxu0 0
    %2022 = vmatpush.bf16.msra.mxu0 0
    %2023 = vmatpush.bf16.msra.mxu0 %v2003
    %2024 = vmatpush.bf16.msra.mxu0 %v1976
    %2025 = vmatpush.bf16.msra.mxu0 %v1973
    %2026 = vmatpush.bf16.msra.mxu0 %v1970
    %2027 = vmatpush.bf16.msra.mxu0 %v1967
    %2028 = vmatpush.bf16.msra.mxu0 %v1964
    %2029 = vmatmul.bf16.gmra.mxu0 %v1997
    %v2030 = vpop.f32.mrf.mxu0
    %v2031 = vadd.f32 0.0, %v2030
    %v2032 = vpop.f32.mrf.mxu0
    %2033 = vdwg.mxu0
    %2034 = vmatpush.bf16.msra.mxu0 0
    %2035 = vmatpush.bf16.msra.mxu0 0
    %2036 = vmatpush.bf16.msra.mxu0 %v2006
    %2037 = vmatpush.bf16.msra.mxu0 %v1977
    %2038 = vmatpush.bf16.msra.mxu0 %v1974
    %2039 = vmatpush.bf16.msra.mxu0 %v1971
    %2040 = vmatpush.bf16.msra.mxu0 %v1968
    %2041 = vmatpush.bf16.msra.mxu0 %v1965
    %2042 = vmatmul.bf16.gmra.mxu0 %v1997
    %v2043 = vpop.f32.mrf.mxu0
    %v2044 = vadd.f32 0.0, %v2043
    %v2045 = vpop.f32.mrf.mxu0
    %2046 = vdwg.mxu0
    %v2047 = vadd.f32 %v1881, %v2018
    %v2048 = vadd.f32 %v1882, %v2031
    %v2049 = vadd.f32 %v1883, %v2044
    %v2050 = vld [vmem:[%s4] sm:$0x7]
    %v2052 = vperm.slane %v2050, 0
    %v2053 = vperm.slane %v2050, 1
    %v2054 = vperm.slane %v2050, 2
    %v2058 = vadd.f32 %v2047, %v2052
    %v2059 = vadd.f32 %v2048, %v2053
    %v2060 = vadd.f32 %v2049, %v2054
    %v2061 = vsub.f32 0.0, %v2058
    %v2062 = vsub.f32 0.0, %v2059
    %v2063 = vsub.f32 0.0, %v2060
    %v2064 = vmul.f32 %v2061, 1.442695
    %v2065 = vpow.pop %v2064
    %v2066 = vmul.f32 %v2062, 1.442695
    %v2067 = vpow.pop %v2066
    %v2068 = vmul.f32 %v2063, 1.442695
    %v2069 = vpow.pop %v2068
    %v2070 = vadd.f32 %v2065, 1.0
    %v2071 = vadd.f32 %v2067, 1.0
    %v2072 = vadd.f32 %v2069, 1.0
    %v2073 = vrcp.pop %v2070
    %v2074 = vmul.f32 %v2070, %v2073
    %v2075 = vsub.f32 1.0, %v2074
    %v2076 = vmul.f32 %v2073, %v2075
    %v2077 = vadd.f32 %v2073, %v2076
    %vm2078 = vweird.f32 %v2070
    %vm2079 = vweird.f32 %v2073
    %vm2080 = vmor %vm2078, %vm2079
    %v2081 = vsel %vm2080, %v2073, %v2077
    %v2082 = vand.u32 2147483647, %v2070
    %vm2083 = vcmp.eq.f32.partialorder %v2082, 8.507059e+37
    %v2084 = vand.u32 %v2070, 2147483648
    %v2085 = vor.u32 1.1754944e-38, %v2084
    %v2086 = vsel %vm2083, %v2085, %v2081
    %v2087 = vmul.f32 1.0, %v2086
    %v2088 = vrcp.pop %v2071
    %v2089 = vmul.f32 %v2071, %v2088
    %v2090 = vsub.f32 1.0, %v2089
    %v2091 = vmul.f32 %v2088, %v2090
    %v2092 = vadd.f32 %v2088, %v2091
    %vm2093 = vweird.f32 %v2071
    %vm2094 = vweird.f32 %v2088
    %vm2095 = vmor %vm2093, %vm2094
    %v2096 = vsel %vm2095, %v2088, %v2092
    %v2097 = vand.u32 2147483647, %v2071
    %vm2098 = vcmp.eq.f32.partialorder %v2097, 8.507059e+37
    %v2099 = vand.u32 %v2071, 2147483648
    %v2100 = vor.u32 1.1754944e-38, %v2099
    %v2101 = vsel %vm2098, %v2100, %v2096
    %v2102 = vmul.f32 1.0, %v2101
    %v2103 = vrcp.pop %v2072
    %v2104 = vmul.f32 %v2072, %v2103
    %v2105 = vsub.f32 1.0, %v2104
    %v2106 = vmul.f32 %v2103, %v2105
    %v2107 = vadd.f32 %v2103, %v2106
    %vm2108 = vweird.f32 %v2072
    %vm2109 = vweird.f32 %v2103
    %vm2110 = vmor %vm2108, %vm2109
    %v2111 = vsel %vm2110, %v2103, %v2107
    %v2112 = vand.u32 2147483647, %v2072
    %vm2113 = vcmp.eq.f32.partialorder %v2112, 8.507059e+37
    %v2114 = vand.u32 %v2072, 2147483648
    %v2115 = vor.u32 1.1754944e-38, %v2114
    %v2116 = vsel %vm2113, %v2115, %v2111
    %v2117 = vmul.f32 1.0, %v2116
    %2120 = vrot.lane.b32.xlu0 %v2087, 48
    %v2121 = vpop.permute.xlu0 %2120
    %2122 = vrot.lane.b32.xlu0 %v2102, 48
    %v2123 = vpop.permute.xlu0 %2122
    %vm2124 = vcmask 392192
    %v2125 = vsel %vm2124, %v2121, %v2123
    %v2127 = vadd.f32 %v2087, %v2125
    %2128 = vrot.lane.b32.xlu0 %v2102, 96
    %v2129 = vpop.permute.xlu0 %2128
    %v2131 = vadd.f32 %v2127, %v2129
    %2133 = vrot.lane.b32.xlu0 %v2102, 16
    %v2134 = vpop.permute.xlu0 %2133
    %2135 = vrot.lane.b32.xlu0 %v2117, 16
    %v2136 = vpop.permute.xlu0 %2135
    %vm2137 = vcmask 130048
    %v2138 = vsel %vm2137, %v2134, %v2136
    %v2140 = vadd.f32 %v2131, %v2138
    %v2141 = vmul.f32 %v2140, 0.25
    %vm2142 = vcmask 651264
    %2143 = vst.msk [vmem:[%s12] sm:$0x1f] %vm2142, %v2141
    %v2144 = vld [vmem:[%s5] sm:$0xff]
    %v2145 = vld [vmem:[%s5 + $0x8] sm:$0xff]
    %v2146 = vld [vmem:[%s5 + $0x10] sm:$0xff]
    %v2147 = vld [vmem:[%s5 + $0x18] sm:$0xff]
    %v2148 = vld [vmem:[%s5 + $0x20] sm:$0xff]
    %v2149 = vld [vmem:[%s5 + $0x28] sm:$0xff]
    %v2150 = vld [vmem:[%s5 + $0x30] sm:$0xff]
    %v2151 = vld [vmem:[%s5 + $0x38] sm:$0xff]
    %v2152 = vld [vmem:[%s5 + $0x40] sm:$0xff]
    %v2153 = vld [vmem:[%s5 + $0x48] sm:$0xff]
    %s2154 = scalar_lea.vmem %s5, 80
    %v2155 = vld [vmem:[%s2154] sm:$0xff]
    %v2156 = vld [vmem:[%s2154 + $0x8] sm:$0xff]
    %v2157 = vld [vmem:[%s2154 + $0x10] sm:$0xff]
    %v2158 = vld [vmem:[%s2154 + $0x18] sm:$0xff]
    %v2159 = vld [vmem:[%s2154 + $0x20] sm:$0xff]
    %v2160 = vld [vmem:[%s2154 + $0x28] sm:$0xff]
    %v2161 = vld [vmem:[%s2154 + $0x30] sm:$0xff]
    %v2162 = vld [vmem:[%s2154 + $0x38] sm:$0xff]
    %v2163 = vld [vmem:[%s2154 + $0x40] sm:$0xff]
    %v2164 = vld [vmem:[%s2154 + $0x48] sm:$0xff]
    %v2166 = vrot.slane %v2141, 1
    %vm2167 = vcmask 654336
    %v2168 = vsel %vm2167, %v2166, 0
    %2170 = vmatpush.msra.mxu0 0.0
    %2171 = vmatpush.msra.mxu0 0.0
    %2172 = vmatpush.msra.mxu0 0.0
    %2173 = vmatpush.msra.mxu0 0.0
    %2174 = vmatpush.msra.mxu0 0.0
    %2175 = vmatpush.msra.mxu0 0.0
    %2176 = vmatpush.msra.mxu0 %v2164
    %2177 = vmatpush.msra.mxu0 %v2163
    %2178 = vmatpush.msra.mxu0 %v2162
    %2179 = vmatpush.msra.mxu0 %v2161
    %2180 = vmatpush.msra.mxu0 %v2160
    %2181 = vmatpush.msra.mxu0 %v2159
    %2182 = vmatpush.msra.mxu0 %v2158
    %2183 = vmatpush.msra.mxu0 %v2157
    %2184 = vmatpush.msra.mxu0 %v2156
    %2185 = vmatpush.msra.mxu0 %v2155
    %2186 = vmatmul.f32.gmra.mxu0 %v2168
    %v2187 = vpop.f32.mrf.mxu0
    %v2188 = vadd.f32 0.0, %v2187
    %2189 = vdwg.mxu0
    %v2190 = vsel %vm2167, %v2141, 0
    %2192 = vmatpush.msra.mxu0 0.0
    %2193 = vmatpush.msra.mxu0 0.0
    %2194 = vmatpush.msra.mxu0 0.0
    %2195 = vmatpush.msra.mxu0 0.0
    %2196 = vmatpush.msra.mxu0 0.0
    %2197 = vmatpush.msra.mxu0 0.0
    %2198 = vmatpush.msra.mxu0 %v2153
    %2199 = vmatpush.msra.mxu0 %v2152
    %2200 = vmatpush.msra.mxu0 %v2151
    %2201 = vmatpush.msra.mxu0 %v2150
    %2202 = vmatpush.msra.mxu0 %v2149
    %2203 = vmatpush.msra.mxu0 %v2148
    %2204 = vmatpush.msra.mxu0 %v2147
    %2205 = vmatpush.msra.mxu0 %v2146
    %2206 = vmatpush.msra.mxu0 %v2145
    %2207 = vmatpush.msra.mxu0 %v2144
    %2208 = vmatmul.f32.gmra.mxu0 %v2190
    %v2209 = vpop.f32.mrf.mxu0
    %v2210 = vadd.f32 %v2188, %v2209
    %2211 = vdwg.mxu0
    %s2212 = scalar_lea.vmem %s5, 160
    %v2213 = vld [vmem:[%s2212] sm:$0xff]
    %v2214 = vld [vmem:[%s2212 + $0x8] sm:$0xff]
    %v2215 = vld [vmem:[%s2212 + $0x10] sm:$0xff]
    %v2216 = vld [vmem:[%s2212 + $0x18] sm:$0xff]
    %v2217 = vld [vmem:[%s2212 + $0x20] sm:$0xff]
    %v2218 = vld [vmem:[%s2212 + $0x28] sm:$0xff]
    %v2219 = vld [vmem:[%s2212 + $0x30] sm:$0xff]
    %v2220 = vld [vmem:[%s2212 + $0x38] sm:$0xff]
    %v2221 = vld [vmem:[%s2212 + $0x40] sm:$0xff]
    %v2222 = vld [vmem:[%s2212 + $0x48] sm:$0xff]
    %v2223 = vrot.slane %v2141, 2
    %v2224 = vsel %vm2167, %v2223, 0
    %2226 = vmatpush.msra.mxu0 0.0
    %2227 = vmatpush.msra.mxu0 0.0
    %2228 = vmatpush.msra.mxu0 0.0
    %2229 = vmatpush.msra.mxu0 0.0
    %2230 = vmatpush.msra.mxu0 0.0
    %2231 = vmatpush.msra.mxu0 0.0
    %2232 = vmatpush.msra.mxu0 %v2222
    %2233 = vmatpush.msra.mxu0 %v2221
    %2234 = vmatpush.msra.mxu0 %v2220
    %2235 = vmatpush.msra.mxu0 %v2219
    %2236 = vmatpush.msra.mxu0 %v2218
    %2237 = vmatpush.msra.mxu0 %v2217
    %2238 = vmatpush.msra.mxu0 %v2216
    %2239 = vmatpush.msra.mxu0 %v2215
    %2240 = vmatpush.msra.mxu0 %v2214
    %2241 = vmatpush.msra.mxu0 %v2213
    %2242 = vmatmul.f32.gmra.mxu0 %v2224
    %v2243 = vpop.f32.mrf.mxu0
    %v2244 = vadd.f32 0.0, %v2243
    %2245 = vdwg.mxu0
    %v2246 = vadd.f32 %v2210, %v2244
    %s2247 = scalar_lea.vmem %s5, 240
    %v2248 = vld [vmem:[%s2247] sm:$0xff]
    %v2249 = vld [vmem:[%s2247 + $0x8] sm:$0xff]
    %v2250 = vld [vmem:[%s2247 + $0x10] sm:$0xff]
    %v2251 = vld [vmem:[%s2247 + $0x18] sm:$0xff]
    %v2252 = vld [vmem:[%s2247 + $0x20] sm:$0xff]
    %v2253 = vld [vmem:[%s2247 + $0x28] sm:$0xff]
    %v2254 = vld [vmem:[%s2247 + $0x30] sm:$0xff]
    %v2255 = vld [vmem:[%s2247 + $0x38] sm:$0xff]
    %v2256 = vld [vmem:[%s2247 + $0x40] sm:$0xff]
    %v2257 = vld [vmem:[%s2247 + $0x48] sm:$0xff]
    %v2258 = vrot.slane %v2141, 3
    %v2259 = vsel %vm2167, %v2258, 0
    %2261 = vmatpush.msra.mxu0 0.0
    %2262 = vmatpush.msra.mxu0 0.0
    %2263 = vmatpush.msra.mxu0 0.0
    %2264 = vmatpush.msra.mxu0 0.0
    %2265 = vmatpush.msra.mxu0 0.0
    %2266 = vmatpush.msra.mxu0 0.0
    %2267 = vmatpush.msra.mxu0 %v2257
    %2268 = vmatpush.msra.mxu0 %v2256
    %2269 = vmatpush.msra.mxu0 %v2255
    %2270 = vmatpush.msra.mxu0 %v2254
    %2271 = vmatpush.msra.mxu0 %v2253
    %2272 = vmatpush.msra.mxu0 %v2252
    %2273 = vmatpush.msra.mxu0 %v2251
    %2274 = vmatpush.msra.mxu0 %v2250
    %2275 = vmatpush.msra.mxu0 %v2249
    %2276 = vmatpush.msra.mxu0 %v2248
    %2277 = vmatmul.f32.gmra.mxu0 %v2259
    %v2278 = vpop.f32.mrf.mxu0
    %v2279 = vadd.f32 0.0, %v2278
    %2280 = vdwg.mxu0
    %v2281 = vadd.f32 %v2246, %v2279
    %s2282 = scalar_lea.vmem %s5, 320
    %v2283 = vld [vmem:[%s2282] sm:$0xff]
    %v2284 = vld [vmem:[%s2282 + $0x8] sm:$0xff]
    %v2285 = vld [vmem:[%s2282 + $0x10] sm:$0xff]
    %v2286 = vld [vmem:[%s2282 + $0x18] sm:$0xff]
    %v2287 = vld [vmem:[%s2282 + $0x20] sm:$0xff]
    %v2288 = vld [vmem:[%s2282 + $0x28] sm:$0xff]
    %v2289 = vld [vmem:[%s2282 + $0x30] sm:$0xff]
    %v2290 = vld [vmem:[%s2282 + $0x38] sm:$0xff]
    %v2291 = vld [vmem:[%s2282 + $0x40] sm:$0xff]
    %v2292 = vld [vmem:[%s2282 + $0x48] sm:$0xff]
    %v2293 = vrot.slane %v2141, 4
    %v2294 = vsel %vm2167, %v2293, 0
    %2296 = vmatpush.msra.mxu0 0.0
    %2297 = vmatpush.msra.mxu0 0.0
    %2298 = vmatpush.msra.mxu0 0.0
    %2299 = vmatpush.msra.mxu0 0.0
    %2300 = vmatpush.msra.mxu0 0.0
    %2301 = vmatpush.msra.mxu0 0.0
    %2302 = vmatpush.msra.mxu0 %v2292
    %2303 = vmatpush.msra.mxu0 %v2291
    %2304 = vmatpush.msra.mxu0 %v2290
    %2305 = vmatpush.msra.mxu0 %v2289
    %2306 = vmatpush.msra.mxu0 %v2288
    %2307 = vmatpush.msra.mxu0 %v2287
    %2308 = vmatpush.msra.mxu0 %v2286
    %2309 = vmatpush.msra.mxu0 %v2285
    %2310 = vmatpush.msra.mxu0 %v2284
    %2311 = vmatpush.msra.mxu0 %v2283
    %2312 = vmatmul.f32.gmra.mxu0 %v2294
    %v2313 = vpop.f32.mrf.mxu0
    %v2314 = vadd.f32 0.0, %v2313
    %2315 = vdwg.mxu0
    %v2316 = vadd.f32 %v2281, %v2314
    %v2317 = vld [vmem:[%s6] sm:$0x1]
    %v2318 = vadd.f32 %v2316, %v2317
    %v2319 = vsub.f32 0.0, %v2318
    %v2320 = vmul.f32 %v2319, 1.442695
    %v2321 = vpow.pop %v2320
    %v2322 = vadd.f32 %v2321, 1.0
    %v2323 = vrcp.pop %v2322
    %v2324 = vmul.f32 %v2322, %v2323
    %v2325 = vsub.f32 1.0, %v2324
    %v2326 = vmul.f32 %v2323, %v2325
    %v2327 = vadd.f32 %v2323, %v2326
    %vm2328 = vweird.f32 %v2322
    %vm2329 = vweird.f32 %v2323
    %vm2330 = vmor %vm2328, %vm2329
    %v2331 = vsel %vm2330, %v2323, %v2327
    %v2332 = vand.u32 2147483647, %v2322
    %vm2333 = vcmp.eq.f32.partialorder %v2332, 8.507059e+37
    %v2334 = vand.u32 %v2322, 2147483648
    %v2335 = vor.u32 1.1754944e-38, %v2334
    %v2336 = vsel %vm2333, %v2335, %v2331
    %v2337 = vmul.f32 1.0, %v2336
    %v2338 = vld [vmem:[%s7] sm:$0xff]
    %v2339 = vld [vmem:[%s7 + $0x8] sm:$0xff]
    %v2340 = vld [vmem:[%s7 + $0x10] sm:$0xff]
    %v2341 = vld [vmem:[%s7 + $0x18] sm:$0xff]
    %v2342 = vld [vmem:[%s7 + $0x20] sm:$0xff]
    %v2343 = vld [vmem:[%s7 + $0x28] sm:$0xff]
    %v2344 = vld [vmem:[%s7 + $0x30] sm:$0xff]
    %v2345 = vld [vmem:[%s7 + $0x38] sm:$0xff]
    %v2346 = vld [vmem:[%s7 + $0x40] sm:$0xff]
    %v2347 = vld [vmem:[%s7 + $0x48] sm:$0xff]
    %v2348 = vld [vmem:[%s7 + $0x50] sm:$0xff]
    %v2349 = vld [vmem:[%s7 + $0x58] sm:$0xff]
    %v2350 = vld [vmem:[%s7 + $0x60] sm:$0xff]
    %v2351 = vld [vmem:[%s7 + $0x68] sm:$0xff]
    %v2352 = vld [vmem:[%s7 + $0x70] sm:$0xff]
    %v2353 = vld [vmem:[%s8] sm:$0x1]
    %vm2354 = vcmask 982016
    %v2356 = vsel %vm2354, %v2337, 0
    %2358 = vmatpush.msra.mxu0 0.0
    %2359 = vmatpush.msra.mxu0 %v2352
    %2360 = vmatpush.msra.mxu0 %v2351
    %2361 = vmatpush.msra.mxu0 %v2350
    %2362 = vmatpush.msra.mxu0 %v2349
    %2363 = vmatpush.msra.mxu0 %v2348
    %2364 = vmatpush.msra.mxu0 %v2347
    %2365 = vmatpush.msra.mxu0 %v2346
    %2366 = vmatpush.msra.mxu0 %v2345
    %2367 = vmatpush.msra.mxu0 %v2344
    %2368 = vmatpush.msra.mxu0 %v2343
    %2369 = vmatpush.msra.mxu0 %v2342
    %2370 = vmatpush.msra.mxu0 %v2341
    %2371 = vmatpush.msra.mxu0 %v2340
    %2372 = vmatpush.msra.mxu0 %v2339
    %2373 = vmatpush.msra.mxu0 %v2338
    %2374 = vmatmul.f32.gmra.mxu0 %v2356
    %v2375 = vpop.f32.mrf.mxu0
    %v2376 = vadd.f32 %v2353, %v2375
    %2377 = vdwg.mxu0
    %v2378 = vsub.f32 0.0, %v2376
    %v2379 = vmul.f32 %v2378, 1.442695
    %v2380 = vpow.pop %v2379
    %v2381 = vadd.f32 %v2380, 1.0
    %v2382 = vrcp.pop %v2381
    %v2383 = vmul.f32 %v2381, %v2382
    %v2384 = vsub.f32 1.0, %v2383
    %v2385 = vmul.f32 %v2382, %v2384
    %v2386 = vadd.f32 %v2382, %v2385
    %vm2387 = vweird.f32 %v2381
    %vm2388 = vweird.f32 %v2382
    %vm2389 = vmor %vm2387, %vm2388
    %v2390 = vsel %vm2389, %v2382, %v2386
    %v2391 = vand.u32 2147483647, %v2381
    %vm2392 = vcmp.eq.f32.partialorder %v2391, 8.507059e+37
    %v2393 = vand.u32 %v2381, 2147483648
    %v2394 = vor.u32 1.1754944e-38, %v2393
    %v2395 = vsel %vm2392, %v2394, %v2390
    %v2396 = vmul.f32 1.0, %v2395
    %v2397 = vld [vmem:[%s9] sm:$0xff]
    %v2398 = vld [vmem:[%s9 + $0x8] sm:$0xff]
    %v2399 = vld [vmem:[%s9 + $0x10] sm:$0xff]
    %v2400 = vld [vmem:[%s9 + $0x18] sm:$0xff]
    %v2401 = vld [vmem:[%s9 + $0x20] sm:$0xff]
    %v2402 = vld [vmem:[%s9 + $0x28] sm:$0xff]
    %v2403 = vld [vmem:[%s9 + $0x30] sm:$0xff]
    %v2404 = vld [vmem:[%s9 + $0x38] sm:$0xff]
    %v2405 = vld [vmem:[%s9 + $0x40] sm:$0xff]
    %v2406 = vld [vmem:[%s9 + $0x48] sm:$0xff]
    %v2407 = vld [vmem:[%s9 + $0x50] sm:$0xf]
    %v2408 = vld [vmem:[%s10] sm:$0x1]
    %v2410 = vsel %vm1176, %v2396, 0
    %vm2412 = vcmask 1043456
    %v2414 = vsel %vm2412, %v2407, 0
    %2416 = vmatpush.msra.mxu0 0.0
    %2417 = vmatpush.msra.mxu0 0.0
    %2418 = vmatpush.msra.mxu0 0.0
    %2419 = vmatpush.msra.mxu0 0.0
    %2420 = vmatpush.msra.mxu0 0.0
    %2421 = vmatpush.msra.mxu0 %v2414
    %2422 = vmatpush.msra.mxu0 %v2406
    %2423 = vmatpush.msra.mxu0 %v2405
    %2424 = vmatpush.msra.mxu0 %v2404
    %2425 = vmatpush.msra.mxu0 %v2403
    %2426 = vmatpush.msra.mxu0 %v2402
    %2427 = vmatpush.msra.mxu0 %v2401
    %2428 = vmatpush.msra.mxu0 %v2400
    %2429 = vmatpush.msra.mxu0 %v2399
    %2430 = vmatpush.msra.mxu0 %v2398
    %2431 = vmatpush.msra.mxu0 %v2397
    %2432 = vmatmul.f32.gmra.mxu0 %v2410
    %v2433 = vpop.f32.mrf.mxu0
    %v2434 = vadd.f32 %v2408, %v2433
    %2435 = vdwg.mxu0
    %vm2436 = vcmask 73728
    %2437 = vst.msk [vmem:[#allocation5] sm:$0x1] %vm2436, %v2434
    %s2438 = scalar_lea.vmem %s0, 4
    %v2439 = vld [vmem:[%s2438] sm:$0xf]
    %v2440 = vld [vmem:[%s1] sm:$0xff]
    %v2441 = vld [vmem:[%s1 + $0x8] sm:$0xf]
    %v2442 = vld [vmem:[%s1 + $0xc] sm:$0xff]
    %v2443 = vld [vmem:[%s1 + $0x14] sm:$0xf]
    %v2444 = vld [vmem:[%s1 + $0x18] sm:$0xff]
    %v2445 = vld [vmem:[%s1 + $0x20] sm:$0xf]
    %v2446 = vld [vmem:[%s1 + $0x24] sm:$0xff]
    %v2447 = vld [vmem:[%s1 + $0x2c] sm:$0xf]
    %s2448 = scalar_lea.vmem %s0, 12
    %v2449 = vld [vmem:[%s2448] sm:$0xf]
    %v2450 = vld [vmem:[%s69] sm:$0xff]
    %v2451 = vld [vmem:[%s69 + $0x8] sm:$0xf]
    %v2452 = vld [vmem:[%s69 + $0xc] sm:$0xff]
    %v2453 = vld [vmem:[%s69 + $0x14] sm:$0xf]
    %v2454 = vld [vmem:[%s69 + $0x18] sm:$0xff]
    %v2455 = vld [vmem:[%s69 + $0x20] sm:$0xf]
    %v2456 = vld [vmem:[%s69 + $0x24] sm:$0xff]
    %v2457 = vld [vmem:[%s69 + $0x2c] sm:$0xf]
    %v2466 = vunpack.c.l.b16 %v2450
    %v2467 = vunpack.c.h.b16 %v2450
    %v2468 = vunpack.c.l.b16 %v2451
    %v2469 = vunpack.c.l.b16 %v2452
    %v2470 = vunpack.c.h.b16 %v2452
    %v2471 = vunpack.c.l.b16 %v2453
    %v2472 = vunpack.c.l.b16 %v2454
    %v2473 = vunpack.c.h.b16 %v2454
    %v2474 = vunpack.c.l.b16 %v2455
    %v2475 = vunpack.c.l.b16 %v2456
    %v2476 = vunpack.c.h.b16 %v2456
    %v2477 = vunpack.c.l.b16 %v2457
    %v2478 = vpack.c.b16 %v2469, %v2466
    %v2479 = vpack.c.b16 %v2470, %v2467
    %v2480 = vpack.c.b16 %v2471, %v2468
    %v2481 = vpack.c.b16 %v2475, %v2472
    %v2482 = vpack.c.b16 %v2476, %v2473
    %v2483 = vpack.c.b16 %v2477, %v2474
    %v2491 = vsel %vm110, %v2449, 0
    %2493 = vmatpush.bf16.msra.mxu0 0
    %2494 = vmatpush.bf16.msra.mxu0 0
    %2495 = vmatpush.bf16.msra.mxu0 0
    %2496 = vmatpush.bf16.msra.mxu0 0
    %2497 = vmatpush.bf16.msra.mxu0 0
    %2498 = vmatpush.bf16.msra.mxu0 0
    %2499 = vmatpush.bf16.msra.mxu0 %v2481
    %2500 = vmatpush.bf16.msra.mxu0 %v2478
    %2501 = vmatmul.bf16.gmra.mxu0 %v2491
    %v2502 = vpop.f32.mrf.mxu0
    %v2503 = vadd.f32 0.0, %v2502
    %v2504 = vpop.f32.mrf.mxu0
    %2505 = vdwg.mxu0
    %2506 = vmatpush.bf16.msra.mxu0 0
    %2507 = vmatpush.bf16.msra.mxu0 0
    %2508 = vmatpush.bf16.msra.mxu0 0
    %2509 = vmatpush.bf16.msra.mxu0 0
    %2510 = vmatpush.bf16.msra.mxu0 0
    %2511 = vmatpush.bf16.msra.mxu0 0
    %2512 = vmatpush.bf16.msra.mxu0 %v2482
    %2513 = vmatpush.bf16.msra.mxu0 %v2479
    %2514 = vmatmul.bf16.gmra.mxu0 %v2491
    %v2515 = vpop.f32.mrf.mxu0
    %v2516 = vadd.f32 0.0, %v2515
    %v2517 = vpop.f32.mrf.mxu0
    %2518 = vdwg.mxu0
    %2519 = vmatpush.bf16.msra.mxu0 0
    %2520 = vmatpush.bf16.msra.mxu0 0
    %2521 = vmatpush.bf16.msra.mxu0 0
    %2522 = vmatpush.bf16.msra.mxu0 0
    %2523 = vmatpush.bf16.msra.mxu0 0
    %2524 = vmatpush.bf16.msra.mxu0 0
    %2525 = vmatpush.bf16.msra.mxu0 %v2483
    %2526 = vmatpush.bf16.msra.mxu0 %v2480
    %2527 = vmatmul.bf16.gmra.mxu0 %v2491
    %v2528 = vpop.f32.mrf.mxu0
    %v2529 = vadd.f32 0.0, %v2528
    %v2530 = vpop.f32.mrf.mxu0
    %2531 = vdwg.mxu0
    %v2540 = vunpack.c.l.b16 %v2440
    %v2541 = vunpack.c.h.b16 %v2440
    %v2542 = vunpack.c.l.b16 %v2441
    %v2543 = vunpack.c.l.b16 %v2442
    %v2544 = vunpack.c.h.b16 %v2442
    %v2545 = vunpack.c.l.b16 %v2443
    %v2546 = vunpack.c.l.b16 %v2444
    %v2547 = vunpack.c.h.b16 %v2444
    %v2548 = vunpack.c.l.b16 %v2445
    %v2549 = vunpack.c.l.b16 %v2446
    %v2550 = vunpack.c.h.b16 %v2446
    %v2551 = vunpack.c.l.b16 %v2447
    %v2552 = vpack.c.b16 %v2543, %v2540
    %v2553 = vpack.c.b16 %v2544, %v2541
    %v2554 = vpack.c.b16 %v2545, %v2542
    %v2555 = vpack.c.b16 %v2549, %v2546
    %v2556 = vpack.c.b16 %v2550, %v2547
    %v2557 = vpack.c.b16 %v2551, %v2548
    %v2565 = vsel %vm110, %v2439, 0
    %2567 = vmatpush.bf16.msra.mxu0 0
    %2568 = vmatpush.bf16.msra.mxu0 0
    %2569 = vmatpush.bf16.msra.mxu0 0
    %2570 = vmatpush.bf16.msra.mxu0 0
    %2571 = vmatpush.bf16.msra.mxu0 0
    %2572 = vmatpush.bf16.msra.mxu0 0
    %2573 = vmatpush.bf16.msra.mxu0 %v2555
    %2574 = vmatpush.bf16.msra.mxu0 %v2552
    %2575 = vmatmul.bf16.gmra.mxu0 %v2565
    %v2576 = vpop.f32.mrf.mxu0
    %v2577 = vadd.f32 %v2503, %v2576
    %v2578 = vpop.f32.mrf.mxu0
    %2579 = vdwg.mxu0
    %2580 = vmatpush.bf16.msra.mxu0 0
    %2581 = vmatpush.bf16.msra.mxu0 0
    %2582 = vmatpush.bf16.msra.mxu0 0
    %2583 = vmatpush.bf16.msra.mxu0 0
    %2584 = vmatpush.bf16.msra.mxu0 0
    %2585 = vmatpush.bf16.msra.mxu0 0
    %2586 = vmatpush.bf16.msra.mxu0 %v2556
    %2587 = vmatpush.bf16.msra.mxu0 %v2553
    %2588 = vmatmul.bf16.gmra.mxu0 %v2565
    %v2589 = vpop.f32.mrf.mxu0
    %v2590 = vadd.f32 %v2516, %v2589
    %v2591 = vpop.f32.mrf.mxu0
    %2592 = vdwg.mxu0
    %2593 = vmatpush.bf16.msra.mxu0 0
    %2594 = vmatpush.bf16.msra.mxu0 0
    %2595 = vmatpush.bf16.msra.mxu0 0
    %2596 = vmatpush.bf16.msra.mxu0 0
    %2597 = vmatpush.bf16.msra.mxu0 0
    %2598 = vmatpush.bf16.msra.mxu0 0
    %2599 = vmatpush.bf16.msra.mxu0 %v2557
    %2600 = vmatpush.bf16.msra.mxu0 %v2554
    %2601 = vmatmul.bf16.gmra.mxu0 %v2565
    %v2602 = vpop.f32.mrf.mxu0
    %v2603 = vadd.f32 %v2529, %v2602
    %v2604 = vpop.f32.mrf.mxu0
    %2605 = vdwg.mxu0
    %s2606 = scalar_lea.vmem %s0, 20
    %v2607 = vld [vmem:[%s2606] sm:$0xf]
    %v2608 = vld [vmem:[%s229] sm:$0xff]
    %v2609 = vld [vmem:[%s229 + $0x8] sm:$0xf]
    %v2610 = vld [vmem:[%s229 + $0xc] sm:$0xff]
    %v2611 = vld [vmem:[%s229 + $0x14] sm:$0xf]
    %v2612 = vld [vmem:[%s229 + $0x18] sm:$0xff]
    %v2613 = vld [vmem:[%s229 + $0x20] sm:$0xf]
    %v2614 = vld [vmem:[%s229 + $0x24] sm:$0xff]
    %v2615 = vld [vmem:[%s229 + $0x2c] sm:$0xf]
    %v2624 = vunpack.c.l.b16 %v2608
    %v2625 = vunpack.c.h.b16 %v2608
    %v2626 = vunpack.c.l.b16 %v2609
    %v2627 = vunpack.c.l.b16 %v2610
    %v2628 = vunpack.c.h.b16 %v2610
    %v2629 = vunpack.c.l.b16 %v2611
    %v2630 = vunpack.c.l.b16 %v2612
    %v2631 = vunpack.c.h.b16 %v2612
    %v2632 = vunpack.c.l.b16 %v2613
    %v2633 = vunpack.c.l.b16 %v2614
    %v2634 = vunpack.c.h.b16 %v2614
    %v2635 = vunpack.c.l.b16 %v2615
    %v2636 = vpack.c.b16 %v2627, %v2624
    %v2637 = vpack.c.b16 %v2628, %v2625
    %v2638 = vpack.c.b16 %v2629, %v2626
    %v2639 = vpack.c.b16 %v2633, %v2630
    %v2640 = vpack.c.b16 %v2634, %v2631
    %v2641 = vpack.c.b16 %v2635, %v2632
    %v2649 = vsel %vm110, %v2607, 0
    %2651 = vmatpush.bf16.msra.mxu0 0
    %2652 = vmatpush.bf16.msra.mxu0 0
    %2653 = vmatpush.bf16.msra.mxu0 0
    %2654 = vmatpush.bf16.msra.mxu0 0
    %2655 = vmatpush.bf16.msra.mxu0 0
    %2656 = vmatpush.bf16.msra.mxu0 0
    %2657 = vmatpush.bf16.msra.mxu0 %v2639
    %2658 = vmatpush.bf16.msra.mxu0 %v2636
    %2659 = vmatmul.bf16.gmra.mxu0 %v2649
    %v2660 = vpop.f32.mrf.mxu0
    %v2661 = vadd.f32 0.0, %v2660
    %v2662 = vpop.f32.mrf.mxu0
    %2663 = vdwg.mxu0
    %2664 = vmatpush.bf16.msra.mxu0 0
    %2665 = vmatpush.bf16.msra.mxu0 0
    %2666 = vmatpush.bf16.msra.mxu0 0
    %2667 = vmatpush.bf16.msra.mxu0 0
    %2668 = vmatpush.bf16.msra.mxu0 0
    %2669 = vmatpush.bf16.msra.mxu0 0
    %2670 = vmatpush.bf16.msra.mxu0 %v2640
    %2671 = vmatpush.bf16.msra.mxu0 %v2637
    %2672 = vmatmul.bf16.gmra.mxu0 %v2649
    %v2673 = vpop.f32.mrf.mxu0
    %v2674 = vadd.f32 0.0, %v2673
    %v2675 = vpop.f32.mrf.mxu0
    %2676 = vdwg.mxu0
    %2677 = vmatpush.bf16.msra.mxu0 0
    %2678 = vmatpush.bf16.msra.mxu0 0
    %2679 = vmatpush.bf16.msra.mxu0 0
    %2680 = vmatpush.bf16.msra.mxu0 0
    %2681 = vmatpush.bf16.msra.mxu0 0
    %2682 = vmatpush.bf16.msra.mxu0 0
    %2683 = vmatpush.bf16.msra.mxu0 %v2641
    %2684 = vmatpush.bf16.msra.mxu0 %v2638
    %2685 = vmatmul.bf16.gmra.mxu0 %v2649
    %v2686 = vpop.f32.mrf.mxu0
    %v2687 = vadd.f32 0.0, %v2686
    %v2688 = vpop.f32.mrf.mxu0
    %2689 = vdwg.mxu0
    %v2690 = vadd.f32 %v2577, %v2661
    %v2691 = vadd.f32 %v2590, %v2674
    %v2692 = vadd.f32 %v2603, %v2687
    %s2693 = scalar_lea.vmem %s0, 28
    %v2694 = vld [vmem:[%s2693] sm:$0xf]
    %v2695 = vld [vmem:[%s317] sm:$0xff]
    %v2696 = vld [vmem:[%s317 + $0x8] sm:$0xf]
    %v2697 = vld [vmem:[%s317 + $0xc] sm:$0xff]
    %v2698 = vld [vmem:[%s317 + $0x14] sm:$0xf]
    %v2699 = vld [vmem:[%s317 + $0x18] sm:$0xff]
    %v2700 = vld [vmem:[%s317 + $0x20] sm:$0xf]
    %v2701 = vld [vmem:[%s317 + $0x24] sm:$0xff]
    %v2702 = vld [vmem:[%s317 + $0x2c] sm:$0xf]
    %v2711 = vunpack.c.l.b16 %v2695
    %v2712 = vunpack.c.h.b16 %v2695
    %v2713 = vunpack.c.l.b16 %v2696
    %v2714 = vunpack.c.l.b16 %v2697
    %v2715 = vunpack.c.h.b16 %v2697
    %v2716 = vunpack.c.l.b16 %v2698
    %v2717 = vunpack.c.l.b16 %v2699
    %v2718 = vunpack.c.h.b16 %v2699
    %v2719 = vunpack.c.l.b16 %v2700
    %v2720 = vunpack.c.l.b16 %v2701
    %v2721 = vunpack.c.h.b16 %v2701
    %v2722 = vunpack.c.l.b16 %v2702
    %v2723 = vpack.c.b16 %v2714, %v2711
    %v2724 = vpack.c.b16 %v2715, %v2712
    %v2725 = vpack.c.b16 %v2716, %v2713
    %v2726 = vpack.c.b16 %v2720, %v2717
    %v2727 = vpack.c.b16 %v2721, %v2718
    %v2728 = vpack.c.b16 %v2722, %v2719
    %v2736 = vsel %vm110, %v2694, 0
    %2738 = vmatpush.bf16.msra.mxu0 0
    %2739 = vmatpush.bf16.msra.mxu0 0
    %2740 = vmatpush.bf16.msra.mxu0 0
    %2741 = vmatpush.bf16.msra.mxu0 0
    %2742 = vmatpush.bf16.msra.mxu0 0
    %2743 = vmatpush.bf16.msra.mxu0 0
    %2744 = vmatpush.bf16.msra.mxu0 %v2726
    %2745 = vmatpush.bf16.msra.mxu0 %v2723
    %2746 = vmatmul.bf16.gmra.mxu0 %v2736
    %v2747 = vpop.f32.mrf.mxu0
    %v2748 = vadd.f32 0.0, %v2747
    %v2749 = vpop.f32.mrf.mxu0
    %2750 = vdwg.mxu0
    %2751 = vmatpush.bf16.msra.mxu0 0
    %2752 = vmatpush.bf16.msra.mxu0 0
    %2753 = vmatpush.bf16.msra.mxu0 0
    %2754 = vmatpush.bf16.msra.mxu0 0
    %2755 = vmatpush.bf16.msra.mxu0 0
    %2756 = vmatpush.bf16.msra.mxu0 0
    %2757 = vmatpush.bf16.msra.mxu0 %v2727
    %2758 = vmatpush.bf16.msra.mxu0 %v2724
    %2759 = vmatmul.bf16.gmra.mxu0 %v2736
    %v2760 = vpop.f32.mrf.mxu0
    %v2761 = vadd.f32 0.0, %v2760
    %v2762 = vpop.f32.mrf.mxu0
    %2763 = vdwg.mxu0
    %2764 = vmatpush.bf16.msra.mxu0 0
    %2765 = vmatpush.bf16.msra.mxu0 0
    %2766 = vmatpush.bf16.msra.mxu0 0
    %2767 = vmatpush.bf16.msra.mxu0 0
    %2768 = vmatpush.bf16.msra.mxu0 0
    %2769 = vmatpush.bf16.msra.mxu0 0
    %2770 = vmatpush.bf16.msra.mxu0 %v2728
    %2771 = vmatpush.bf16.msra.mxu0 %v2725
    %2772 = vmatmul.bf16.gmra.mxu0 %v2736
    %v2773 = vpop.f32.mrf.mxu0
    %v2774 = vadd.f32 0.0, %v2773
    %v2775 = vpop.f32.mrf.mxu0
    %2776 = vdwg.mxu0
    %v2777 = vadd.f32 %v2690, %v2748
    %v2778 = vadd.f32 %v2691, %v2761
    %v2779 = vadd.f32 %v2692, %v2774
    %v2780 = vld [vmem:[%s403] sm:$0xff]
    %v2781 = vld [vmem:[%s403 + $0x8] sm:$0xf]
    %v2782 = vld [vmem:[%s403 + $0xc] sm:$0xff]
    %v2783 = vld [vmem:[%s403 + $0x14] sm:$0xf]
    %v2784 = vld [vmem:[%s403 + $0x18] sm:$0xff]
    %v2785 = vld [vmem:[%s403 + $0x20] sm:$0xf]
    %v2786 = vld [vmem:[%s403 + $0x24] sm:$0xff]
    %v2787 = vld [vmem:[%s403 + $0x2c] sm:$0xf]
    %v2789 = vunpack.c.l.b16 %v2439
    %v2790 = vpack.c.b16 %v2789, %v2789
    %v2792 = vshrl.u32 %v2790, 16
    %v2794 = vshll.u32 %v2790, 16
    %v2796 = vrot.slane %v2794, 1
    %v2797 = vor.u32 %v2792, %v2796
    %v2806 = vunpack.c.l.b16 %v2780
    %v2807 = vunpack.c.h.b16 %v2780
    %v2808 = vunpack.c.l.b16 %v2781
    %v2809 = vunpack.c.l.b16 %v2782
    %v2810 = vunpack.c.h.b16 %v2782
    %v2811 = vunpack.c.l.b16 %v2783
    %v2812 = vunpack.c.l.b16 %v2784
    %v2813 = vunpack.c.h.b16 %v2784
    %v2814 = vunpack.c.l.b16 %v2785
    %v2815 = vunpack.c.l.b16 %v2786
    %v2816 = vunpack.c.h.b16 %v2786
    %v2817 = vunpack.c.l.b16 %v2787
    %v2818 = vpack.c.b16 %v2809, %v2806
    %v2819 = vpack.c.b16 %v2810, %v2807
    %v2820 = vpack.c.b16 %v2811, %v2808
    %v2821 = vpack.c.b16 %v2815, %v2812
    %v2822 = vpack.c.b16 %v2816, %v2813
    %v2823 = vpack.c.b16 %v2817, %v2814
    %v2831 = vsel %vm110, %v2797, 0
    %2833 = vmatpush.bf16.msra.mxu0 0
    %2834 = vmatpush.bf16.msra.mxu0 0
    %2835 = vmatpush.bf16.msra.mxu0 0
    %2836 = vmatpush.bf16.msra.mxu0 0
    %2837 = vmatpush.bf16.msra.mxu0 0
    %2838 = vmatpush.bf16.msra.mxu0 0
    %2839 = vmatpush.bf16.msra.mxu0 %v2821
    %2840 = vmatpush.bf16.msra.mxu0 %v2818
    %2841 = vmatmul.bf16.gmra.mxu0 %v2831
    %v2842 = vpop.f32.mrf.mxu0
    %v2843 = vadd.f32 0.0, %v2842
    %v2844 = vpop.f32.mrf.mxu0
    %2845 = vdwg.mxu0
    %2846 = vmatpush.bf16.msra.mxu0 0
    %2847 = vmatpush.bf16.msra.mxu0 0
    %2848 = vmatpush.bf16.msra.mxu0 0
    %2849 = vmatpush.bf16.msra.mxu0 0
    %2850 = vmatpush.bf16.msra.mxu0 0
    %2851 = vmatpush.bf16.msra.mxu0 0
    %2852 = vmatpush.bf16.msra.mxu0 %v2822
    %2853 = vmatpush.bf16.msra.mxu0 %v2819
    %2854 = vmatmul.bf16.gmra.mxu0 %v2831
    %v2855 = vpop.f32.mrf.mxu0
    %v2856 = vadd.f32 0.0, %v2855
    %v2857 = vpop.f32.mrf.mxu0
    %2858 = vdwg.mxu0
    %2859 = vmatpush.bf16.msra.mxu0 0
    %2860 = vmatpush.bf16.msra.mxu0 0
    %2861 = vmatpush.bf16.msra.mxu0 0
    %2862 = vmatpush.bf16.msra.mxu0 0
    %2863 = vmatpush.bf16.msra.mxu0 0
    %2864 = vmatpush.bf16.msra.mxu0 0
    %2865 = vmatpush.bf16.msra.mxu0 %v2823
    %2866 = vmatpush.bf16.msra.mxu0 %v2820
    %2867 = vmatmul.bf16.gmra.mxu0 %v2831
    %v2868 = vpop.f32.mrf.mxu0
    %v2869 = vadd.f32 0.0, %v2868
    %v2870 = vpop.f32.mrf.mxu0
    %2871 = vdwg.mxu0
    %v2872 = vadd.f32 %v2777, %v2843
    %v2873 = vadd.f32 %v2778, %v2856
    %v2874 = vadd.f32 %v2779, %v2869
    %v2875 = vld [vmem:[%s499] sm:$0xff]
    %v2876 = vld [vmem:[%s499 + $0x8] sm:$0xf]
    %v2877 = vld [vmem:[%s499 + $0xc] sm:$0xff]
    %v2878 = vld [vmem:[%s499 + $0x14] sm:$0xf]
    %v2879 = vld [vmem:[%s499 + $0x18] sm:$0xff]
    %v2880 = vld [vmem:[%s499 + $0x20] sm:$0xf]
    %v2881 = vld [vmem:[%s499 + $0x24] sm:$0xff]
    %v2882 = vld [vmem:[%s499 + $0x2c] sm:$0xf]
    %v2884 = vunpack.c.l.b16 %v2449
    %v2885 = vpack.c.b16 %v2884, %v2884
    %v2887 = vshrl.u32 %v2885, 16
    %v2889 = vshll.u32 %v2885, 16
    %v2891 = vrot.slane %v2889, 1
    %v2892 = vor.u32 %v2887, %v2891
    %v2901 = vunpack.c.l.b16 %v2875
    %v2902 = vunpack.c.h.b16 %v2875
    %v2903 = vunpack.c.l.b16 %v2876
    %v2904 = vunpack.c.l.b16 %v2877
    %v2905 = vunpack.c.h.b16 %v2877
    %v2906 = vunpack.c.l.b16 %v2878
    %v2907 = vunpack.c.l.b16 %v2879
    %v2908 = vunpack.c.h.b16 %v2879
    %v2909 = vunpack.c.l.b16 %v2880
    %v2910 = vunpack.c.l.b16 %v2881
    %v2911 = vunpack.c.h.b16 %v2881
    %v2912 = vunpack.c.l.b16 %v2882
    %v2913 = vpack.c.b16 %v2904, %v2901
    %v2914 = vpack.c.b16 %v2905, %v2902
    %v2915 = vpack.c.b16 %v2906, %v2903
    %v2916 = vpack.c.b16 %v2910, %v2907
    %v2917 = vpack.c.b16 %v2911, %v2908
    %v2918 = vpack.c.b16 %v2912, %v2909
    %v2926 = vsel %vm110, %v2892, 0
    %2928 = vmatpush.bf16.msra.mxu0 0
    %2929 = vmatpush.bf16.msra.mxu0 0
    %2930 = vmatpush.bf16.msra.mxu0 0
    %2931 = vmatpush.bf16.msra.mxu0 0
    %2932 = vmatpush.bf16.msra.mxu0 0
    %2933 = vmatpush.bf16.msra.mxu0 0
    %2934 = vmatpush.bf16.msra.mxu0 %v2916
    %2935 = vmatpush.bf16.msra.mxu0 %v2913
    %2936 = vmatmul.bf16.gmra.mxu0 %v2926
    %v2937 = vpop.f32.mrf.mxu0
    %v2938 = vadd.f32 0.0, %v2937
    %v2939 = vpop.f32.mrf.mxu0
    %2940 = vdwg.mxu0
    %2941 = vmatpush.bf16.msra.mxu0 0
    %2942 = vmatpush.bf16.msra.mxu0 0
    %2943 = vmatpush.bf16.msra.mxu0 0
    %2944 = vmatpush.bf16.msra.mxu0 0
    %2945 = vmatpush.bf16.msra.mxu0 0
    %2946 = vmatpush.bf16.msra.mxu0 0
    %2947 = vmatpush.bf16.msra.mxu0 %v2917
    %2948 = vmatpush.bf16.msra.mxu0 %v2914
    %2949 = vmatmul.bf16.gmra.mxu0 %v2926
    %v2950 = vpop.f32.mrf.mxu0
    %v2951 = vadd.f32 0.0, %v2950
    %v2952 = vpop.f32.mrf.mxu0
    %2953 = vdwg.mxu0
    %2954 = vmatpush.bf16.msra.mxu0 0
    %2955 = vmatpush.bf16.msra.mxu0 0
    %2956 = vmatpush.bf16.msra.mxu0 0
    %2957 = vmatpush.bf16.msra.mxu0 0
    %2958 = vmatpush.bf16.msra.mxu0 0
    %2959 = vmatpush.bf16.msra.mxu0 0
    %2960 = vmatpush.bf16.msra.mxu0 %v2918
    %2961 = vmatpush.bf16.msra.mxu0 %v2915
    %2962 = vmatmul.bf16.gmra.mxu0 %v2926
    %v2963 = vpop.f32.mrf.mxu0
    %v2964 = vadd.f32 0.0, %v2963
    %v2965 = vpop.f32.mrf.mxu0
    %2966 = vdwg.mxu0
    %v2967 = vadd.f32 %v2872, %v2938
    %v2968 = vadd.f32 %v2873, %v2951
    %v2969 = vadd.f32 %v2874, %v2964
    %v2970 = vld [vmem:[%s2] sm:$0x7]
    %v2972 = vperm.slane %v2970, 0
    %v2973 = vperm.slane %v2970, 1
    %v2974 = vperm.slane %v2970, 2
    %v2978 = vadd.f32 %v2967, %v2972
    %v2979 = vadd.f32 %v2968, %v2973
    %v2980 = vadd.f32 %v2969, %v2974
    %v2981 = vsub.f32 0.0, %v2978
    %v2982 = vsub.f32 0.0, %v2979
    %v2983 = vsub.f32 0.0, %v2980
    %v2984 = vmul.f32 %v2981, 1.442695
    %v2985 = vpow.pop %v2984
    %v2986 = vmul.f32 %v2982, 1.442695
    %v2987 = vpow.pop %v2986
    %v2988 = vmul.f32 %v2983, 1.442695
    %v2989 = vpow.pop %v2988
    %v2990 = vadd.f32 %v2985, 1.0
    %v2991 = vadd.f32 %v2987, 1.0
    %v2992 = vadd.f32 %v2989, 1.0
    %v2993 = vrcp.pop %v2990
    %v2994 = vmul.f32 %v2990, %v2993
    %v2995 = vsub.f32 1.0, %v2994
    %v2996 = vmul.f32 %v2993, %v2995
    %v2997 = vadd.f32 %v2993, %v2996
    %vm2998 = vweird.f32 %v2990
    %vm2999 = vweird.f32 %v2993
    %vm3000 = vmor %vm2998, %vm2999
    %v3001 = vsel %vm3000, %v2993, %v2997
    %v3002 = vand.u32 2147483647, %v2990
    %vm3003 = vcmp.eq.f32.partialorder %v3002, 8.507059e+37
    %v3004 = vand.u32 %v2990, 2147483648
    %v3005 = vor.u32 1.1754944e-38, %v3004
    %v3006 = vsel %vm3003, %v3005, %v3001
    %v3007 = vmul.f32 1.0, %v3006
    %v3008 = vrcp.pop %v2991
    %v3009 = vmul.f32 %v2991, %v3008
    %v3010 = vsub.f32 1.0, %v3009
    %v3011 = vmul.f32 %v3008, %v3010
    %v3012 = vadd.f32 %v3008, %v3011
    %vm3013 = vweird.f32 %v2991
    %vm3014 = vweird.f32 %v3008
    %vm3015 = vmor %vm3013, %vm3014
    %v3016 = vsel %vm3015, %v3008, %v3012
    %v3017 = vand.u32 2147483647, %v2991
    %vm3018 = vcmp.eq.f32.partialorder %v3017, 8.507059e+37
    %v3019 = vand.u32 %v2991, 2147483648
    %v3020 = vor.u32 1.1754944e-38, %v3019
    %v3021 = vsel %vm3018, %v3020, %v3016
    %v3022 = vmul.f32 1.0, %v3021
    %v3023 = vrcp.pop %v2992
    %v3024 = vmul.f32 %v2992, %v3023
    %v3025 = vsub.f32 1.0, %v3024
    %v3026 = vmul.f32 %v3023, %v3025
    %v3027 = vadd.f32 %v3023, %v3026
    %vm3028 = vweird.f32 %v2992
    %vm3029 = vweird.f32 %v3023
    %vm3030 = vmor %vm3028, %vm3029
    %v3031 = vsel %vm3030, %v3023, %v3027
    %v3032 = vand.u32 2147483647, %v2992
    %vm3033 = vcmp.eq.f32.partialorder %v3032, 8.507059e+37
    %v3034 = vand.u32 %v2992, 2147483648
    %v3035 = vor.u32 1.1754944e-38, %v3034
    %v3036 = vsel %vm3033, %v3035, %v3031
    %v3037 = vmul.f32 1.0, %v3036
    %3040 = vrot.lane.b32.xlu0 %v3007, 44
    %v3041 = vpop.permute.xlu0 %3040
    %3042 = vrot.lane.b32.xlu0 %v3022, 44
    %v3043 = vpop.permute.xlu0 %3042
    %v3044 = vsel %vm669, %v3041, %v3043
    %v3046 = vadd.f32 %v3007, %v3044
    %3047 = vrot.lane.b32.xlu0 %v3022, 88
    %v3048 = vpop.permute.xlu0 %3047
    %v3050 = vadd.f32 %v3046, %v3048
    %3052 = vrot.lane.b32.xlu0 %v3022, 4
    %v3053 = vpop.permute.xlu0 %3052
    %3054 = vrot.lane.b32.xlu0 %v3037, 4
    %v3055 = vpop.permute.xlu0 %3054
    %v3056 = vsel %vm682, %v3053, %v3055
    %v3058 = vadd.f32 %v3050, %v3056
    %v3059 = vmul.f32 %v3058, 0.25
    %v3060 = vpack.c.bf16 %v3059, %v3059
    %3061 = vmatpush.bf16.msra.mxu0 0
    %3062 = vmatpush.bf16.msra.mxu0 0
    %3063 = vmatpush.bf16.msra.mxu0 0
    %3064 = vmatpush.bf16.msra.mxu0 0
    %3065 = vmatpush.bf16.msra.mxu0 0
    %3066 = vmatpush.bf16.msra.mxu0 0
    %3067 = vmatpush.bf16.msra.mxu0 %v2481
    %3068 = vmatpush.bf16.msra.mxu0 %v2478
    %3069 = vmatmul.bf16.gmra.mxu0 %v2736
    %v3070 = vpop.f32.mrf.mxu0
    %v3071 = vadd.f32 0.0, %v3070
    %v3072 = vpop.f32.mrf.mxu0
    %3073 = vdwg.mxu0
    %3074 = vmatpush.bf16.msra.mxu0 0
    %3075 = vmatpush.bf16.msra.mxu0 0
    %3076 = vmatpush.bf16.msra.mxu0 0
    %3077 = vmatpush.bf16.msra.mxu0 0
    %3078 = vmatpush.bf16.msra.mxu0 0
    %3079 = vmatpush.bf16.msra.mxu0 0
    %3080 = vmatpush.bf16.msra.mxu0 %v2482
    %3081 = vmatpush.bf16.msra.mxu0 %v2479
    %3082 = vmatmul.bf16.gmra.mxu0 %v2736
    %v3083 = vpop.f32.mrf.mxu0
    %v3084 = vadd.f32 0.0, %v3083
    %v3085 = vpop.f32.mrf.mxu0
    %3086 = vdwg.mxu0
    %3087 = vmatpush.bf16.msra.mxu0 0
    %3088 = vmatpush.bf16.msra.mxu0 0
    %3089 = vmatpush.bf16.msra.mxu0 0
    %3090 = vmatpush.bf16.msra.mxu0 0
    %3091 = vmatpush.bf16.msra.mxu0 0
    %3092 = vmatpush.bf16.msra.mxu0 0
    %3093 = vmatpush.bf16.msra.mxu0 %v2483
    %3094 = vmatpush.bf16.msra.mxu0 %v2480
    %3095 = vmatmul.bf16.gmra.mxu0 %v2736
    %v3096 = vpop.f32.mrf.mxu0
    %v3097 = vadd.f32 0.0, %v3096
    %v3098 = vpop.f32.mrf.mxu0
    %3099 = vdwg.mxu0
    %3100 = vmatpush.bf16.msra.mxu0 0
    %3101 = vmatpush.bf16.msra.mxu0 0
    %3102 = vmatpush.bf16.msra.mxu0 0
    %3103 = vmatpush.bf16.msra.mxu0 0
    %3104 = vmatpush.bf16.msra.mxu0 0
    %3105 = vmatpush.bf16.msra.mxu0 0
    %3106 = vmatpush.bf16.msra.mxu0 %v2555
    %3107 = vmatpush.bf16.msra.mxu0 %v2552
    %3108 = vmatmul.bf16.gmra.mxu0 %v2649
    %v3109 = vpop.f32.mrf.mxu0
    %v3110 = vadd.f32 %v3071, %v3109
    %v3111 = vpop.f32.mrf.mxu0
    %3112 = vdwg.mxu0
    %3113 = vmatpush.bf16.msra.mxu0 0
    %3114 = vmatpush.bf16.msra.mxu0 0
    %3115 = vmatpush.bf16.msra.mxu0 0
    %3116 = vmatpush.bf16.msra.mxu0 0
    %3117 = vmatpush.bf16.msra.mxu0 0
    %3118 = vmatpush.bf16.msra.mxu0 0
    %3119 = vmatpush.bf16.msra.mxu0 %v2556
    %3120 = vmatpush.bf16.msra.mxu0 %v2553
    %3121 = vmatmul.bf16.gmra.mxu0 %v2649
    %v3122 = vpop.f32.mrf.mxu0
    %v3123 = vadd.f32 %v3084, %v3122
    %v3124 = vpop.f32.mrf.mxu0
    %3125 = vdwg.mxu0
    %3126 = vmatpush.bf16.msra.mxu0 0
    %3127 = vmatpush.bf16.msra.mxu0 0
    %3128 = vmatpush.bf16.msra.mxu0 0
    %3129 = vmatpush.bf16.msra.mxu0 0
    %3130 = vmatpush.bf16.msra.mxu0 0
    %3131 = vmatpush.bf16.msra.mxu0 0
    %3132 = vmatpush.bf16.msra.mxu0 %v2557
    %3133 = vmatpush.bf16.msra.mxu0 %v2554
    %3134 = vmatmul.bf16.gmra.mxu0 %v2649
    %v3135 = vpop.f32.mrf.mxu0
    %v3136 = vadd.f32 %v3097, %v3135
    %v3137 = vpop.f32.mrf.mxu0
    %3138 = vdwg.mxu0
    %3139 = vmatpush.bf16.msra.mxu0 0
    %3140 = vmatpush.bf16.msra.mxu0 0
    %3141 = vmatpush.bf16.msra.mxu0 0
    %3142 = vmatpush.bf16.msra.mxu0 0
    %3143 = vmatpush.bf16.msra.mxu0 0
    %3144 = vmatpush.bf16.msra.mxu0 0
    %3145 = vmatpush.bf16.msra.mxu0 %v2639
    %3146 = vmatpush.bf16.msra.mxu0 %v2636
    %3147 = vmatmul.bf16.gmra.mxu0 %v2831
    %v3148 = vpop.f32.mrf.mxu0
    %v3149 = vadd.f32 0.0, %v3148
    %v3150 = vpop.f32.mrf.mxu0
    %3151 = vdwg.mxu0
    %3152 = vmatpush.bf16.msra.mxu0 0
    %3153 = vmatpush.bf16.msra.mxu0 0
    %3154 = vmatpush.bf16.msra.mxu0 0
    %3155 = vmatpush.bf16.msra.mxu0 0
    %3156 = vmatpush.bf16.msra.mxu0 0
    %3157 = vmatpush.bf16.msra.mxu0 0
    %3158 = vmatpush.bf16.msra.mxu0 %v2640
    %3159 = vmatpush.bf16.msra.mxu0 %v2637
    %3160 = vmatmul.bf16.gmra.mxu0 %v2831
    %v3161 = vpop.f32.mrf.mxu0
    %v3162 = vadd.f32 0.0, %v3161
    %v3163 = vpop.f32.mrf.mxu0
    %3164 = vdwg.mxu0
    %3165 = vmatpush.bf16.msra.mxu0 0
    %3166 = vmatpush.bf16.msra.mxu0 0
    %3167 = vmatpush.bf16.msra.mxu0 0
    %3168 = vmatpush.bf16.msra.mxu0 0
    %3169 = vmatpush.bf16.msra.mxu0 0
    %3170 = vmatpush.bf16.msra.mxu0 0
    %3171 = vmatpush.bf16.msra.mxu0 %v2641
    %3172 = vmatpush.bf16.msra.mxu0 %v2638
    %3173 = vmatmul.bf16.gmra.mxu0 %v2831
    %v3174 = vpop.f32.mrf.mxu0
    %v3175 = vadd.f32 0.0, %v3174
    %v3176 = vpop.f32.mrf.mxu0
    %3177 = vdwg.mxu0
    %v3178 = vadd.f32 %v3110, %v3149
    %v3179 = vadd.f32 %v3123, %v3162
    %v3180 = vadd.f32 %v3136, %v3175
    %3181 = vmatpush.bf16.msra.mxu0 0
    %3182 = vmatpush.bf16.msra.mxu0 0
    %3183 = vmatpush.bf16.msra.mxu0 0
    %3184 = vmatpush.bf16.msra.mxu0 0
    %3185 = vmatpush.bf16.msra.mxu0 0
    %3186 = vmatpush.bf16.msra.mxu0 0
    %3187 = vmatpush.bf16.msra.mxu0 %v2726
    %3188 = vmatpush.bf16.msra.mxu0 %v2723
    %3189 = vmatmul.bf16.gmra.mxu0 %v2926
    %v3190 = vpop.f32.mrf.mxu0
    %v3191 = vadd.f32 0.0, %v3190
    %v3192 = vpop.f32.mrf.mxu0
    %3193 = vdwg.mxu0
    %3194 = vmatpush.bf16.msra.mxu0 0
    %3195 = vmatpush.bf16.msra.mxu0 0
    %3196 = vmatpush.bf16.msra.mxu0 0
    %3197 = vmatpush.bf16.msra.mxu0 0
    %3198 = vmatpush.bf16.msra.mxu0 0
    %3199 = vmatpush.bf16.msra.mxu0 0
    %3200 = vmatpush.bf16.msra.mxu0 %v2727
    %3201 = vmatpush.bf16.msra.mxu0 %v2724
    %3202 = vmatmul.bf16.gmra.mxu0 %v2926
    %v3203 = vpop.f32.mrf.mxu0
    %v3204 = vadd.f32 0.0, %v3203
    %v3205 = vpop.f32.mrf.mxu0
    %3206 = vdwg.mxu0
    %3207 = vmatpush.bf16.msra.mxu0 0
    %3208 = vmatpush.bf16.msra.mxu0 0
    %3209 = vmatpush.bf16.msra.mxu0 0
    %3210 = vmatpush.bf16.msra.mxu0 0
    %3211 = vmatpush.bf16.msra.mxu0 0
    %3212 = vmatpush.bf16.msra.mxu0 0
    %3213 = vmatpush.bf16.msra.mxu0 %v2728
    %3214 = vmatpush.bf16.msra.mxu0 %v2725
    %3215 = vmatmul.bf16.gmra.mxu0 %v2926
    %v3216 = vpop.f32.mrf.mxu0
    %v3217 = vadd.f32 0.0, %v3216
    %v3218 = vpop.f32.mrf.mxu0
    %3219 = vdwg.mxu0
    %v3220 = vadd.f32 %v3178, %v3191
    %v3221 = vadd.f32 %v3179, %v3204
    %v3222 = vadd.f32 %v3180, %v3217
    %v3224 = vunpack.c.l.b16 %v2607
    %v3225 = vpack.c.b16 %v3224, %v3224
    %v3227 = vshrl.u32 %v3225, 16
    %v3229 = vshll.u32 %v3225, 16
    %v3231 = vrot.slane %v3229, 1
    %v3232 = vor.u32 %v3227, %v3231
    %v3234 = vsel %vm110, %v3232, 0
    %3236 = vmatpush.bf16.msra.mxu0 0
    %3237 = vmatpush.bf16.msra.mxu0 0
    %3238 = vmatpush.bf16.msra.mxu0 0
    %3239 = vmatpush.bf16.msra.mxu0 0
    %3240 = vmatpush.bf16.msra.mxu0 0
    %3241 = vmatpush.bf16.msra.mxu0 0
    %3242 = vmatpush.bf16.msra.mxu0 %v2821
    %3243 = vmatpush.bf16.msra.mxu0 %v2818
    %3244 = vmatmul.bf16.gmra.mxu0 %v3234
    %v3245 = vpop.f32.mrf.mxu0
    %v3246 = vadd.f32 0.0, %v3245
    %v3247 = vpop.f32.mrf.mxu0
    %3248 = vdwg.mxu0
    %3249 = vmatpush.bf16.msra.mxu0 0
    %3250 = vmatpush.bf16.msra.mxu0 0
    %3251 = vmatpush.bf16.msra.mxu0 0
    %3252 = vmatpush.bf16.msra.mxu0 0
    %3253 = vmatpush.bf16.msra.mxu0 0
    %3254 = vmatpush.bf16.msra.mxu0 0
    %3255 = vmatpush.bf16.msra.mxu0 %v2822
    %3256 = vmatpush.bf16.msra.mxu0 %v2819
    %3257 = vmatmul.bf16.gmra.mxu0 %v3234
    %v3258 = vpop.f32.mrf.mxu0
    %v3259 = vadd.f32 0.0, %v3258
    %v3260 = vpop.f32.mrf.mxu0
    %3261 = vdwg.mxu0
    %3262 = vmatpush.bf16.msra.mxu0 0
    %3263 = vmatpush.bf16.msra.mxu0 0
    %3264 = vmatpush.bf16.msra.mxu0 0
    %3265 = vmatpush.bf16.msra.mxu0 0
    %3266 = vmatpush.bf16.msra.mxu0 0
    %3267 = vmatpush.bf16.msra.mxu0 0
    %3268 = vmatpush.bf16.msra.mxu0 %v2823
    %3269 = vmatpush.bf16.msra.mxu0 %v2820
    %3270 = vmatmul.bf16.gmra.mxu0 %v3234
    %v3271 = vpop.f32.mrf.mxu0
    %v3272 = vadd.f32 0.0, %v3271
    %v3273 = vpop.f32.mrf.mxu0
    %3274 = vdwg.mxu0
    %v3275 = vadd.f32 %v3220, %v3246
    %v3276 = vadd.f32 %v3221, %v3259
    %v3277 = vadd.f32 %v3222, %v3272
    %v3279 = vunpack.c.l.b16 %v2694
    %v3280 = vpack.c.b16 %v3279, %v3279
    %v3282 = vshrl.u32 %v3280, 16
    %v3284 = vshll.u32 %v3280, 16
    %v3286 = vrot.slane %v3284, 1
    %v3287 = vor.u32 %v3282, %v3286
    %v3289 = vsel %vm110, %v3287, 0
    %3291 = vmatpush.bf16.msra.mxu0 0
    %3292 = vmatpush.bf16.msra.mxu0 0
    %3293 = vmatpush.bf16.msra.mxu0 0
    %3294 = vmatpush.bf16.msra.mxu0 0
    %3295 = vmatpush.bf16.msra.mxu0 0
    %3296 = vmatpush.bf16.msra.mxu0 0
    %3297 = vmatpush.bf16.msra.mxu0 %v2916
    %3298 = vmatpush.bf16.msra.mxu0 %v2913
    %3299 = vmatmul.bf16.gmra.mxu0 %v3289
    %v3300 = vpop.f32.mrf.mxu0
    %v3301 = vadd.f32 0.0, %v3300
    %v3302 = vpop.f32.mrf.mxu0
    %3303 = vdwg.mxu0
    %3304 = vmatpush.bf16.msra.mxu0 0
    %3305 = vmatpush.bf16.msra.mxu0 0
    %3306 = vmatpush.bf16.msra.mxu0 0
    %3307 = vmatpush.bf16.msra.mxu0 0
    %3308 = vmatpush.bf16.msra.mxu0 0
    %3309 = vmatpush.bf16.msra.mxu0 0
    %3310 = vmatpush.bf16.msra.mxu0 %v2917
    %3311 = vmatpush.bf16.msra.mxu0 %v2914
    %3312 = vmatmul.bf16.gmra.mxu0 %v3289
    %v3313 = vpop.f32.mrf.mxu0
    %v3314 = vadd.f32 0.0, %v3313
    %v3315 = vpop.f32.mrf.mxu0
    %3316 = vdwg.mxu0
    %3317 = vmatpush.bf16.msra.mxu0 0
    %3318 = vmatpush.bf16.msra.mxu0 0
    %3319 = vmatpush.bf16.msra.mxu0 0
    %3320 = vmatpush.bf16.msra.mxu0 0
    %3321 = vmatpush.bf16.msra.mxu0 0
    %3322 = vmatpush.bf16.msra.mxu0 0
    %3323 = vmatpush.bf16.msra.mxu0 %v2918
    %3324 = vmatpush.bf16.msra.mxu0 %v2915
    %3325 = vmatmul.bf16.gmra.mxu0 %v3289
    %v3326 = vpop.f32.mrf.mxu0
    %v3327 = vadd.f32 0.0, %v3326
    %v3328 = vpop.f32.mrf.mxu0
    %3329 = vdwg.mxu0
    %v3330 = vadd.f32 %v3275, %v3301
    %v3331 = vadd.f32 %v3276, %v3314
    %v3332 = vadd.f32 %v3277, %v3327
    %v3333 = vadd.f32 %v3330, %v2972
    %v3334 = vadd.f32 %v3331, %v2973
    %v3335 = vadd.f32 %v3332, %v2974
    %v3336 = vsub.f32 0.0, %v3333
    %v3337 = vsub.f32 0.0, %v3334
    %v3338 = vsub.f32 0.0, %v3335
    %v3339 = vmul.f32 %v3336, 1.442695
    %v3340 = vpow.pop %v3339
    %v3341 = vmul.f32 %v3337, 1.442695
    %v3342 = vpow.pop %v3341
    %v3343 = vmul.f32 %v3338, 1.442695
    %v3344 = vpow.pop %v3343
    %v3345 = vadd.f32 %v3340, 1.0
    %v3346 = vadd.f32 %v3342, 1.0
    %v3347 = vadd.f32 %v3344, 1.0
    %v3348 = vrcp.pop %v3345
    %v3349 = vmul.f32 %v3345, %v3348
    %v3350 = vsub.f32 1.0, %v3349
    %v3351 = vmul.f32 %v3348, %v3350
    %v3352 = vadd.f32 %v3348, %v3351
    %vm3353 = vweird.f32 %v3345
    %vm3354 = vweird.f32 %v3348
    %vm3355 = vmor %vm3353, %vm3354
    %v3356 = vsel %vm3355, %v3348, %v3352
    %v3357 = vand.u32 2147483647, %v3345
    %vm3358 = vcmp.eq.f32.partialorder %v3357, 8.507059e+37
    %v3359 = vand.u32 %v3345, 2147483648
    %v3360 = vor.u32 1.1754944e-38, %v3359
    %v3361 = vsel %vm3358, %v3360, %v3356
    %v3362 = vmul.f32 1.0, %v3361
    %v3363 = vrcp.pop %v3346
    %v3364 = vmul.f32 %v3346, %v3363
    %v3365 = vsub.f32 1.0, %v3364
    %v3366 = vmul.f32 %v3363, %v3365
    %v3367 = vadd.f32 %v3363, %v3366
    %vm3368 = vweird.f32 %v3346
    %vm3369 = vweird.f32 %v3363
    %vm3370 = vmor %vm3368, %vm3369
    %v3371 = vsel %vm3370, %v3363, %v3367
    %v3372 = vand.u32 2147483647, %v3346
    %vm3373 = vcmp.eq.f32.partialorder %v3372, 8.507059e+37
    %v3374 = vand.u32 %v3346, 2147483648
    %v3375 = vor.u32 1.1754944e-38, %v3374
    %v3376 = vsel %vm3373, %v3375, %v3371
    %v3377 = vmul.f32 1.0, %v3376
    %v3378 = vrcp.pop %v3347
    %v3379 = vmul.f32 %v3347, %v3378
    %v3380 = vsub.f32 1.0, %v3379
    %v3381 = vmul.f32 %v3378, %v3380
    %v3382 = vadd.f32 %v3378, %v3381
    %vm3383 = vweird.f32 %v3347
    %vm3384 = vweird.f32 %v3378
    %vm3385 = vmor %vm3383, %vm3384
    %v3386 = vsel %vm3385, %v3378, %v3382
    %v3387 = vand.u32 2147483647, %v3347
    %vm3388 = vcmp.eq.f32.partialorder %v3387, 8.507059e+37
    %v3389 = vand.u32 %v3347, 2147483648
    %v3390 = vor.u32 1.1754944e-38, %v3389
    %v3391 = vsel %vm3388, %v3390, %v3386
    %v3392 = vmul.f32 1.0, %v3391
    %3395 = vrot.lane.b32.xlu0 %v3362, 44
    %v3396 = vpop.permute.xlu0 %3395
    %3397 = vrot.lane.b32.xlu0 %v3377, 44
    %v3398 = vpop.permute.xlu0 %3397
    %v3399 = vsel %vm669, %v3396, %v3398
    %v3401 = vadd.f32 %v3362, %v3399
    %3402 = vrot.lane.b32.xlu0 %v3377, 88
    %v3403 = vpop.permute.xlu0 %3402
    %v3405 = vadd.f32 %v3401, %v3403
    %3407 = vrot.lane.b32.xlu0 %v3377, 4
    %v3408 = vpop.permute.xlu0 %3407
    %3409 = vrot.lane.b32.xlu0 %v3392, 4
    %v3410 = vpop.permute.xlu0 %3409
    %v3411 = vsel %vm682, %v3408, %v3410
    %v3413 = vadd.f32 %v3405, %v3411
    %v3414 = vmul.f32 %v3413, 0.25
    %v3415 = vpack.c.bf16 %v3414, %v3414
    %v3416 = vld [vmem:[#allocation2] sm:$0xff]
    %v3417 = vld [vmem:[#allocation2 + $0x8] sm:$0xf]
    %v3418 = vld [vmem:[#allocation2 + $0xc] sm:$0xff]
    %v3419 = vld [vmem:[#allocation2 + $0x14] sm:$0xf]
    %v3420 = vld [vmem:[#allocation2 + $0x18] sm:$0xff]
    %v3421 = vld [vmem:[#allocation2 + $0x20] sm:$0xf]
    %v3422 = vld [vmem:[#allocation2 + $0x24] sm:$0xff]
    %v3423 = vld [vmem:[#allocation2 + $0x2c] sm:$0xf]
    %v3424 = vld [vmem:[#allocation2 + $0x30] sm:$0xff]
    %v3425 = vld [vmem:[#allocation2 + $0x38] sm:$0xf]
    %v3426 = vld [vmem:[#allocation2 + $0x3c] sm:$0xff]
    %v3427 = vld [vmem:[#allocation2 + $0x44] sm:$0xf]
    %v3428 = vld [vmem:[#allocation2 + $0x48] sm:$0xff]
    %v3429 = vld [vmem:[#allocation2 + $0x50] sm:$0xf]
    %v3430 = vld [vmem:[#allocation2 + $0x54] sm:$0xff]
    %v3431 = vld [vmem:[#allocation2 + $0x5c] sm:$0xf]
    %v3432 = vld [vmem:[#allocation2 + $0x60] sm:$0xff]
    %v3433 = vld [vmem:[#allocation2 + $0x68] sm:$0xf]
    %v3434 = vld [vmem:[#allocation2 + $0x6c] sm:$0xff]
    %v3435 = vld [vmem:[#allocation2 + $0x74] sm:$0xf]
    %v3436 = vld [vmem:[#allocation2 + $0x78] sm:$0x33]
    %v3437 = vld [vmem:[#allocation2 + $0x80] sm:$0x3]
    %v3438 = vld [vmem:[%s1065] sm:$0xff]
    %v3439 = vld [vmem:[%s1065 + $0x8] sm:$0xf]
    %v3440 = vld [vmem:[%s1065 + $0xc] sm:$0xff]
    %v3441 = vld [vmem:[%s1065 + $0x14] sm:$0xf]
    %v3442 = vld [vmem:[%s1065 + $0x18] sm:$0xff]
    %v3443 = vld [vmem:[%s1065 + $0x20] sm:$0xf]
    %v3444 = vld [vmem:[%s1065 + $0x24] sm:$0xff]
    %v3445 = vld [vmem:[%s1065 + $0x2c] sm:$0xf]
    %v3446 = vld [vmem:[%s1065 + $0x30] sm:$0xff]
    %v3447 = vld [vmem:[%s1065 + $0x38] sm:$0xf]
    %v3448 = vld [vmem:[%s1065 + $0x3c] sm:$0xff]
    %v3449 = vld [vmem:[%s1065 + $0x44] sm:$0xf]
    %v3450 = vld [vmem:[%s1065 + $0x48] sm:$0xff]
    %v3451 = vld [vmem:[%s1065 + $0x50] sm:$0xf]
    %v3452 = vld [vmem:[%s1065 + $0x54] sm:$0xff]
    %v3453 = vld [vmem:[%s1065 + $0x5c] sm:$0xf]
    %v3454 = vld [vmem:[%s1065 + $0x60] sm:$0xff]
    %v3455 = vld [vmem:[%s1065 + $0x68] sm:$0xf]
    %v3456 = vld [vmem:[%s1065 + $0x6c] sm:$0xff]
    %v3457 = vld [vmem:[%s1065 + $0x74] sm:$0xf]
    %v3458 = vld [vmem:[%s1065 + $0x78] sm:$0x33]
    %v3459 = vld [vmem:[%s1065 + $0x80] sm:$0x3]
    %v3482 = vunpack.c.l.b16 %v3438
    %v3483 = vunpack.c.h.b16 %v3438
    %v3484 = vunpack.c.l.b16 %v3439
    %v3485 = vunpack.c.l.b16 %v3440
    %v3486 = vunpack.c.h.b16 %v3440
    %v3487 = vunpack.c.l.b16 %v3441
    %v3488 = vunpack.c.l.b16 %v3442
    %v3489 = vunpack.c.h.b16 %v3442
    %v3490 = vunpack.c.l.b16 %v3443
    %v3491 = vunpack.c.l.b16 %v3444
    %v3492 = vunpack.c.h.b16 %v3444
    %v3493 = vunpack.c.l.b16 %v3445
    %v3494 = vunpack.c.l.b16 %v3446
    %v3495 = vunpack.c.h.b16 %v3446
    %v3496 = vunpack.c.l.b16 %v3447
    %v3497 = vunpack.c.l.b16 %v3448
    %v3498 = vunpack.c.h.b16 %v3448
    %v3499 = vunpack.c.l.b16 %v3449
    %v3500 = vunpack.c.l.b16 %v3450
    %v3501 = vunpack.c.h.b16 %v3450
    %v3502 = vunpack.c.l.b16 %v3451
    %v3503 = vunpack.c.l.b16 %v3452
    %v3504 = vunpack.c.h.b16 %v3452
    %v3505 = vunpack.c.l.b16 %v3453
    %v3506 = vunpack.c.l.b16 %v3454
    %v3507 = vunpack.c.h.b16 %v3454
    %v3508 = vunpack.c.l.b16 %v3455
    %v3509 = vunpack.c.l.b16 %v3456
    %v3510 = vunpack.c.h.b16 %v3456
    %v3511 = vunpack.c.l.b16 %v3457
    %v3512 = vunpack.c.l.b16 %v3458
    %v3513 = vunpack.c.h.b16 %v3458
    %v3514 = vunpack.c.l.b16 %v3459
    %v3515 = vpack.c.b16 %v3485, %v3482
    %v3516 = vpack.c.b16 %v3486, %v3483
    %v3517 = vpack.c.b16 %v3487, %v3484
    %v3518 = vpack.c.b16 %v3491, %v3488
    %v3519 = vpack.c.b16 %v3492, %v3489
    %v3520 = vpack.c.b16 %v3493, %v3490
    %v3521 = vpack.c.b16 %v3497, %v3494
    %v3522 = vpack.c.b16 %v3498, %v3495
    %v3523 = vpack.c.b16 %v3499, %v3496
    %v3524 = vpack.c.b16 %v3503, %v3500
    %v3525 = vpack.c.b16 %v3504, %v3501
    %v3526 = vpack.c.b16 %v3505, %v3502
    %v3527 = vpack.c.b16 %v3509, %v3506
    %v3528 = vpack.c.b16 %v3510, %v3507
    %v3529 = vpack.c.b16 %v3511, %v3508
    %v3530 = vpack.c.b16 %v3512, %v3512
    %v3531 = vpack.c.b16 %v3513, %v3513
    %v3532 = vpack.c.b16 %v3514, %v3514
    %v3549 = vsel %vm1176, %v3415, 0
    %v3552 = vsel %vm1180, %v3530, 0
    %v3555 = vsel %vm1180, %v3531, 0
    %v3558 = vsel %vm1180, %v3532, 0
    %3560 = vmatpush.bf16.msra.mxu0 0
    %3561 = vmatpush.bf16.msra.mxu0 0
    %3562 = vmatpush.bf16.msra.mxu0 %v3552
    %3563 = vmatpush.bf16.msra.mxu0 %v3527
    %3564 = vmatpush.bf16.msra.mxu0 %v3524
    %3565 = vmatpush.bf16.msra.mxu0 %v3521
    %3566 = vmatpush.bf16.msra.mxu0 %v3518
    %3567 = vmatpush.bf16.msra.mxu0 %v3515
    %3568 = vmatmul.bf16.gmra.mxu0 %v3549
    %v3569 = vpop.f32.mrf.mxu0
    %v3570 = vadd.f32 0.0, %v3569
    %v3571 = vpop.f32.mrf.mxu0
    %3572 = vdwg.mxu0
    %3573 = vmatpush.bf16.msra.mxu0 0
    %3574 = vmatpush.bf16.msra.mxu0 0
    %3575 = vmatpush.bf16.msra.mxu0 %v3555
    %3576 = vmatpush.bf16.msra.mxu0 %v3528
    %3577 = vmatpush.bf16.msra.mxu0 %v3525
    %3578 = vmatpush.bf16.msra.mxu0 %v3522
    %3579 = vmatpush.bf16.msra.mxu0 %v3519
    %3580 = vmatpush.bf16.msra.mxu0 %v3516
    %3581 = vmatmul.bf16.gmra.mxu0 %v3549
    %v3582 = vpop.f32.mrf.mxu0
    %v3583 = vadd.f32 0.0, %v3582
    %v3584 = vpop.f32.mrf.mxu0
    %3585 = vdwg.mxu0
    %3586 = vmatpush.bf16.msra.mxu0 0
    %3587 = vmatpush.bf16.msra.mxu0 0
    %3588 = vmatpush.bf16.msra.mxu0 %v3558
    %3589 = vmatpush.bf16.msra.mxu0 %v3529
    %3590 = vmatpush.bf16.msra.mxu0 %v3526
    %3591 = vmatpush.bf16.msra.mxu0 %v3523
    %3592 = vmatpush.bf16.msra.mxu0 %v3520
    %3593 = vmatpush.bf16.msra.mxu0 %v3517
    %3594 = vmatmul.bf16.gmra.mxu0 %v3549
    %v3595 = vpop.f32.mrf.mxu0
    %v3596 = vadd.f32 0.0, %v3595
    %v3597 = vpop.f32.mrf.mxu0
    %3598 = vdwg.mxu0
    %v3621 = vunpack.c.l.b16 %v3416
    %v3622 = vunpack.c.h.b16 %v3416
    %v3623 = vunpack.c.l.b16 %v3417
    %v3624 = vunpack.c.l.b16 %v3418
    %v3625 = vunpack.c.h.b16 %v3418
    %v3626 = vunpack.c.l.b16 %v3419
    %v3627 = vunpack.c.l.b16 %v3420
    %v3628 = vunpack.c.h.b16 %v3420
    %v3629 = vunpack.c.l.b16 %v3421
    %v3630 = vunpack.c.l.b16 %v3422
    %v3631 = vunpack.c.h.b16 %v3422
    %v3632 = vunpack.c.l.b16 %v3423
    %v3633 = vunpack.c.l.b16 %v3424
    %v3634 = vunpack.c.h.b16 %v3424
    %v3635 = vunpack.c.l.b16 %v3425
    %v3636 = vunpack.c.l.b16 %v3426
    %v3637 = vunpack.c.h.b16 %v3426
    %v3638 = vunpack.c.l.b16 %v3427
    %v3639 = vunpack.c.l.b16 %v3428
    %v3640 = vunpack.c.h.b16 %v3428
    %v3641 = vunpack.c.l.b16 %v3429
    %v3642 = vunpack.c.l.b16 %v3430
    %v3643 = vunpack.c.h.b16 %v3430
    %v3644 = vunpack.c.l.b16 %v3431
    %v3645 = vunpack.c.l.b16 %v3432
    %v3646 = vunpack.c.h.b16 %v3432
    %v3647 = vunpack.c.l.b16 %v3433
    %v3648 = vunpack.c.l.b16 %v3434
    %v3649 = vunpack.c.h.b16 %v3434
    %v3650 = vunpack.c.l.b16 %v3435
    %v3651 = vunpack.c.l.b16 %v3436
    %v3652 = vunpack.c.h.b16 %v3436
    %v3653 = vunpack.c.l.b16 %v3437
    %v3654 = vpack.c.b16 %v3624, %v3621
    %v3655 = vpack.c.b16 %v3625, %v3622
    %v3656 = vpack.c.b16 %v3626, %v3623
    %v3657 = vpack.c.b16 %v3630, %v3627
    %v3658 = vpack.c.b16 %v3631, %v3628
    %v3659 = vpack.c.b16 %v3632, %v3629
    %v3660 = vpack.c.b16 %v3636, %v3633
    %v3661 = vpack.c.b16 %v3637, %v3634
    %v3662 = vpack.c.b16 %v3638, %v3635
    %v3663 = vpack.c.b16 %v3642, %v3639
    %v3664 = vpack.c.b16 %v3643, %v3640
    %v3665 = vpack.c.b16 %v3644, %v3641
    %v3666 = vpack.c.b16 %v3648, %v3645
    %v3667 = vpack.c.b16 %v3649, %v3646
    %v3668 = vpack.c.b16 %v3650, %v3647
    %v3669 = vpack.c.b16 %v3651, %v3651
    %v3670 = vpack.c.b16 %v3652, %v3652
    %v3671 = vpack.c.b16 %v3653, %v3653
    %v3688 = vsel %vm1176, %v3060, 0
    %v3691 = vsel %vm1180, %v3669, 0
    %v3694 = vsel %vm1180, %v3670, 0
    %v3697 = vsel %vm1180, %v3671, 0
    %3699 = vmatpush.bf16.msra.mxu0 0
    %3700 = vmatpush.bf16.msra.mxu0 0
    %3701 = vmatpush.bf16.msra.mxu0 %v3691
    %3702 = vmatpush.bf16.msra.mxu0 %v3666
    %3703 = vmatpush.bf16.msra.mxu0 %v3663
    %3704 = vmatpush.bf16.msra.mxu0 %v3660
    %3705 = vmatpush.bf16.msra.mxu0 %v3657
    %3706 = vmatpush.bf16.msra.mxu0 %v3654
    %3707 = vmatmul.bf16.gmra.mxu0 %v3688
    %v3708 = vpop.f32.mrf.mxu0
    %v3709 = vadd.f32 %v3570, %v3708
    %v3710 = vpop.f32.mrf.mxu0
    %3711 = vdwg.mxu0
    %3712 = vmatpush.bf16.msra.mxu0 0
    %3713 = vmatpush.bf16.msra.mxu0 0
    %3714 = vmatpush.bf16.msra.mxu0 %v3694
    %3715 = vmatpush.bf16.msra.mxu0 %v3667
    %3716 = vmatpush.bf16.msra.mxu0 %v3664
    %3717 = vmatpush.bf16.msra.mxu0 %v3661
    %3718 = vmatpush.bf16.msra.mxu0 %v3658
    %3719 = vmatpush.bf16.msra.mxu0 %v3655
    %3720 = vmatmul.bf16.gmra.mxu0 %v3688
    %v3721 = vpop.f32.mrf.mxu0
    %v3722 = vadd.f32 %v3583, %v3721
    %v3723 = vpop.f32.mrf.mxu0
    %3724 = vdwg.mxu0
    %3725 = vmatpush.bf16.msra.mxu0 0
    %3726 = vmatpush.bf16.msra.mxu0 0
    %3727 = vmatpush.bf16.msra.mxu0 %v3697
    %3728 = vmatpush.bf16.msra.mxu0 %v3668
    %3729 = vmatpush.bf16.msra.mxu0 %v3665
    %3730 = vmatpush.bf16.msra.mxu0 %v3662
    %3731 = vmatpush.bf16.msra.mxu0 %v3659
    %3732 = vmatpush.bf16.msra.mxu0 %v3656
    %3733 = vmatmul.bf16.gmra.mxu0 %v3688
    %v3734 = vpop.f32.mrf.mxu0
    %v3735 = vadd.f32 %v3596, %v3734
    %v3736 = vpop.f32.mrf.mxu0
    %3737 = vdwg.mxu0
    %v3738 = vld [vmem:[%s1368] sm:$0xff]
    %v3739 = vld [vmem:[%s1368 + $0x8] sm:$0xf]
    %v3740 = vld [vmem:[%s1368 + $0xc] sm:$0xff]
    %v3741 = vld [vmem:[%s1368 + $0x14] sm:$0xf]
    %v3742 = vld [vmem:[%s1368 + $0x18] sm:$0xff]
    %v3743 = vld [vmem:[%s1368 + $0x20] sm:$0xf]
    %v3744 = vld [vmem:[%s1368 + $0x24] sm:$0xff]
    %v3745 = vld [vmem:[%s1368 + $0x2c] sm:$0xf]
    %v3746 = vld [vmem:[%s1368 + $0x30] sm:$0xff]
    %v3747 = vld [vmem:[%s1368 + $0x38] sm:$0xf]
    %v3748 = vld [vmem:[%s1368 + $0x3c] sm:$0xff]
    %v3749 = vld [vmem:[%s1368 + $0x44] sm:$0xf]
    %v3750 = vld [vmem:[%s1368 + $0x48] sm:$0xff]
    %v3751 = vld [vmem:[%s1368 + $0x50] sm:$0xf]
    %v3752 = vld [vmem:[%s1368 + $0x54] sm:$0xff]
    %v3753 = vld [vmem:[%s1368 + $0x5c] sm:$0xf]
    %v3754 = vld [vmem:[%s1368 + $0x60] sm:$0xff]
    %v3755 = vld [vmem:[%s1368 + $0x68] sm:$0xf]
    %v3756 = vld [vmem:[%s1368 + $0x6c] sm:$0xff]
    %v3757 = vld [vmem:[%s1368 + $0x74] sm:$0xf]
    %v3758 = vld [vmem:[%s1368 + $0x78] sm:$0x33]
    %v3759 = vld [vmem:[%s1368 + $0x80] sm:$0x3]
    %v3761 = vunpack.c.l.b16 %v3060
    %v3762 = vpack.c.b16 %v3761, %v3761
    %v3764 = vshrl.u32 %v3762, 16
    %v3766 = vshll.u32 %v3762, 16
    %v3768 = vrot.slane %v3766, 1
    %v3769 = vor.u32 %v3764, %v3768
    %v3792 = vunpack.c.l.b16 %v3738
    %v3793 = vunpack.c.h.b16 %v3738
    %v3794 = vunpack.c.l.b16 %v3739
    %v3795 = vunpack.c.l.b16 %v3740
    %v3796 = vunpack.c.h.b16 %v3740
    %v3797 = vunpack.c.l.b16 %v3741
    %v3798 = vunpack.c.l.b16 %v3742
    %v3799 = vunpack.c.h.b16 %v3742
    %v3800 = vunpack.c.l.b16 %v3743
    %v3801 = vunpack.c.l.b16 %v3744
    %v3802 = vunpack.c.h.b16 %v3744
    %v3803 = vunpack.c.l.b16 %v3745
    %v3804 = vunpack.c.l.b16 %v3746
    %v3805 = vunpack.c.h.b16 %v3746
    %v3806 = vunpack.c.l.b16 %v3747
    %v3807 = vunpack.c.l.b16 %v3748
    %v3808 = vunpack.c.h.b16 %v3748
    %v3809 = vunpack.c.l.b16 %v3749
    %v3810 = vunpack.c.l.b16 %v3750
    %v3811 = vunpack.c.h.b16 %v3750
    %v3812 = vunpack.c.l.b16 %v3751
    %v3813 = vunpack.c.l.b16 %v3752
    %v3814 = vunpack.c.h.b16 %v3752
    %v3815 = vunpack.c.l.b16 %v3753
    %v3816 = vunpack.c.l.b16 %v3754
    %v3817 = vunpack.c.h.b16 %v3754
    %v3818 = vunpack.c.l.b16 %v3755
    %v3819 = vunpack.c.l.b16 %v3756
    %v3820 = vunpack.c.h.b16 %v3756
    %v3821 = vunpack.c.l.b16 %v3757
    %v3822 = vunpack.c.l.b16 %v3758
    %v3823 = vunpack.c.h.b16 %v3758
    %v3824 = vunpack.c.l.b16 %v3759
    %v3825 = vpack.c.b16 %v3795, %v3792
    %v3826 = vpack.c.b16 %v3796, %v3793
    %v3827 = vpack.c.b16 %v3797, %v3794
    %v3828 = vpack.c.b16 %v3801, %v3798
    %v3829 = vpack.c.b16 %v3802, %v3799
    %v3830 = vpack.c.b16 %v3803, %v3800
    %v3831 = vpack.c.b16 %v3807, %v3804
    %v3832 = vpack.c.b16 %v3808, %v3805
    %v3833 = vpack.c.b16 %v3809, %v3806
    %v3834 = vpack.c.b16 %v3813, %v3810
    %v3835 = vpack.c.b16 %v3814, %v3811
    %v3836 = vpack.c.b16 %v3815, %v3812
    %v3837 = vpack.c.b16 %v3819, %v3816
    %v3838 = vpack.c.b16 %v3820, %v3817
    %v3839 = vpack.c.b16 %v3821, %v3818
    %v3840 = vpack.c.b16 %v3822, %v3822
    %v3841 = vpack.c.b16 %v3823, %v3823
    %v3842 = vpack.c.b16 %v3824, %v3824
    %v3859 = vsel %vm1176, %v3769, 0
    %v3862 = vsel %vm1180, %v3840, 0
    %v3865 = vsel %vm1180, %v3841, 0
    %v3868 = vsel %vm1180, %v3842, 0
    %3870 = vmatpush.bf16.msra.mxu0 0
    %3871 = vmatpush.bf16.msra.mxu0 0
    %3872 = vmatpush.bf16.msra.mxu0 %v3862
    %3873 = vmatpush.bf16.msra.mxu0 %v3837
    %3874 = vmatpush.bf16.msra.mxu0 %v3834
    %3875 = vmatpush.bf16.msra.mxu0 %v3831
    %3876 = vmatpush.bf16.msra.mxu0 %v3828
    %3877 = vmatpush.bf16.msra.mxu0 %v3825
    %3878 = vmatmul.bf16.gmra.mxu0 %v3859
    %v3879 = vpop.f32.mrf.mxu0
    %v3880 = vadd.f32 0.0, %v3879
    %v3881 = vpop.f32.mrf.mxu0
    %3882 = vdwg.mxu0
    %3883 = vmatpush.bf16.msra.mxu0 0
    %3884 = vmatpush.bf16.msra.mxu0 0
    %3885 = vmatpush.bf16.msra.mxu0 %v3865
    %3886 = vmatpush.bf16.msra.mxu0 %v3838
    %3887 = vmatpush.bf16.msra.mxu0 %v3835
    %3888 = vmatpush.bf16.msra.mxu0 %v3832
    %3889 = vmatpush.bf16.msra.mxu0 %v3829
    %3890 = vmatpush.bf16.msra.mxu0 %v3826
    %3891 = vmatmul.bf16.gmra.mxu0 %v3859
    %v3892 = vpop.f32.mrf.mxu0
    %v3893 = vadd.f32 0.0, %v3892
    %v3894 = vpop.f32.mrf.mxu0
    %3895 = vdwg.mxu0
    %3896 = vmatpush.bf16.msra.mxu0 0
    %3897 = vmatpush.bf16.msra.mxu0 0
    %3898 = vmatpush.bf16.msra.mxu0 %v3868
    %3899 = vmatpush.bf16.msra.mxu0 %v3839
    %3900 = vmatpush.bf16.msra.mxu0 %v3836
    %3901 = vmatpush.bf16.msra.mxu0 %v3833
    %3902 = vmatpush.bf16.msra.mxu0 %v3830
    %3903 = vmatpush.bf16.msra.mxu0 %v3827
    %3904 = vmatmul.bf16.gmra.mxu0 %v3859
    %v3905 = vpop.f32.mrf.mxu0
    %v3906 = vadd.f32 0.0, %v3905
    %v3907 = vpop.f32.mrf.mxu0
    %3908 = vdwg.mxu0
    %v3909 = vadd.f32 %v3709, %v3880
    %v3910 = vadd.f32 %v3722, %v3893
    %v3911 = vadd.f32 %v3735, %v3906
    %v3912 = vld [vmem:[%s1543] sm:$0xff]
    %v3913 = vld [vmem:[%s1543 + $0x8] sm:$0xf]
    %v3914 = vld [vmem:[%s1543 + $0xc] sm:$0xff]
    %v3915 = vld [vmem:[%s1543 + $0x14] sm:$0xf]
    %v3916 = vld [vmem:[%s1543 + $0x18] sm:$0xff]
    %v3917 = vld [vmem:[%s1543 + $0x20] sm:$0xf]
    %v3918 = vld [vmem:[%s1543 + $0x24] sm:$0xff]
    %v3919 = vld [vmem:[%s1543 + $0x2c] sm:$0xf]
    %v3920 = vld [vmem:[%s1543 + $0x30] sm:$0xff]
    %v3921 = vld [vmem:[%s1543 + $0x38] sm:$0xf]
    %v3922 = vld [vmem:[%s1543 + $0x3c] sm:$0xff]
    %v3923 = vld [vmem:[%s1543 + $0x44] sm:$0xf]
    %v3924 = vld [vmem:[%s1543 + $0x48] sm:$0xff]
    %v3925 = vld [vmem:[%s1543 + $0x50] sm:$0xf]
    %v3926 = vld [vmem:[%s1543 + $0x54] sm:$0xff]
    %v3927 = vld [vmem:[%s1543 + $0x5c] sm:$0xf]
    %v3928 = vld [vmem:[%s1543 + $0x60] sm:$0xff]
    %v3929 = vld [vmem:[%s1543 + $0x68] sm:$0xf]
    %v3930 = vld [vmem:[%s1543 + $0x6c] sm:$0xff]
    %v3931 = vld [vmem:[%s1543 + $0x74] sm:$0xf]
    %v3932 = vld [vmem:[%s1543 + $0x78] sm:$0x33]
    %v3933 = vld [vmem:[%s1543 + $0x80] sm:$0x3]
    %v3935 = vunpack.c.l.b16 %v3415
    %v3936 = vpack.c.b16 %v3935, %v3935
    %v3938 = vshrl.u32 %v3936, 16
    %v3940 = vshll.u32 %v3936, 16
    %v3942 = vrot.slane %v3940, 1
    %v3943 = vor.u32 %v3938, %v3942
    %v3966 = vunpack.c.l.b16 %v3912
    %v3967 = vunpack.c.h.b16 %v3912
    %v3968 = vunpack.c.l.b16 %v3913
    %v3969 = vunpack.c.l.b16 %v3914
    %v3970 = vunpack.c.h.b16 %v3914
    %v3971 = vunpack.c.l.b16 %v3915
    %v3972 = vunpack.c.l.b16 %v3916
    %v3973 = vunpack.c.h.b16 %v3916
    %v3974 = vunpack.c.l.b16 %v3917
    %v3975 = vunpack.c.l.b16 %v3918
    %v3976 = vunpack.c.h.b16 %v3918
    %v3977 = vunpack.c.l.b16 %v3919
    %v3978 = vunpack.c.l.b16 %v3920
    %v3979 = vunpack.c.h.b16 %v3920
    %v3980 = vunpack.c.l.b16 %v3921
    %v3981 = vunpack.c.l.b16 %v3922
    %v3982 = vunpack.c.h.b16 %v3922
    %v3983 = vunpack.c.l.b16 %v3923
    %v3984 = vunpack.c.l.b16 %v3924
    %v3985 = vunpack.c.h.b16 %v3924
    %v3986 = vunpack.c.l.b16 %v3925
    %v3987 = vunpack.c.l.b16 %v3926
    %v3988 = vunpack.c.h.b16 %v3926
    %v3989 = vunpack.c.l.b16 %v3927
    %v3990 = vunpack.c.l.b16 %v3928
    %v3991 = vunpack.c.h.b16 %v3928
    %v3992 = vunpack.c.l.b16 %v3929
    %v3993 = vunpack.c.l.b16 %v3930
    %v3994 = vunpack.c.h.b16 %v3930
    %v3995 = vunpack.c.l.b16 %v3931
    %v3996 = vunpack.c.l.b16 %v3932
    %v3997 = vunpack.c.h.b16 %v3932
    %v3998 = vunpack.c.l.b16 %v3933
    %v3999 = vpack.c.b16 %v3969, %v3966
    %v4000 = vpack.c.b16 %v3970, %v3967
    %v4001 = vpack.c.b16 %v3971, %v3968
    %v4002 = vpack.c.b16 %v3975, %v3972
    %v4003 = vpack.c.b16 %v3976, %v3973
    %v4004 = vpack.c.b16 %v3977, %v3974
    %v4005 = vpack.c.b16 %v3981, %v3978
    %v4006 = vpack.c.b16 %v3982, %v3979
    %v4007 = vpack.c.b16 %v3983, %v3980
    %v4008 = vpack.c.b16 %v3987, %v3984
    %v4009 = vpack.c.b16 %v3988, %v3985
    %v4010 = vpack.c.b16 %v3989, %v3986
    %v4011 = vpack.c.b16 %v3993, %v3990
    %v4012 = vpack.c.b16 %v3994, %v3991
    %v4013 = vpack.c.b16 %v3995, %v3992
    %v4014 = vpack.c.b16 %v3996, %v3996
    %v4015 = vpack.c.b16 %v3997, %v3997
    %v4016 = vpack.c.b16 %v3998, %v3998
    %v4033 = vsel %vm1176, %v3943, 0
    %v4036 = vsel %vm1180, %v4014, 0
    %v4039 = vsel %vm1180, %v4015, 0
    %v4042 = vsel %vm1180, %v4016, 0
    %4044 = vmatpush.bf16.msra.mxu0 0
    %4045 = vmatpush.bf16.msra.mxu0 0
    %4046 = vmatpush.bf16.msra.mxu0 %v4036
    %4047 = vmatpush.bf16.msra.mxu0 %v4011
    %4048 = vmatpush.bf16.msra.mxu0 %v4008
    %4049 = vmatpush.bf16.msra.mxu0 %v4005
    %4050 = vmatpush.bf16.msra.mxu0 %v4002
    %4051 = vmatpush.bf16.msra.mxu0 %v3999
    %4052 = vmatmul.bf16.gmra.mxu0 %v4033
    %v4053 = vpop.f32.mrf.mxu0
    %v4054 = vadd.f32 0.0, %v4053
    %v4055 = vpop.f32.mrf.mxu0
    %4056 = vdwg.mxu0
    %4057 = vmatpush.bf16.msra.mxu0 0
    %4058 = vmatpush.bf16.msra.mxu0 0
    %4059 = vmatpush.bf16.msra.mxu0 %v4039
    %4060 = vmatpush.bf16.msra.mxu0 %v4012
    %4061 = vmatpush.bf16.msra.mxu0 %v4009
    %4062 = vmatpush.bf16.msra.mxu0 %v4006
    %4063 = vmatpush.bf16.msra.mxu0 %v4003
    %4064 = vmatpush.bf16.msra.mxu0 %v4000
    %4065 = vmatmul.bf16.gmra.mxu0 %v4033
    %v4066 = vpop.f32.mrf.mxu0
    %v4067 = vadd.f32 0.0, %v4066
    %v4068 = vpop.f32.mrf.mxu0
    %4069 = vdwg.mxu0
    %4070 = vmatpush.bf16.msra.mxu0 0
    %4071 = vmatpush.bf16.msra.mxu0 0
    %4072 = vmatpush.bf16.msra.mxu0 %v4042
    %4073 = vmatpush.bf16.msra.mxu0 %v4013
    %4074 = vmatpush.bf16.msra.mxu0 %v4010
    %4075 = vmatpush.bf16.msra.mxu0 %v4007
    %4076 = vmatpush.bf16.msra.mxu0 %v4004
    %4077 = vmatpush.bf16.msra.mxu0 %v4001
    %4078 = vmatmul.bf16.gmra.mxu0 %v4033
    %v4079 = vpop.f32.mrf.mxu0
    %v4080 = vadd.f32 0.0, %v4079
    %v4081 = vpop.f32.mrf.mxu0
    %4082 = vdwg.mxu0
    %v4083 = vadd.f32 %v3909, %v4054
    %v4084 = vadd.f32 %v3910, %v4067
    %v4085 = vadd.f32 %v3911, %v4080
    %v4086 = vld [vmem:[%s1718] sm:$0xff]
    %v4087 = vld [vmem:[%s1718 + $0x8] sm:$0xf]
    %v4088 = vld [vmem:[%s1718 + $0xc] sm:$0xff]
    %v4089 = vld [vmem:[%s1718 + $0x14] sm:$0xf]
    %v4090 = vld [vmem:[%s1718 + $0x18] sm:$0xff]
    %v4091 = vld [vmem:[%s1718 + $0x20] sm:$0xf]
    %v4092 = vld [vmem:[%s1718 + $0x24] sm:$0xff]
    %v4093 = vld [vmem:[%s1718 + $0x2c] sm:$0xf]
    %v4094 = vld [vmem:[%s1718 + $0x30] sm:$0xff]
    %v4095 = vld [vmem:[%s1718 + $0x38] sm:$0xf]
    %v4096 = vld [vmem:[%s1718 + $0x3c] sm:$0xff]
    %v4097 = vld [vmem:[%s1718 + $0x44] sm:$0xf]
    %v4098 = vld [vmem:[%s1718 + $0x48] sm:$0xff]
    %v4099 = vld [vmem:[%s1718 + $0x50] sm:$0xf]
    %v4100 = vld [vmem:[%s1718 + $0x54] sm:$0xff]
    %v4101 = vld [vmem:[%s1718 + $0x5c] sm:$0xf]
    %v4102 = vld [vmem:[%s1718 + $0x60] sm:$0xff]
    %v4103 = vld [vmem:[%s1718 + $0x68] sm:$0xf]
    %v4104 = vld [vmem:[%s1718 + $0x6c] sm:$0xff]
    %v4105 = vld [vmem:[%s1718 + $0x74] sm:$0xf]
    %v4106 = vld [vmem:[%s1718 + $0x78] sm:$0x33]
    %v4107 = vld [vmem:[%s1718 + $0x80] sm:$0x3]
    %v4108 = vrot.slane %v3762, 1
    %v4131 = vunpack.c.l.b16 %v4086
    %v4132 = vunpack.c.h.b16 %v4086
    %v4133 = vunpack.c.l.b16 %v4087
    %v4134 = vunpack.c.l.b16 %v4088
    %v4135 = vunpack.c.h.b16 %v4088
    %v4136 = vunpack.c.l.b16 %v4089
    %v4137 = vunpack.c.l.b16 %v4090
    %v4138 = vunpack.c.h.b16 %v4090
    %v4139 = vunpack.c.l.b16 %v4091
    %v4140 = vunpack.c.l.b16 %v4092
    %v4141 = vunpack.c.h.b16 %v4092
    %v4142 = vunpack.c.l.b16 %v4093
    %v4143 = vunpack.c.l.b16 %v4094
    %v4144 = vunpack.c.h.b16 %v4094
    %v4145 = vunpack.c.l.b16 %v4095
    %v4146 = vunpack.c.l.b16 %v4096
    %v4147 = vunpack.c.h.b16 %v4096
    %v4148 = vunpack.c.l.b16 %v4097
    %v4149 = vunpack.c.l.b16 %v4098
    %v4150 = vunpack.c.h.b16 %v4098
    %v4151 = vunpack.c.l.b16 %v4099
    %v4152 = vunpack.c.l.b16 %v4100
    %v4153 = vunpack.c.h.b16 %v4100
    %v4154 = vunpack.c.l.b16 %v4101
    %v4155 = vunpack.c.l.b16 %v4102
    %v4156 = vunpack.c.h.b16 %v4102
    %v4157 = vunpack.c.l.b16 %v4103
    %v4158 = vunpack.c.l.b16 %v4104
    %v4159 = vunpack.c.h.b16 %v4104
    %v4160 = vunpack.c.l.b16 %v4105
    %v4161 = vunpack.c.l.b16 %v4106
    %v4162 = vunpack.c.h.b16 %v4106
    %v4163 = vunpack.c.l.b16 %v4107
    %v4164 = vpack.c.b16 %v4134, %v4131
    %v4165 = vpack.c.b16 %v4135, %v4132
    %v4166 = vpack.c.b16 %v4136, %v4133
    %v4167 = vpack.c.b16 %v4140, %v4137
    %v4168 = vpack.c.b16 %v4141, %v4138
    %v4169 = vpack.c.b16 %v4142, %v4139
    %v4170 = vpack.c.b16 %v4146, %v4143
    %v4171 = vpack.c.b16 %v4147, %v4144
    %v4172 = vpack.c.b16 %v4148, %v4145
    %v4173 = vpack.c.b16 %v4152, %v4149
    %v4174 = vpack.c.b16 %v4153, %v4150
    %v4175 = vpack.c.b16 %v4154, %v4151
    %v4176 = vpack.c.b16 %v4158, %v4155
    %v4177 = vpack.c.b16 %v4159, %v4156
    %v4178 = vpack.c.b16 %v4160, %v4157
    %v4179 = vpack.c.b16 %v4161, %v4161
    %v4180 = vpack.c.b16 %v4162, %v4162
    %v4181 = vpack.c.b16 %v4163, %v4163
    %v4198 = vsel %vm1176, %v4108, 0
    %v4201 = vsel %vm1180, %v4179, 0
    %v4204 = vsel %vm1180, %v4180, 0
    %v4207 = vsel %vm1180, %v4181, 0
    %4209 = vmatpush.bf16.msra.mxu0 0
    %4210 = vmatpush.bf16.msra.mxu0 0
    %4211 = vmatpush.bf16.msra.mxu0 %v4201
    %4212 = vmatpush.bf16.msra.mxu0 %v4176
    %4213 = vmatpush.bf16.msra.mxu0 %v4173
    %4214 = vmatpush.bf16.msra.mxu0 %v4170
    %4215 = vmatpush.bf16.msra.mxu0 %v4167
    %4216 = vmatpush.bf16.msra.mxu0 %v4164
    %4217 = vmatmul.bf16.gmra.mxu0 %v4198
    %v4218 = vpop.f32.mrf.mxu0
    %v4219 = vadd.f32 0.0, %v4218
    %v4220 = vpop.f32.mrf.mxu0
    %4221 = vdwg.mxu0
    %4222 = vmatpush.bf16.msra.mxu0 0
    %4223 = vmatpush.bf16.msra.mxu0 0
    %4224 = vmatpush.bf16.msra.mxu0 %v4204
    %4225 = vmatpush.bf16.msra.mxu0 %v4177
    %4226 = vmatpush.bf16.msra.mxu0 %v4174
    %4227 = vmatpush.bf16.msra.mxu0 %v4171
    %4228 = vmatpush.bf16.msra.mxu0 %v4168
    %4229 = vmatpush.bf16.msra.mxu0 %v4165
    %4230 = vmatmul.bf16.gmra.mxu0 %v4198
    %v4231 = vpop.f32.mrf.mxu0
    %v4232 = vadd.f32 0.0, %v4231
    %v4233 = vpop.f32.mrf.mxu0
    %4234 = vdwg.mxu0
    %4235 = vmatpush.bf16.msra.mxu0 0
    %4236 = vmatpush.bf16.msra.mxu0 0
    %4237 = vmatpush.bf16.msra.mxu0 %v4207
    %4238 = vmatpush.bf16.msra.mxu0 %v4178
    %4239 = vmatpush.bf16.msra.mxu0 %v4175
    %4240 = vmatpush.bf16.msra.mxu0 %v4172
    %4241 = vmatpush.bf16.msra.mxu0 %v4169
    %4242 = vmatpush.bf16.msra.mxu0 %v4166
    %4243 = vmatmul.bf16.gmra.mxu0 %v4198
    %v4244 = vpop.f32.mrf.mxu0
    %v4245 = vadd.f32 0.0, %v4244
    %v4246 = vpop.f32.mrf.mxu0
    %4247 = vdwg.mxu0
    %v4248 = vadd.f32 %v4083, %v4219
    %v4249 = vadd.f32 %v4084, %v4232
    %v4250 = vadd.f32 %v4085, %v4245
    %v4251 = vld [vmem:[%s1884] sm:$0xff]
    %v4252 = vld [vmem:[%s1884 + $0x8] sm:$0xf]
    %v4253 = vld [vmem:[%s1884 + $0xc] sm:$0xff]
    %v4254 = vld [vmem:[%s1884 + $0x14] sm:$0xf]
    %v4255 = vld [vmem:[%s1884 + $0x18] sm:$0xff]
    %v4256 = vld [vmem:[%s1884 + $0x20] sm:$0xf]
    %v4257 = vld [vmem:[%s1884 + $0x24] sm:$0xff]
    %v4258 = vld [vmem:[%s1884 + $0x2c] sm:$0xf]
    %v4259 = vld [vmem:[%s1884 + $0x30] sm:$0xff]
    %v4260 = vld [vmem:[%s1884 + $0x38] sm:$0xf]
    %v4261 = vld [vmem:[%s1884 + $0x3c] sm:$0xff]
    %v4262 = vld [vmem:[%s1884 + $0x44] sm:$0xf]
    %v4263 = vld [vmem:[%s1884 + $0x48] sm:$0xff]
    %v4264 = vld [vmem:[%s1884 + $0x50] sm:$0xf]
    %v4265 = vld [vmem:[%s1884 + $0x54] sm:$0xff]
    %v4266 = vld [vmem:[%s1884 + $0x5c] sm:$0xf]
    %v4267 = vld [vmem:[%s1884 + $0x60] sm:$0xff]
    %v4268 = vld [vmem:[%s1884 + $0x68] sm:$0xf]
    %v4269 = vld [vmem:[%s1884 + $0x6c] sm:$0xff]
    %v4270 = vld [vmem:[%s1884 + $0x74] sm:$0xf]
    %v4271 = vld [vmem:[%s1884 + $0x78] sm:$0x33]
    %v4272 = vld [vmem:[%s1884 + $0x80] sm:$0x3]
    %v4273 = vrot.slane %v3936, 1
    %v4296 = vunpack.c.l.b16 %v4251
    %v4297 = vunpack.c.h.b16 %v4251
    %v4298 = vunpack.c.l.b16 %v4252
    %v4299 = vunpack.c.l.b16 %v4253
    %v4300 = vunpack.c.h.b16 %v4253
    %v4301 = vunpack.c.l.b16 %v4254
    %v4302 = vunpack.c.l.b16 %v4255
    %v4303 = vunpack.c.h.b16 %v4255
    %v4304 = vunpack.c.l.b16 %v4256
    %v4305 = vunpack.c.l.b16 %v4257
    %v4306 = vunpack.c.h.b16 %v4257
    %v4307 = vunpack.c.l.b16 %v4258
    %v4308 = vunpack.c.l.b16 %v4259
    %v4309 = vunpack.c.h.b16 %v4259
    %v4310 = vunpack.c.l.b16 %v4260
    %v4311 = vunpack.c.l.b16 %v4261
    %v4312 = vunpack.c.h.b16 %v4261
    %v4313 = vunpack.c.l.b16 %v4262
    %v4314 = vunpack.c.l.b16 %v4263
    %v4315 = vunpack.c.h.b16 %v4263
    %v4316 = vunpack.c.l.b16 %v4264
    %v4317 = vunpack.c.l.b16 %v4265
    %v4318 = vunpack.c.h.b16 %v4265
    %v4319 = vunpack.c.l.b16 %v4266
    %v4320 = vunpack.c.l.b16 %v4267
    %v4321 = vunpack.c.h.b16 %v4267
    %v4322 = vunpack.c.l.b16 %v4268
    %v4323 = vunpack.c.l.b16 %v4269
    %v4324 = vunpack.c.h.b16 %v4269
    %v4325 = vunpack.c.l.b16 %v4270
    %v4326 = vunpack.c.l.b16 %v4271
    %v4327 = vunpack.c.h.b16 %v4271
    %v4328 = vunpack.c.l.b16 %v4272
    %v4329 = vpack.c.b16 %v4299, %v4296
    %v4330 = vpack.c.b16 %v4300, %v4297
    %v4331 = vpack.c.b16 %v4301, %v4298
    %v4332 = vpack.c.b16 %v4305, %v4302
    %v4333 = vpack.c.b16 %v4306, %v4303
    %v4334 = vpack.c.b16 %v4307, %v4304
    %v4335 = vpack.c.b16 %v4311, %v4308
    %v4336 = vpack.c.b16 %v4312, %v4309
    %v4337 = vpack.c.b16 %v4313, %v4310
    %v4338 = vpack.c.b16 %v4317, %v4314
    %v4339 = vpack.c.b16 %v4318, %v4315
    %v4340 = vpack.c.b16 %v4319, %v4316
    %v4341 = vpack.c.b16 %v4323, %v4320
    %v4342 = vpack.c.b16 %v4324, %v4321
    %v4343 = vpack.c.b16 %v4325, %v4322
    %v4344 = vpack.c.b16 %v4326, %v4326
    %v4345 = vpack.c.b16 %v4327, %v4327
    %v4346 = vpack.c.b16 %v4328, %v4328
    %v4363 = vsel %vm1176, %v4273, 0
    %v4366 = vsel %vm1180, %v4344, 0
    %v4369 = vsel %vm1180, %v4345, 0
    %v4372 = vsel %vm1180, %v4346, 0
    %4374 = vmatpush.bf16.msra.mxu0 0
    %4375 = vmatpush.bf16.msra.mxu0 0
    %4376 = vmatpush.bf16.msra.mxu0 %v4366
    %4377 = vmatpush.bf16.msra.mxu0 %v4341
    %4378 = vmatpush.bf16.msra.mxu0 %v4338
    %4379 = vmatpush.bf16.msra.mxu0 %v4335
    %4380 = vmatpush.bf16.msra.mxu0 %v4332
    %4381 = vmatpush.bf16.msra.mxu0 %v4329
    %4382 = vmatmul.bf16.gmra.mxu0 %v4363
    %v4383 = vpop.f32.mrf.mxu0
    %v4384 = vadd.f32 0.0, %v4383
    %v4385 = vpop.f32.mrf.mxu0
    %4386 = vdwg.mxu0
    %4387 = vmatpush.bf16.msra.mxu0 0
    %4388 = vmatpush.bf16.msra.mxu0 0
    %4389 = vmatpush.bf16.msra.mxu0 %v4369
    %4390 = vmatpush.bf16.msra.mxu0 %v4342
    %4391 = vmatpush.bf16.msra.mxu0 %v4339
    %4392 = vmatpush.bf16.msra.mxu0 %v4336
    %4393 = vmatpush.bf16.msra.mxu0 %v4333
    %4394 = vmatpush.bf16.msra.mxu0 %v4330
    %4395 = vmatmul.bf16.gmra.mxu0 %v4363
    %v4396 = vpop.f32.mrf.mxu0
    %v4397 = vadd.f32 0.0, %v4396
    %v4398 = vpop.f32.mrf.mxu0
    %4399 = vdwg.mxu0
    %4400 = vmatpush.bf16.msra.mxu0 0
    %4401 = vmatpush.bf16.msra.mxu0 0
    %4402 = vmatpush.bf16.msra.mxu0 %v4372
    %4403 = vmatpush.bf16.msra.mxu0 %v4343
    %4404 = vmatpush.bf16.msra.mxu0 %v4340
    %4405 = vmatpush.bf16.msra.mxu0 %v4337
    %4406 = vmatpush.bf16.msra.mxu0 %v4334
    %4407 = vmatpush.bf16.msra.mxu0 %v4331
    %4408 = vmatmul.bf16.gmra.mxu0 %v4363
    %v4409 = vpop.f32.mrf.mxu0
    %v4410 = vadd.f32 0.0, %v4409
    %v4411 = vpop.f32.mrf.mxu0
    %4412 = vdwg.mxu0
    %v4413 = vadd.f32 %v4248, %v4384
    %v4414 = vadd.f32 %v4249, %v4397
    %v4415 = vadd.f32 %v4250, %v4410
    %v4416 = vld [vmem:[%s4] sm:$0x7]
    %v4418 = vperm.slane %v4416, 0
    %v4419 = vperm.slane %v4416, 1
    %v4420 = vperm.slane %v4416, 2
    %v4424 = vadd.f32 %v4413, %v4418
    %v4425 = vadd.f32 %v4414, %v4419
    %v4426 = vadd.f32 %v4415, %v4420
    %v4427 = vsub.f32 0.0, %v4424
    %v4428 = vsub.f32 0.0, %v4425
    %v4429 = vsub.f32 0.0, %v4426
    %v4430 = vmul.f32 %v4427, 1.442695
    %v4431 = vpow.pop %v4430
    %v4432 = vmul.f32 %v4428, 1.442695
    %v4433 = vpow.pop %v4432
    %v4434 = vmul.f32 %v4429, 1.442695
    %v4435 = vpow.pop %v4434
    %v4436 = vadd.f32 %v4431, 1.0
    %v4437 = vadd.f32 %v4433, 1.0
    %v4438 = vadd.f32 %v4435, 1.0
    %v4439 = vrcp.pop %v4436
    %v4440 = vmul.f32 %v4436, %v4439
    %v4441 = vsub.f32 1.0, %v4440
    %v4442 = vmul.f32 %v4439, %v4441
    %v4443 = vadd.f32 %v4439, %v4442
    %vm4444 = vweird.f32 %v4436
    %vm4445 = vweird.f32 %v4439
    %vm4446 = vmor %vm4444, %vm4445
    %v4447 = vsel %vm4446, %v4439, %v4443
    %v4448 = vand.u32 2147483647, %v4436
    %vm4449 = vcmp.eq.f32.partialorder %v4448, 8.507059e+37
    %v4450 = vand.u32 %v4436, 2147483648
    %v4451 = vor.u32 1.1754944e-38, %v4450
    %v4452 = vsel %vm4449, %v4451, %v4447
    %v4453 = vmul.f32 1.0, %v4452
    %v4454 = vrcp.pop %v4437
    %v4455 = vmul.f32 %v4437, %v4454
    %v4456 = vsub.f32 1.0, %v4455
    %v4457 = vmul.f32 %v4454, %v4456
    %v4458 = vadd.f32 %v4454, %v4457
    %vm4459 = vweird.f32 %v4437
    %vm4460 = vweird.f32 %v4454
    %vm4461 = vmor %vm4459, %vm4460
    %v4462 = vsel %vm4461, %v4454, %v4458
    %v4463 = vand.u32 2147483647, %v4437
    %vm4464 = vcmp.eq.f32.partialorder %v4463, 8.507059e+37
    %v4465 = vand.u32 %v4437, 2147483648
    %v4466 = vor.u32 1.1754944e-38, %v4465
    %v4467 = vsel %vm4464, %v4466, %v4462
    %v4468 = vmul.f32 1.0, %v4467
    %v4469 = vrcp.pop %v4438
    %v4470 = vmul.f32 %v4438, %v4469
    %v4471 = vsub.f32 1.0, %v4470
    %v4472 = vmul.f32 %v4469, %v4471
    %v4473 = vadd.f32 %v4469, %v4472
    %vm4474 = vweird.f32 %v4438
    %vm4475 = vweird.f32 %v4469
    %vm4476 = vmor %vm4474, %vm4475
    %v4477 = vsel %vm4476, %v4469, %v4473
    %v4478 = vand.u32 2147483647, %v4438
    %vm4479 = vcmp.eq.f32.partialorder %v4478, 8.507059e+37
    %v4480 = vand.u32 %v4438, 2147483648
    %v4481 = vor.u32 1.1754944e-38, %v4480
    %v4482 = vsel %vm4479, %v4481, %v4477
    %v4483 = vmul.f32 1.0, %v4482
    %4486 = vrot.lane.b32.xlu0 %v4453, 48
    %v4487 = vpop.permute.xlu0 %4486
    %4488 = vrot.lane.b32.xlu0 %v4468, 48
    %v4489 = vpop.permute.xlu0 %4488
    %v4490 = vsel %vm2124, %v4487, %v4489
    %v4492 = vadd.f32 %v4453, %v4490
    %4493 = vrot.lane.b32.xlu0 %v4468, 96
    %v4494 = vpop.permute.xlu0 %4493
    %v4496 = vadd.f32 %v4492, %v4494
    %4498 = vrot.lane.b32.xlu0 %v4468, 16
    %v4499 = vpop.permute.xlu0 %4498
    %4500 = vrot.lane.b32.xlu0 %v4483, 16
    %v4501 = vpop.permute.xlu0 %4500
    %v4502 = vsel %vm2137, %v4499, %v4501
    %v4504 = vadd.f32 %v4496, %v4502
    %v4505 = vmul.f32 %v4504, 0.25
    %s4506 = scalar_lea.vmem %s12, 8
    %4507 = vst.msk [vmem:[%s4506] sm:$0x1f] %vm2142, %v4505
    %v4508 = vld [vmem:[%s5] sm:$0xff]
    %v4509 = vld [vmem:[%s5 + $0x8] sm:$0xff]
    %v4510 = vld [vmem:[%s5 + $0x10] sm:$0xff]
    %v4511 = vld [vmem:[%s5 + $0x18] sm:$0xff]
    %v4512 = vld [vmem:[%s5 + $0x20] sm:$0xff]
    %v4513 = vld [vmem:[%s5 + $0x28] sm:$0xff]
    %v4514 = vld [vmem:[%s5 + $0x30] sm:$0xff]
    %v4515 = vld [vmem:[%s5 + $0x38] sm:$0xff]
    %v4516 = vld [vmem:[%s5 + $0x40] sm:$0xff]
    %v4517 = vld [vmem:[%s5 + $0x48] sm:$0xff]
    %v4518 = vld [vmem:[%s2154] sm:$0xff]
    %v4519 = vld [vmem:[%s2154 + $0x8] sm:$0xff]
    %v4520 = vld [vmem:[%s2154 + $0x10] sm:$0xff]
    %v4521 = vld [vmem:[%s2154 + $0x18] sm:$0xff]
    %v4522 = vld [vmem:[%s2154 + $0x20] sm:$0xff]
    %v4523 = vld [vmem:[%s2154 + $0x28] sm:$0xff]
    %v4524 = vld [vmem:[%s2154 + $0x30] sm:$0xff]
    %v4525 = vld [vmem:[%s2154 + $0x38] sm:$0xff]
    %v4526 = vld [vmem:[%s2154 + $0x40] sm:$0xff]
    %v4527 = vld [vmem:[%s2154 + $0x48] sm:$0xff]
    %v4529 = vrot.slane %v4505, 1
    %v4530 = vsel %vm2167, %v4529, 0
    %4532 = vmatpush.msra.mxu0 0.0
    %4533 = vmatpush.msra.mxu0 0.0
    %4534 = vmatpush.msra.mxu0 0.0
    %4535 = vmatpush.msra.mxu0 0.0
    %4536 = vmatpush.msra.mxu0 0.0
    %4537 = vmatpush.msra.mxu0 0.0
    %4538 = vmatpush.msra.mxu0 %v4527
    %4539 = vmatpush.msra.mxu0 %v4526
    %4540 = vmatpush.msra.mxu0 %v4525
    %4541 = vmatpush.msra.mxu0 %v4524
    %4542 = vmatpush.msra.mxu0 %v4523
    %4543 = vmatpush.msra.mxu0 %v4522
    %4544 = vmatpush.msra.mxu0 %v4521
    %4545 = vmatpush.msra.mxu0 %v4520
    %4546 = vmatpush.msra.mxu0 %v4519
    %4547 = vmatpush.msra.mxu0 %v4518
    %4548 = vmatmul.f32.gmra.mxu0 %v4530
    %v4549 = vpop.f32.mrf.mxu0
    %v4550 = vadd.f32 0.0, %v4549
    %4551 = vdwg.mxu0
    %v4552 = vsel %vm2167, %v4505, 0
    %4554 = vmatpush.msra.mxu0 0.0
    %4555 = vmatpush.msra.mxu0 0.0
    %4556 = vmatpush.msra.mxu0 0.0
    %4557 = vmatpush.msra.mxu0 0.0
    %4558 = vmatpush.msra.mxu0 0.0
    %4559 = vmatpush.msra.mxu0 0.0
    %4560 = vmatpush.msra.mxu0 %v4517
    %4561 = vmatpush.msra.mxu0 %v4516
    %4562 = vmatpush.msra.mxu0 %v4515
    %4563 = vmatpush.msra.mxu0 %v4514
    %4564 = vmatpush.msra.mxu0 %v4513
    %4565 = vmatpush.msra.mxu0 %v4512
    %4566 = vmatpush.msra.mxu0 %v4511
    %4567 = vmatpush.msra.mxu0 %v4510
    %4568 = vmatpush.msra.mxu0 %v4509
    %4569 = vmatpush.msra.mxu0 %v4508
    %4570 = vmatmul.f32.gmra.mxu0 %v4552
    %v4571 = vpop.f32.mrf.mxu0
    %v4572 = vadd.f32 %v4550, %v4571
    %4573 = vdwg.mxu0
    %v4574 = vld [vmem:[%s2212] sm:$0xff]
    %v4575 = vld [vmem:[%s2212 + $0x8] sm:$0xff]
    %v4576 = vld [vmem:[%s2212 + $0x10] sm:$0xff]
    %v4577 = vld [vmem:[%s2212 + $0x18] sm:$0xff]
    %v4578 = vld [vmem:[%s2212 + $0x20] sm:$0xff]
    %v4579 = vld [vmem:[%s2212 + $0x28] sm:$0xff]
    %v4580 = vld [vmem:[%s2212 + $0x30] sm:$0xff]
    %v4581 = vld [vmem:[%s2212 + $0x38] sm:$0xff]
    %v4582 = vld [vmem:[%s2212 + $0x40] sm:$0xff]
    %v4583 = vld [vmem:[%s2212 + $0x48] sm:$0xff]
    %v4584 = vrot.slane %v4505, 2
    %v4585 = vsel %vm2167, %v4584, 0
    %4587 = vmatpush.msra.mxu0 0.0
    %4588 = vmatpush.msra.mxu0 0.0
    %4589 = vmatpush.msra.mxu0 0.0
    %4590 = vmatpush.msra.mxu0 0.0
    %4591 = vmatpush.msra.mxu0 0.0
    %4592 = vmatpush.msra.mxu0 0.0
    %4593 = vmatpush.msra.mxu0 %v4583
    %4594 = vmatpush.msra.mxu0 %v4582
    %4595 = vmatpush.msra.mxu0 %v4581
    %4596 = vmatpush.msra.mxu0 %v4580
    %4597 = vmatpush.msra.mxu0 %v4579
    %4598 = vmatpush.msra.mxu0 %v4578
    %4599 = vmatpush.msra.mxu0 %v4577
    %4600 = vmatpush.msra.mxu0 %v4576
    %4601 = vmatpush.msra.mxu0 %v4575
    %4602 = vmatpush.msra.mxu0 %v4574
    %4603 = vmatmul.f32.gmra.mxu0 %v4585
    %v4604 = vpop.f32.mrf.mxu0
    %v4605 = vadd.f32 0.0, %v4604
    %4606 = vdwg.mxu0
    %v4607 = vadd.f32 %v4572, %v4605
    %v4608 = vld [vmem:[%s2247] sm:$0xff]
    %v4609 = vld [vmem:[%s2247 + $0x8] sm:$0xff]
    %v4610 = vld [vmem:[%s2247 + $0x10] sm:$0xff]
    %v4611 = vld [vmem:[%s2247 + $0x18] sm:$0xff]
    %v4612 = vld [vmem:[%s2247 + $0x20] sm:$0xff]
    %v4613 = vld [vmem:[%s2247 + $0x28] sm:$0xff]
    %v4614 = vld [vmem:[%s2247 + $0x30] sm:$0xff]
    %v4615 = vld [vmem:[%s2247 + $0x38] sm:$0xff]
    %v4616 = vld [vmem:[%s2247 + $0x40] sm:$0xff]
    %v4617 = vld [vmem:[%s2247 + $0x48] sm:$0xff]
    %v4618 = vrot.slane %v4505, 3
    %v4619 = vsel %vm2167, %v4618, 0
    %4621 = vmatpush.msra.mxu0 0.0
    %4622 = vmatpush.msra.mxu0 0.0
    %4623 = vmatpush.msra.mxu0 0.0
    %4624 = vmatpush.msra.mxu0 0.0
    %4625 = vmatpush.msra.mxu0 0.0
    %4626 = vmatpush.msra.mxu0 0.0
    %4627 = vmatpush.msra.mxu0 %v4617
    %4628 = vmatpush.msra.mxu0 %v4616
    %4629 = vmatpush.msra.mxu0 %v4615
    %4630 = vmatpush.msra.mxu0 %v4614
    %4631 = vmatpush.msra.mxu0 %v4613
    %4632 = vmatpush.msra.mxu0 %v4612
    %4633 = vmatpush.msra.mxu0 %v4611
    %4634 = vmatpush.msra.mxu0 %v4610
    %4635 = vmatpush.msra.mxu0 %v4609
    %4636 = vmatpush.msra.mxu0 %v4608
    %4637 = vmatmul.f32.gmra.mxu0 %v4619
    %v4638 = vpop.f32.mrf.mxu0
    %v4639 = vadd.f32 0.0, %v4638
    %4640 = vdwg.mxu0
    %v4641 = vadd.f32 %v4607, %v4639
    %v4642 = vld [vmem:[%s2282] sm:$0xff]
    %v4643 = vld [vmem:[%s2282 + $0x8] sm:$0xff]
    %v4644 = vld [vmem:[%s2282 + $0x10] sm:$0xff]
    %v4645 = vld [vmem:[%s2282 + $0x18] sm:$0xff]
    %v4646 = vld [vmem:[%s2282 + $0x20] sm:$0xff]
    %v4647 = vld [vmem:[%s2282 + $0x28] sm:$0xff]
    %v4648 = vld [vmem:[%s2282 + $0x30] sm:$0xff]
    %v4649 = vld [vmem:[%s2282 + $0x38] sm:$0xff]
    %v4650 = vld [vmem:[%s2282 + $0x40] sm:$0xff]
    %v4651 = vld [vmem:[%s2282 + $0x48] sm:$0xff]
    %v4652 = vrot.slane %v4505, 4
    %v4653 = vsel %vm2167, %v4652, 0
    %4655 = vmatpush.msra.mxu0 0.0
    %4656 = vmatpush.msra.mxu0 0.0
    %4657 = vmatpush.msra.mxu0 0.0
    %4658 = vmatpush.msra.mxu0 0.0
    %4659 = vmatpush.msra.mxu0 0.0
    %4660 = vmatpush.msra.mxu0 0.0
    %4661 = vmatpush.msra.mxu0 %v4651
    %4662 = vmatpush.msra.mxu0 %v4650
    %4663 = vmatpush.msra.mxu0 %v4649
    %4664 = vmatpush.msra.mxu0 %v4648
    %4665 = vmatpush.msra.mxu0 %v4647
    %4666 = vmatpush.msra.mxu0 %v4646
    %4667 = vmatpush.msra.mxu0 %v4645
    %4668 = vmatpush.msra.mxu0 %v4644
    %4669 = vmatpush.msra.mxu0 %v4643
    %4670 = vmatpush.msra.mxu0 %v4642
    %4671 = vmatmul.f32.gmra.mxu0 %v4653
    %v4672 = vpop.f32.mrf.mxu0
    %v4673 = vadd.f32 0.0, %v4672
    %4674 = vdwg.mxu0
    %v4675 = vadd.f32 %v4641, %v4673
    %v4676 = vld [vmem:[%s6] sm:$0x1]
    %v4677 = vadd.f32 %v4675, %v4676
    %v4678 = vsub.f32 0.0, %v4677
    %v4679 = vmul.f32 %v4678, 1.442695
    %v4680 = vpow.pop %v4679
    %v4681 = vadd.f32 %v4680, 1.0
    %v4682 = vrcp.pop %v4681
    %v4683 = vmul.f32 %v4681, %v4682
    %v4684 = vsub.f32 1.0, %v4683
    %v4685 = vmul.f32 %v4682, %v4684
    %v4686 = vadd.f32 %v4682, %v4685
    %vm4687 = vweird.f32 %v4681
    %vm4688 = vweird.f32 %v4682
    %vm4689 = vmor %vm4687, %vm4688
    %v4690 = vsel %vm4689, %v4682, %v4686
    %v4691 = vand.u32 2147483647, %v4681
    %vm4692 = vcmp.eq.f32.partialorder %v4691, 8.507059e+37
    %v4693 = vand.u32 %v4681, 2147483648
    %v4694 = vor.u32 1.1754944e-38, %v4693
    %v4695 = vsel %vm4692, %v4694, %v4690
    %v4696 = vmul.f32 1.0, %v4695
    %v4697 = vld [vmem:[%s7] sm:$0xff]
    %v4698 = vld [vmem:[%s7 + $0x8] sm:$0xff]
    %v4699 = vld [vmem:[%s7 + $0x10] sm:$0xff]
    %v4700 = vld [vmem:[%s7 + $0x18] sm:$0xff]
    %v4701 = vld [vmem:[%s7 + $0x20] sm:$0xff]
    %v4702 = vld [vmem:[%s7 + $0x28] sm:$0xff]
    %v4703 = vld [vmem:[%s7 + $0x30] sm:$0xff]
    %v4704 = vld [vmem:[%s7 + $0x38] sm:$0xff]
    %v4705 = vld [vmem:[%s7 + $0x40] sm:$0xff]
    %v4706 = vld [vmem:[%s7 + $0x48] sm:$0xff]
    %v4707 = vld [vmem:[%s7 + $0x50] sm:$0xff]
    %v4708 = vld [vmem:[%s7 + $0x58] sm:$0xff]
    %v4709 = vld [vmem:[%s7 + $0x60] sm:$0xff]
    %v4710 = vld [vmem:[%s7 + $0x68] sm:$0xff]
    %v4711 = vld [vmem:[%s7 + $0x70] sm:$0xff]
    %v4712 = vld [vmem:[%s8] sm:$0x1]
    %v4714 = vsel %vm2354, %v4696, 0
    %4716 = vmatpush.msra.mxu0 0.0
    %4717 = vmatpush.msra.mxu0 %v4711
    %4718 = vmatpush.msra.mxu0 %v4710
    %4719 = vmatpush.msra.mxu0 %v4709
    %4720 = vmatpush.msra.mxu0 %v4708
    %4721 = vmatpush.msra.mxu0 %v4707
    %4722 = vmatpush.msra.mxu0 %v4706
    %4723 = vmatpush.msra.mxu0 %v4705
    %4724 = vmatpush.msra.mxu0 %v4704
    %4725 = vmatpush.msra.mxu0 %v4703
    %4726 = vmatpush.msra.mxu0 %v4702
    %4727 = vmatpush.msra.mxu0 %v4701
    %4728 = vmatpush.msra.mxu0 %v4700
    %4729 = vmatpush.msra.mxu0 %v4699
    %4730 = vmatpush.msra.mxu0 %v4698
    %4731 = vmatpush.msra.mxu0 %v4697
    %4732 = vmatmul.f32.gmra.mxu0 %v4714
    %v4733 = vpop.f32.mrf.mxu0
    %v4734 = vadd.f32 %v4712, %v4733
    %4735 = vdwg.mxu0
    %v4736 = vsub.f32 0.0, %v4734
    %v4737 = vmul.f32 %v4736, 1.442695
    %v4738 = vpow.pop %v4737
    %v4739 = vadd.f32 %v4738, 1.0
    %v4740 = vrcp.pop %v4739
    %v4741 = vmul.f32 %v4739, %v4740
    %v4742 = vsub.f32 1.0, %v4741
    %v4743 = vmul.f32 %v4740, %v4742
    %v4744 = vadd.f32 %v4740, %v4743
    %vm4745 = vweird.f32 %v4739
    %vm4746 = vweird.f32 %v4740
    %vm4747 = vmor %vm4745, %vm4746
    %v4748 = vsel %vm4747, %v4740, %v4744
    %v4749 = vand.u32 2147483647, %v4739
    %vm4750 = vcmp.eq.f32.partialorder %v4749, 8.507059e+37
    %v4751 = vand.u32 %v4739, 2147483648
    %v4752 = vor.u32 1.1754944e-38, %v4751
    %v4753 = vsel %vm4750, %v4752, %v4748
    %v4754 = vmul.f32 1.0, %v4753
    %v4755 = vld [vmem:[%s9] sm:$0xff]
    %v4756 = vld [vmem:[%s9 + $0x8] sm:$0xff]
    %v4757 = vld [vmem:[%s9 + $0x10] sm:$0xff]
    %v4758 = vld [vmem:[%s9 + $0x18] sm:$0xff]
    %v4759 = vld [vmem:[%s9 + $0x20] sm:$0xff]
    %v4760 = vld [vmem:[%s9 + $0x28] sm:$0xff]
    %v4761 = vld [vmem:[%s9 + $0x30] sm:$0xff]
    %v4762 = vld [vmem:[%s9 + $0x38] sm:$0xff]
    %v4763 = vld [vmem:[%s9 + $0x40] sm:$0xff]
    %v4764 = vld [vmem:[%s9 + $0x48] sm:$0xff]
    %v4765 = vld [vmem:[%s9 + $0x50] sm:$0xf]
    %v4766 = vld [vmem:[%s10] sm:$0x1]
    %v4768 = vsel %vm1176, %v4754, 0
    %v4771 = vsel %vm2412, %v4765, 0
    %4773 = vmatpush.msra.mxu0 0.0
    %4774 = vmatpush.msra.mxu0 0.0
    %4775 = vmatpush.msra.mxu0 0.0
    %4776 = vmatpush.msra.mxu0 0.0
    %4777 = vmatpush.msra.mxu0 0.0
    %4778 = vmatpush.msra.mxu0 %v4771
    %4779 = vmatpush.msra.mxu0 %v4764
    %4780 = vmatpush.msra.mxu0 %v4763
    %4781 = vmatpush.msra.mxu0 %v4762
    %4782 = vmatpush.msra.mxu0 %v4761
    %4783 = vmatpush.msra.mxu0 %v4760
    %4784 = vmatpush.msra.mxu0 %v4759
    %4785 = vmatpush.msra.mxu0 %v4758
    %4786 = vmatpush.msra.mxu0 %v4757
    %4787 = vmatpush.msra.mxu0 %v4756
    %4788 = vmatpush.msra.mxu0 %v4755
    %4789 = vmatmul.f32.gmra.mxu0 %v4768
    %v4790 = vpop.f32.mrf.mxu0
    %v4791 = vadd.f32 %v4766, %v4790
    %4792 = vdwg.mxu0
    %4793 = vst.msk [vmem:[#allocation5 + $0x1] sm:$0x1] %vm2436, %v4791
    // Predicated region
    $region50: #{lenet_forward.1} parent=1 // pred_check
      _
    $region51: #{lenet_forward.1} parent=1 // pred_check_branch
      %4795 = sbr.rel (0) target = $region53
    $region52: #{lenet_forward.1} parent=1 // pred_region
      %4797 = vsyncadd [#allocation4], 0
      %s4799 = sshll.u32 [#allocation5], 4
      %s4800 = int_to_ptr.vmem [resolvable:$true] %s4799
      %s4801 = sshll.u32 %s11, 4
      %s4802 = int_to_ptr.hbm [resolvable:$true] %s4801
      %4804 = dma.vmem_to_hbm [thread:$0]  %s4800, 32, %s4802, [#allocation4]
    $region53: #{lenet_forward.1} parent=1 // pred_fallthru
      _
    // Predicated region
    $region54: #{lenet_forward.1} parent=1 // pred_check
      _
    $region55: #{lenet_forward.1} parent=1 // pred_check_branch
      %4806 = sbr.rel (0) target = $region57
    $region56: #{lenet_forward.1} parent=1 // pred_region
      _
    $region57: #{lenet_forward.1} parent=1 // pred_fallthru
      _
    // Predicated region
    $region58: #{lenet_forward.1} parent=1 // pred_check
      _
    $region59: #{lenet_forward.1} parent=1 // pred_check_branch
      %4808 = sbr.rel (0) target = $region61
    $region60: #{lenet_forward.1} parent=1 // pred_region
      %4810 = dma.done [#allocation4], 32
    $region61: #{lenet_forward.1} parent=1 // pred_fallthru
      _
    // Predicated region
    $region62: #{lenet_forward.1} parent=1 // pred_check
      _
    $region63: #{lenet_forward.1} parent=1 // pred_check_branch
      %4812 = sbr.rel (0) target = $region65
    $region64: #{lenet_forward.1} parent=1 // pred_region
      _
    $region65: #{lenet_forward.1} parent=1 // pred_fallthru
      _
    %4813 = vsyncpa [#allocation3], 1
    %4814 = vsyncpa [#allocation4], 1

</llo_original>
